<compile_context>
chip_gen: v5e
topology: v5e:2x2
jax: 0.10.0
libtpu: 0.0.40
codegen_flags: <defaults>
</compile_context>

<pallas_src>
import functools

import jax
import jax.numpy as jnp
from jax.experimental import pallas as pl
from jax.experimental.pallas import tpu as pltpu


# ----------------------------- Pallas kernels ----------------------------- #

def _gemm_bias_lrelu_kernel(x_ref, w_ref, b_ref, o_ref, *, negative_slope):
    # o = leaky_relu(x @ w + b); accumulate / epilogue in f32, cast at store.
    acc = jnp.dot(x_ref[...], w_ref[...], preferred_element_type=jnp.float32)
    acc = acc + b_ref[...]
    if negative_slope is not None:
        acc = jnp.maximum(acc, negative_slope * acc)
    o_ref[...] = acc.astype(o_ref.dtype)


def _mlp_head_kernel(x_ref, w3_ref, b3_ref, w4_ref, b4_ref, o_ref,
                     *, negative_slope):
    # y3 = leaky_relu(x @ W3 + b3)            (MXU, f32 accumulate)
    # y4 = sum(y3 * w4_row, -1) + b4          (VPU mul + XLU lane reduction)
    acc = jnp.dot(x_ref[...], w3_ref[...], preferred_element_type=jnp.float32)
    acc = acc + b3_ref[...]
    acc = jnp.maximum(acc, negative_slope * acc)
    y4 = jnp.sum(acc * w4_ref[...], axis=-1, keepdims=True) + b4_ref[...]
    o_ref[...] = y4.astype(o_ref.dtype)


# ------------------------------ wrappers ----------------------------------- #

def _round_up(v, m):
    return (v + m - 1) // m * m


def _choose_tm(M):
    # Big batches: 256-row tiles (MXU aligned, megacore friendly).
    # Small batches: one tile rounded to the bf16 sublane multiple (16).
    return 256 if M >= 256 else _round_up(max(M, 1), 16)


def _pad_rows(x, Mp):
    M = x.shape[0]
    if Mp == M:
        return x
    return jnp.pad(x, ((0, Mp - M), (0, 0)))


def matmul_bias_act(x, w, b, negative_slope=None, out_dtype=jnp.bfloat16):
    """Fused (M,K)@(K,N) + bias (+ LeakyReLU), M-tiled, bf16 in / f32 acc."""
    M, K = x.shape
    K2, N = w.shape
    assert K == K2
    TM = _choose_tm(M)
    Mp = _round_up(M, TM)
    xp = _pad_rows(x.astype(jnp.bfloat16), Mp)

    kernel = functools.partial(_gemm_bias_lrelu_kernel,
                               negative_slope=negative_slope)
    out = pl.pallas_call(
        kernel,
        out_shape=jax.ShapeDtypeStruct((Mp, N), out_dtype),
        grid=(Mp // TM,),
        in_specs=[
            pl.BlockSpec((TM, K), lambda i: (i, 0)),   # activations: tiled over M
            pl.BlockSpec((K, N), lambda i: (0, 0)),    # weights: resident
            pl.BlockSpec((1, N), lambda i: (0, 0)),    # bias:    resident
        ],
        out_specs=pl.BlockSpec((TM, N), lambda i: (i, 0)),
        compiler_params=pltpu.CompilerParams(
            dimension_semantics=("parallel",)),
        cost_estimate=pl.CostEstimate(
            flops=2 * Mp * K * N,
            transcendentals=0,
            bytes_accessed=Mp * K * 2 + K * N * 2 + N * 4 + Mp * N * 2),
    )(xp, w, b)
    return out[:M]


def mlp_head(x, w3, b3, w4, b4, negative_slope):
    """Fused Linear(K,H) + LeakyReLU + Linear(H,1); returns (M, 1) f32."""
    M, K = x.shape
    K2, H = w3.shape
    assert K == K2
    TM = _choose_tm(M)
    Mp = _round_up(M, TM)
    xp = _pad_rows(x.astype(jnp.bfloat16), Mp)

    kernel = functools.partial(_mlp_head_kernel, negative_slope=negative_slope)
    out = pl.pallas_call(
        kernel,
        out_shape=jax.ShapeDtypeStruct((Mp, 1), jnp.float32),
        grid=(Mp // TM,),
        in_specs=[
            pl.BlockSpec((TM, K), lambda i: (i, 0)),   # activations
            pl.BlockSpec((K, H), lambda i: (0, 0)),    # W3 (bf16)
            pl.BlockSpec((1, H), lambda i: (0, 0)),    # b3 (f32)
            pl.BlockSpec((1, H), lambda i: (0, 0)),    # w4 row (f32)
            pl.BlockSpec((1, 1), lambda i: (0, 0)),    # b4 (f32)
        ],
        out_specs=pl.BlockSpec((TM, 1), lambda i: (i, 0)),
        compiler_params=pltpu.CompilerParams(
            dimension_semantics=("parallel",)),
        cost_estimate=pl.CostEstimate(
            flops=2 * Mp * K * H + 3 * Mp * H,
            transcendentals=0,
            bytes_accessed=Mp * K * 2 + K * H * 2 + 3 * H * 4 + Mp * 4),
    )(xp, w3, b3, w4, b4)
    return out[:M]


# ------------------------------ JAX glue ----------------------------------- #

def im2col_nhwc(x, k, s, p):
    """x: (N, H, W, C) -> (N*Ho*Wo, k*k*C), column order (kh, kw, cin)."""
    N, H, W, C = x.shape
    xp = jnp.pad(x, ((0, 0), (p, p), (p, p), (0, 0)))
    Ho = (H + 2 * p - k) // s + 1
    Wo = (W + 2 * p - k) // s + 1
    cols = []
    for i in range(k):
        for j in range(k):
            cols.append(xp[:, i:i + s * Ho:s, j:j + s * Wo:s, :])  # (N,Ho,Wo,C)
    patches = jnp.stack(cols, axis=3)                 # (N, Ho, Wo, k*k, C)
    return patches.reshape(N * Ho * Wo, k * k * C), Ho, Wo


def prepare_params(params):
    """One-time weight permutation / dtype conversion (PyTorch layout -> GEMM)."""
    w1, b1, w2, b2, w3, b3, w4, b4 = params
    # Conv weights (Cout, Cin, kH, kW) -> (kH*kW*Cin, Cout) matching NHWC patches.
    w1g = w1.transpose(2, 3, 1, 0).reshape(-1, w1.shape[0]).astype(jnp.bfloat16)
    w2g = w2.transpose(2, 3, 1, 0).reshape(-1, w2.shape[0]).astype(jnp.bfloat16)
    # fc1: PyTorch flattens NCHW (C,H,W); activations here are flattened (H,W,C).
    w3g = (w3.reshape(512, 64, 7, 7)
             .transpose(0, 2, 3, 1)
             .reshape(512, 64 * 7 * 7).T).astype(jnp.bfloat16)
    w4g = w4.astype(jnp.float32)                      # (1, 512) row for epilogue
    b1g = b1.reshape(1, -1).astype(jnp.float32)
    b2g = b2.reshape(1, -1).astype(jnp.float32)
    b3g = b3.reshape(1, -1).astype(jnp.float32)
    b4g = b4.reshape(1, 1).astype(jnp.float32)
    return (w1g, b1g, w2g, b2g, w3g, b3g, w4g, b4g)


def discriminator_forward(x_nchw, prepared):
    """Forward of the PyTorch Discriminator. x: (N, 1, 28, 28) -> (N,)."""
    w1g, b1g, w2g, b2g, w3g, b3g, w4g, b4g = prepared
    N = x_nchw.shape[0]
    x = x_nchw.transpose(0, 2, 3, 1)                       # NCHW -> NHWC (C=1)

    # Conv2d(1, 32, k=4, s=2, p=1) + LeakyReLU(0.1)  -> (N, 14, 14, 32)
    cols1, Ho1, Wo1 = im2col_nhwc(x, 4, 2, 1)              # (N*196, 16)
    y1 = matmul_bias_act(cols1, w1g, b1g, 0.1)             # (N*196, 32) bf16
    y1 = y1.reshape(N, Ho1, Wo1, 32)

    # Conv2d(32, 64, k=4, s=2, p=1) + LeakyReLU(0.1) -> (N, 7, 7, 64)
    cols2, Ho2, Wo2 = im2col_nhwc(y1, 4, 2, 1)             # (N*49, 512)
    y2 = matmul_bias_act(cols2, w2g, b2g, 0.1)             # (N*49, 64) bf16

    # Reshape(64*7*7) -> Linear(3136, 512) + LeakyReLU -> Linear(512, 1)
    flat = y2.reshape(N, Ho2 * Wo2 * 64)                   # (N, 3136) HWC order
    y4 = mlp_head(flat, w3g, b3g, w4g, b4g, 0.1)           # (N, 1) f32
    return y4.reshape(N)


def init_params(key):
    """Deterministic PyTorch-default-style (uniform +-1/sqrt(fan_in)) init."""
    ks = jax.random.split(key, 8)

    def u(k, shape, fan_in):
        bound = 1.0 / float(fan_in) ** 0.5
        return jax.random.uniform(k, shape, jnp.float32, -bound, bound)

    w1 = u(ks[0], (32, 1, 4, 4), 1 * 4 * 4)
    b1 = u(ks[1], (32,), 1 * 4 * 4)
    w2 = u(ks[2], (64, 32, 4, 4), 32 * 4 * 4)
    b2 = u(ks[3], (64,), 32 * 4 * 4)
    w3 = u(ks[4], (512, 64 * 7 * 7), 64 * 7 * 7)
    b3 = u(ks[5], (512,), 64 * 7 * 7)
    w4 = u(ks[6], (1, 512), 512)
    b4 = u(ks[7], (1,), 512)
    return (w1, b1, w2, b2, w3, b3, w4, b4)


if __name__ == "__main__":
    key = jax.random.PRNGKey(0)
    pkey, xkey = jax.random.split(key)
    params = init_params(pkey)
    prepared = prepare_params(params)        # one-time weight prep (not per call)

    # MNIST-style input: batch=2, 1 channel, 28x28 (required so 64*7*7 matches).
    x = jax.random.normal(xkey, (2, 1, 28, 28), jnp.float32)

    fwd = jax.jit(discriminator_forward)
    out = jax.block_until_ready(fwd(x, prepared))
    assert out.shape == (2,), out.shape
    assert bool(jnp.all(jnp.isfinite(out)))
    print("KERNEL_OK")
</pallas_src>

<mosaic_0001>
module attributes {stable_mosaic.version = 11 : i64} {
  func.func @_gemm_bias_lrelu_kernel(%arg0: i32, %arg1: memref<256x16xbf16, #tpu.memory_space<vmem>>, %arg2: memref<16x32xbf16, #tpu.memory_space<vmem>>, %arg3: memref<1x32xf32, #tpu.memory_space<vmem>>, %arg4: memref<256x32xbf16, #tpu.memory_space<vmem>>) attributes {dimension_semantics = [#tpu.dimension_semantics<parallel>], iteration_bounds = array<i64: 2>, scalar_prefetch = 0 : i64, scratch_operands = 0 : i64, tpu.core_type = #tpu.core_type<tc>, window_params = [{transform_indices = @transform_0, window_bounds = array<i64: 256, 16>}, {pipeline_mode = #tpu.pipeline_mode<synchronous>, transform_indices = @transform_1, window_bounds = array<i64: 16, 32>}, {pipeline_mode = #tpu.pipeline_mode<synchronous>, transform_indices = @transform_2, window_bounds = array<i64: 1, 32>}, {transform_indices = @transform_3, window_bounds = array<i64: 256, 32>}]} {
    %c0 = arith.constant 0 : index
    %c0_0 = arith.constant 0 : index
    %0 = vector.load %arg1[%c0, %c0_0] : memref<256x16xbf16, #tpu.memory_space<vmem>>, vector<256x16xbf16>
    %c0_1 = arith.constant 0 : index
    %c0_2 = arith.constant 0 : index
    %1 = vector.load %arg2[%c0_1, %c0_2] : memref<16x32xbf16, #tpu.memory_space<vmem>>, vector<16x32xbf16>
    %cst = arith.constant dense<0.000000e+00> : vector<256x32xf32>
    %2 = tpu.matmul %0, %1, %cst {dimension_numbers = #tpu.dot_dimension_numbers<[1], [0], [0], [1], [0, 0, 1, 1], [], []>} : vector<256x16xbf16>, vector<16x32xbf16>, vector<256x32xf32> -> vector<256x32xf32>
    %c0_3 = arith.constant 0 : index
    %c0_4 = arith.constant 0 : index
    %3 = vector.load %arg3[%c0_3, %c0_4] : memref<1x32xf32, #tpu.memory_space<vmem>>, vector<1x32xf32>
    %4 = vector.broadcast %3 : vector<1x32xf32> to vector<256x32xf32>
    %5 = arith.addf %2, %4 : vector<256x32xf32>
    %cst_5 = arith.constant 1.000000e-01 : f32
    %6 = vector.broadcast %cst_5 : f32 to vector<256x32xf32>
    %7 = arith.mulf %6, %5 : vector<256x32xf32>
    %8 = arith.maximumf %5, %7 : vector<256x32xf32>
    %9 = arith.truncf %8 : vector<256x32xf32> to vector<256x32xbf16>
    %c0_6 = arith.constant 0 : index
    %c0_7 = arith.constant 0 : index
    %10 = vector.load %arg4[%c0_6, %c0_7] : memref<256x32xbf16, #tpu.memory_space<vmem>>, vector<256x32xbf16>
    tpu.vector_store %arg4[%c0_6, %c0_7], %9 {strides = array<i32>} : memref<256x32xbf16, #tpu.memory_space<vmem>>, vector<256x32xbf16>,
    return
  }
  func.func @transform_0(%arg0: i32) -> (i32, i32) {
    %c0_i32 = arith.constant 0 : i32
    %c0_i32_0 = arith.constant 0 : i32
    return %arg0, %c0_i32 : i32, i32
  }
  func.func @transform_1(%arg0: i32) -> (i32, i32) {
    %c0_i32 = arith.constant 0 : i32
    %c0_i32_0 = arith.constant 0 : i32
    %c0_i32_1 = arith.constant 0 : i32
    return %c0_i32, %c0_i32_0 : i32, i32
  }
  func.func @transform_2(%arg0: i32) -> (i32, i32) {
    %c0_i32 = arith.constant 0 : i32
    %c0_i32_0 = arith.constant 0 : i32
    %c0_i32_1 = arith.constant 0 : i32
    return %c0_i32, %c0_i32_0 : i32, i32
  }
  func.func @transform_3(%arg0: i32) -> (i32, i32) {
    %c0_i32 = arith.constant 0 : i32
    %c0_i32_0 = arith.constant 0 : i32
    return %arg0, %c0_i32 : i32, i32
  }
}

module attributes {stable_mosaic.version = 11 : i64} {
  func.func @_gemm_bias_lrelu_kernel(%arg0: i32, %arg1: memref<112x512xbf16, #tpu.memory_space<vmem>>, %arg2: memref<512x64xbf16, #tpu.memory_space<vmem>>, %arg3: memref<1x64xf32, #tpu.memory_space<vmem>>, %arg4: memref<112x64xbf16, #tpu.memory_space<vmem>>) attributes {dimension_semantics = [#tpu.dimension_semantics<parallel>], iteration_bounds = array<i64: 1>, scalar_prefetch = 0 : i64, scratch_operands = 0 : i64, tpu.core_type = #tpu.core_type<tc>, window_params = [{transform_indices = @transform_0, window_bounds = array<i64: 112, 512>}, {pipeline_mode = #tpu.pipeline_mode<synchronous>, transform_indices = @transform_1, window_bounds = array<i64: 512, 64>}, {pipeline_mode = #tpu.pipeline_mode<synchronous>, transform_indices = @transform_2, window_bounds = array<i64: 1, 64>}, {transform_indices = @transform_3, window_bounds = array<i64: 112, 64>}]} {
    %c0 = arith.constant 0 : index
    %c0_0 = arith.constant 0 : index
    %0 = vector.load %arg1[%c0, %c0_0] : memref<112x512xbf16, #tpu.memory_space<vmem>>, vector<112x512xbf16>
    %c0_1 = arith.constant 0 : index
    %c0_2 = arith.constant 0 : index
    %1 = vector.load %arg2[%c0_1, %c0_2] : memref<512x64xbf16, #tpu.memory_space<vmem>>, vector<512x64xbf16>
    %cst = arith.constant dense<0.000000e+00> : vector<112x64xf32>
    %2 = tpu.matmul %0, %1, %cst {dimension_numbers = #tpu.dot_dimension_numbers<[1], [0], [0], [1], [0, 0, 1, 1], [], []>} : vector<112x512xbf16>, vector<512x64xbf16>, vector<112x64xf32> -> vector<112x64xf32>
    %c0_3 = arith.constant 0 : index
    %c0_4 = arith.constant 0 : index
    %3 = vector.load %arg3[%c0_3, %c0_4] : memref<1x64xf32, #tpu.memory_space<vmem>>, vector<1x64xf32>
    %4 = vector.broadcast %3 : vector<1x64xf32> to vector<112x64xf32>
    %5 = arith.addf %2, %4 : vector<112x64xf32>
    %cst_5 = arith.constant 1.000000e-01 : f32
    %6 = vector.broadcast %cst_5 : f32 to vector<112x64xf32>
    %7 = arith.mulf %6, %5 : vector<112x64xf32>
    %8 = arith.maximumf %5, %7 : vector<112x64xf32>
    %9 = arith.truncf %8 : vector<112x64xf32> to vector<112x64xbf16>
    %c0_6 = arith.constant 0 : index
    %c0_7 = arith.constant 0 : index
    %10 = vector.load %arg4[%c0_6, %c0_7] : memref<112x64xbf16, #tpu.memory_space<vmem>>, vector<112x64xbf16>
    tpu.vector_store %arg4[%c0_6, %c0_7], %9 {strides = array<i32>} : memref<112x64xbf16, #tpu.memory_space<vmem>>, vector<112x64xbf16>,
    return
  }
  func.func @transform_0(%arg0: i32) -> (i32, i32) {
    %c0_i32 = arith.constant 0 : i32
    %c0_i32_0 = arith.constant 0 : i32
    return %arg0, %c0_i32 : i32, i32
  }
  func.func @transform_1(%arg0: i32) -> (i32, i32) {
    %c0_i32 = arith.constant 0 : i32
    %c0_i32_0 = arith.constant 0 : i32
    %c0_i32_1 = arith.constant 0 : i32
    return %c0_i32, %c0_i32_0 : i32, i32
  }
  func.func @transform_2(%arg0: i32) -> (i32, i32) {
    %c0_i32 = arith.constant 0 : i32
    %c0_i32_0 = arith.constant 0 : i32
    %c0_i32_1 = arith.constant 0 : i32
    return %c0_i32, %c0_i32_0 : i32, i32
  }
  func.func @transform_3(%arg0: i32) -> (i32, i32) {
    %c0_i32 = arith.constant 0 : i32
    %c0_i32_0 = arith.constant 0 : i32
    return %arg0, %c0_i32 : i32, i32
  }
}

module attributes {stable_mosaic.version = 11 : i64} {
  func.func @_mlp_head_kernel(%arg0: i32, %arg1: memref<16x3136xbf16, #tpu.memory_space<vmem>>, %arg2: memref<3136x512xbf16, #tpu.memory_space<vmem>>, %arg3: memref<1x512xf32, #tpu.memory_space<vmem>>, %arg4: memref<1x512xf32, #tpu.memory_space<vmem>>, %arg5: memref<1x1xf32, #tpu.memory_space<vmem>>, %arg6: memref<16x1xf32, #tpu.memory_space<vmem>>) attributes {dimension_semantics = [#tpu.dimension_semantics<parallel>], iteration_bounds = array<i64: 1>, scalar_prefetch = 0 : i64, scratch_operands = 0 : i64, tpu.core_type = #tpu.core_type<tc>, window_params = [{transform_indices = @transform_0, window_bounds = array<i64: 16, 3136>}, {pipeline_mode = #tpu.pipeline_mode<synchronous>, transform_indices = @transform_1, window_bounds = array<i64: 3136, 512>}, {pipeline_mode = #tpu.pipeline_mode<synchronous>, transform_indices = @transform_2, window_bounds = array<i64: 1, 512>}, {pipeline_mode = #tpu.pipeline_mode<synchronous>, transform_indices = @transform_3, window_bounds = array<i64: 1, 512>}, {pipeline_mode = #tpu.pipeline_mode<synchronous>, transform_indices = @transform_4, window_bounds = array<i64: 1, 1>}, {transform_indices = @transform_5, window_bounds = array<i64: 16, 1>}]} {
    %c0 = arith.constant 0 : index
    %c0_0 = arith.constant 0 : index
    %0 = vector.load %arg1[%c0, %c0_0] : memref<16x3136xbf16, #tpu.memory_space<vmem>>, vector<16x3136xbf16>
    %c0_1 = arith.constant 0 : index
    %c0_2 = arith.constant 0 : index
    %1 = vector.load %arg2[%c0_1, %c0_2] : memref<3136x512xbf16, #tpu.memory_space<vmem>>, vector<3136x512xbf16>
    %cst = arith.constant dense<0.000000e+00> : vector<16x512xf32>
    %2 = tpu.matmul %0, %1, %cst {dimension_numbers = #tpu.dot_dimension_numbers<[1], [0], [0], [1], [0, 0, 1, 1], [], []>} : vector<16x3136xbf16>, vector<3136x512xbf16>, vector<16x512xf32> -> vector<16x512xf32>
    %c0_3 = arith.constant 0 : index
    %c0_4 = arith.constant 0 : index
    %3 = vector.load %arg3[%c0_3, %c0_4] : memref<1x512xf32, #tpu.memory_space<vmem>>, vector<1x512xf32>
    %4 = vector.broadcast %3 : vector<1x512xf32> to vector<16x512xf32>
    %5 = arith.addf %2, %4 : vector<16x512xf32>
    %cst_5 = arith.constant 1.000000e-01 : f32
    %6 = vector.broadcast %cst_5 : f32 to vector<16x512xf32>
    %7 = arith.mulf %6, %5 : vector<16x512xf32>
    %8 = arith.maximumf %5, %7 : vector<16x512xf32>
    %c0_6 = arith.constant 0 : index
    %c0_7 = arith.constant 0 : index
    %9 = vector.load %arg4[%c0_6, %c0_7] : memref<1x512xf32, #tpu.memory_space<vmem>>, vector<1x512xf32>
    %10 = vector.broadcast %9 : vector<1x512xf32> to vector<16x512xf32>
    %11 = arith.mulf %8, %10 : vector<16x512xf32>
    %cst_8 = arith.constant dense<0.000000e+00> : vector<16xf32>
    %12 = vector.multi_reduction <add>, %11, %cst_8 [1] : vector<16x512xf32> to vector<16xf32>
    %13 = vector.shape_cast %12 : vector<16xf32> to vector<16x1xf32>
    %c0_9 = arith.constant 0 : index
    %c0_10 = arith.constant 0 : index
    %14 = vector.load %arg5[%c0_9, %c0_10] : memref<1x1xf32, #tpu.memory_space<vmem>>, vector<1x1xf32>
    %15 = vector.broadcast %14 : vector<1x1xf32> to vector<16x1xf32>
    %16 = arith.addf %13, %15 : vector<16x1xf32>
    %c0_11 = arith.constant 0 : index
    %c0_12 = arith.constant 0 : index
    %17 = vector.load %arg6[%c0_11, %c0_12] : memref<16x1xf32, #tpu.memory_space<vmem>>, vector<16x1xf32>
    tpu.vector_store %arg6[%c0_11, %c0_12], %16 {strides = array<i32>} : memref<16x1xf32, #tpu.memory_space<vmem>>, vector<16x1xf32>,
    return
  }
  func.func @transform_0(%arg0: i32) -> (i32, i32) {
    %c0_i32 = arith.constant 0 : i32
    %c0_i32_0 = arith.constant 0 : i32
    return %arg0, %c0_i32 : i32, i32
  }
  func.func @transform_1(%arg0: i32) -> (i32, i32) {
    %c0_i32 = arith.constant 0 : i32
    %c0_i32_0 = arith.constant 0 : i32
    %c0_i32_1 = arith.constant 0 : i32
    return %c0_i32, %c0_i32_0 : i32, i32
  }
  func.func @transform_2(%arg0: i32) -> (i32, i32) {
    %c0_i32 = arith.constant 0 : i32
    %c0_i32_0 = arith.constant 0 : i32
    %c0_i32_1 = arith.constant 0 : i32
    return %c0_i32, %c0_i32_0 : i32, i32
  }
  func.func @transform_3(%arg0: i32) -> (i32, i32) {
    %c0_i32 = arith.constant 0 : i32
    %c0_i32_0 = arith.constant 0 : i32
    %c0_i32_1 = arith.constant 0 : i32
    return %c0_i32, %c0_i32_0 : i32, i32
  }
  func.func @transform_4(%arg0: i32) -> (i32, i32) {
    %c0_i32 = arith.constant 0 : i32
    %c0_i32_0 = arith.constant 0 : i32
    %c0_i32_1 = arith.constant 0 : i32
    return %c0_i32, %c0_i32_0 : i32, i32
  }
  func.func @transform_5(%arg0: i32) -> (i32, i32) {
    %c0_i32 = arith.constant 0 : i32
    %c0_i32_0 = arith.constant 0 : i32
    return %arg0, %c0_i32 : i32, i32
  }
}

</mosaic_0001>

<llo_original>
// kernel: discriminator_forward.3
$region0: #{discriminator_forward.3}
  #allocation0 [shape = 'u32[]', space=smem, size = 0x4, offset = 0x4, fixed_abs, tag = 'smem constant byte address 0x4 - core index']
  #allocation1 [shape = 'u32[72,128]{1,0:T(1,128)}', space=vmem, size = 0x9000, scoped, tag = 'internal scratch']
  %s0 = inlined_call_operand.vmem [shape: bf16[512,16], index: 0, kind: input, shape index: {}]
  %s1 = inlined_call_operand.hbm [shape: bf16[16,32], index: 1, kind: input, shape index: {}]
  %s2 = inlined_call_operand.hbm [shape: f32[1,32], index: 2, kind: input, shape index: {}]
  %s3 = inlined_call_operand.vmem [shape: bf16[512,32], index: 3, kind: output, shape index: {}]
  %s4 = sld [smem:[#allocation0]]
  $region53: #{discriminator_forward.3} parent=0
    _
  %s6 = ssub.s32 1, %s4
  %s7 = scalar_select 0, %s6, %s4
  $region1: #{discriminator_forward.3} parent=0
    #allocation2 [shape = 'u8[4096]{0}', space=vmem, size = 0x1000, scoped, tag = 'input window, operand 1, single buffered']
    #allocation3 [shape = 's32[2]{0}', space=sflag, size = 0x8, scoped, tag = 'scoped memory for discriminator_forward.3']
    #allocation4 [shape = 'u8[512]{0}', space=vmem, size = 0x400, scoped, tag = 'input window, operand 2, single buffered']
    #allocation5 [shape = 's32[1]{0}', space=sflag, size = 0x4, scoped, tag = 'scoped memory for discriminator_forward.3']
    %8 = vsyncpa [#allocation3], 0
    %9 = vsyncpa [#allocation5], 0
    loop: start=0, step=1, limit=4
    $region2: #{discriminator_forward.3} parent=1 // loop_pre_header
      _
    $region3: #{discriminator_forward.3} parent=1 // loop_header
      %s11 = sphi 0, %s15
      %p12 = scmp.ge.s32.totalorder %s11, 4
      %s21 = sphi 0, %s23
      %s24 = sphi 0, %s21
      %s25 = sphi 0, %s24
      %s41 = sphi 0, %s25
      %s45 = sphi 0, %s45
      %s47 = sphi 0, %s45
      %s48 = sphi 0, %s47
      %s62 = sphi 0, %s48
      %s66 = sphi 0, %s66
      %s68 = sphi 0, %s66
      %s69 = sphi 0, %s68
      %s83 = sphi 0, %s69
      %s89 = sphi 0, %s91
      %s92 = sphi 0, %s89
      %s93 = sphi 0, %s92
      %s109 = sphi 0, %s93
    $region4: #{discriminator_forward.3} parent=1 // loop_header_branch
      %14 = sbr.rel (%p12) target = $region8
    $region5: #{discriminator_forward.3} parent=1 // loop_body
      %s16 = ssub.s32 %s11, 1
      %s17 = ssub.s32 %s11, 2
      %s18 = sadd.s32 %s11, 1
      %s19 = ssub.s32 %s11, %s18
      %p20 = scmp.eq.s32.totalorder %s19, 0
      %s22 = sadd.s32 %s21, 1
      %s23 = scalar_select %p20, %s21, %s22
      %p26 = pneg %p20
      %p27 = scmp.eq.s32.totalorder %s11, 1
      %p28 = por %p26, %p27
      %p29 = scmp.ne.s32.totalorder %s21, %s24
      %p30 = scmp.eq.s32.totalorder %s11, 0
      %p31 = por %p29, %p30
      %p32 = scmp.ne.s32.totalorder %s21, %s24
      %p33 = scmp.eq.s32.totalorder %s16, 1
      %p34 = por %p32, %p33
      %p35 = scmp.ne.s32.totalorder %s24, %s25
      %p36 = scmp.eq.s32.totalorder %s16, 0
      %p37 = por %p35, %p36
      %p38 = scmp.ne.s32.totalorder %s24, %s25
      %p39 = scmp.eq.s32.totalorder %s17, 1
      %p40 = por %p38, %p39
      %p42 = scmp.ne.s32.totalorder %s25, %s41
      %p43 = scmp.eq.s32.totalorder %s17, 0
      %p44 = por %p42, %p43
      %s46 = sadd.s32 %s45, 1
      %p49 = scmp.eq.s32.totalorder %s11, 1
      %p50 = scmp.ne.s32.totalorder %s45, %s47
      %p51 = scmp.eq.s32.totalorder %s11, 0
      %p52 = por %p50, %p51
      %p53 = scmp.ne.s32.totalorder %s45, %s47
      %p54 = scmp.eq.s32.totalorder %s16, 1
      %p55 = por %p53, %p54
      %p56 = scmp.ne.s32.totalorder %s47, %s48
      %p57 = scmp.eq.s32.totalorder %s16, 0
      %p58 = por %p56, %p57
      %p59 = scmp.ne.s32.totalorder %s47, %s48
      %p60 = scmp.eq.s32.totalorder %s17, 1
      %p61 = por %p59, %p60
      %p63 = scmp.ne.s32.totalorder %s48, %s62
      %p64 = scmp.eq.s32.totalorder %s17, 0
      %p65 = por %p63, %p64
      %s67 = sadd.s32 %s66, 1
      %p70 = scmp.eq.s32.totalorder %s11, 1
      %p71 = scmp.ne.s32.totalorder %s66, %s68
      %p72 = scmp.eq.s32.totalorder %s11, 0
      %p73 = por %p71, %p72
      %p74 = scmp.ne.s32.totalorder %s66, %s68
      %p75 = scmp.eq.s32.totalorder %s16, 1
      %p76 = por %p74, %p75
      %p77 = scmp.ne.s32.totalorder %s68, %s69
      %p78 = scmp.eq.s32.totalorder %s16, 0
      %p79 = por %p77, %p78
      %p80 = scmp.ne.s32.totalorder %s68, %s69
      %p81 = scmp.eq.s32.totalorder %s17, 1
      %p82 = por %p80, %p81
      %p84 = scmp.ne.s32.totalorder %s69, %s83
      %p85 = scmp.eq.s32.totalorder %s17, 0
      %p86 = por %p84, %p85
      %s87 = ssub.s32 %s11, %s18
      %p88 = scmp.eq.s32.totalorder %s87, 0
      %s90 = sadd.s32 %s89, 1
      %s91 = scalar_select %p88, %s89, %s90
      %p94 = pneg %p88
      %p95 = scmp.eq.s32.totalorder %s11, 1
      %p96 = por %p94, %p95
      %p97 = scmp.ne.s32.totalorder %s89, %s92
      %p98 = scmp.eq.s32.totalorder %s11, 0
      %p99 = por %p97, %p98
      %p100 = scmp.ne.s32.totalorder %s89, %s92
      %p101 = scmp.eq.s32.totalorder %s16, 1
      %p102 = por %p100, %p101
      %p103 = scmp.ne.s32.totalorder %s92, %s93
      %p104 = scmp.eq.s32.totalorder %s16, 0
      %p105 = por %p103, %p104
      %p106 = scmp.ne.s32.totalorder %s92, %s93
      %p107 = scmp.eq.s32.totalorder %s17, 1
      %p108 = por %p106, %p107
      %p110 = scmp.ne.s32.totalorder %s93, %s109
      %p111 = scmp.eq.s32.totalorder %s17, 0
      %p112 = por %p110, %p111
      %p113 = scmp.le.s32.totalorder 1, %s11
      %p114 = scmp.lt.s32.totalorder %s11, 3
      %p115 = pnand %p113, %p114
      %p116 = pneg %p115
      // Predicated region
      $region9: #{discriminator_forward.3} parent=5 // pred_check
        _
      $region10: #{discriminator_forward.3} parent=5 // pred_check_branch
        %118 = sbr.rel (%p115) target = $region12
      $region11: #{discriminator_forward.3} parent=5 // pred_region
        %s119 = ssub.s32 %s11, 1
        // Predicated region
        $region13: #{discriminator_forward.3} parent=11 // pred_check
          %p120 = pneg %p58
        $region14: #{discriminator_forward.3} parent=11 // pred_check_branch
          %122 = sbr.rel (%p120) target = $region16
        $region15: #{discriminator_forward.3} parent=11 // pred_region
          %124 = vsyncadd [#allocation3], 0
          %s125 = sshll.u32 %s1, 4
          %s126 = int_to_ptr.hbm [resolvable:$true] %s125
          %s127 = sshll.u32 [#allocation2], 4
          %s128 = int_to_ptr.vmem [resolvable:$true] %s127
          %133 = dma.hbm_to_vmem [thread:$0]  %s126, 128, %s128, [#allocation3], 64, 64, 4
        $region16: #{discriminator_forward.3} parent=11 // pred_fallthru
          _
        // Predicated region
        $region17: #{discriminator_forward.3} parent=11 // pred_check
          %p134 = pneg %p79
        $region18: #{discriminator_forward.3} parent=11 // pred_check_branch
          %136 = sbr.rel (%p134) target = $region20
        $region19: #{discriminator_forward.3} parent=11 // pred_region
          %138 = vsyncadd [#allocation5], 0
          %s140 = sshll.u32 %s2, 4
          %s141 = int_to_ptr.hbm [resolvable:$true] %s140
          %s142 = sshll.u32 [#allocation4], 4
          %s143 = int_to_ptr.vmem [resolvable:$true] %s142
          %145 = dma.hbm_to_vmem [thread:$0]  %s141, 16, %s143, [#allocation5]
        $region20: #{discriminator_forward.3} parent=11 // pred_fallthru
          _
      $region12: #{discriminator_forward.3} parent=5 // pred_fallthru
        _
      %p146 = scmp.lt.s32.totalorder %s11, 2
      // Predicated region
      $region21: #{discriminator_forward.3} parent=5 // pred_check
        %p147 = pneg %p146
      $region22: #{discriminator_forward.3} parent=5 // pred_check_branch
        %149 = sbr.rel (%p147) target = $region24
      $region23: #{discriminator_forward.3} parent=5 // pred_region
        // Predicated region
        $region25: #{discriminator_forward.3} parent=23 // pred_check
          %p150 = pneg %p31
        $region26: #{discriminator_forward.3} parent=23 // pred_check_branch
          %152 = sbr.rel (%p150) target = $region28
        $region27: #{discriminator_forward.3} parent=23 // pred_region
          %s153 = smul.u32 32, %s11
          %p154 = scmp.lt.s32.totalorder %s153, 63
          %s155 = scalar_select %p154, %s153, 63
          %s156 = smul.addr %s155, 4
          %s157 = scalar_lea.vmem %s0, %s156
          %s158 = smul.u32 32, %s11
        $region28: #{discriminator_forward.3} parent=23 // pred_fallthru
          _
      $region24: #{discriminator_forward.3} parent=5 // pred_fallthru
        _
      %p159 = scmp.le.s32.totalorder 1, %s11
      %p160 = scmp.lt.s32.totalorder %s11, 3
      %p161 = pnand %p159, %p160
      %p162 = pneg %p161
      // Predicated region
      $region29: #{discriminator_forward.3} parent=5 // pred_check
        _
      $region30: #{discriminator_forward.3} parent=5 // pred_check_branch
        %164 = sbr.rel (%p161) target = $region32
      $region31: #{discriminator_forward.3} parent=5 // pred_region
        %s165 = ssub.s32 %s11, 1
        // Predicated region
        $region33: #{discriminator_forward.3} parent=31 // pred_check
          %p166 = pneg %p58
        $region34: #{discriminator_forward.3} parent=31 // pred_check_branch
          %168 = sbr.rel (%p166) target = $region36
        $region35: #{discriminator_forward.3} parent=31 // pred_region
          %170 = dma.done [#allocation3], 128
        $region36: #{discriminator_forward.3} parent=31 // pred_fallthru
          _
        // Predicated region
        $region37: #{discriminator_forward.3} parent=31 // pred_check
          %p171 = pneg %p79
        $region38: #{discriminator_forward.3} parent=31 // pred_check_branch
          %173 = sbr.rel (%p171) target = $region40
        $region39: #{discriminator_forward.3} parent=31 // pred_region
          %175 = dma.done [#allocation5], 16
        $region40: #{discriminator_forward.3} parent=31 // pred_fallthru
          _
        %s176 = smul.u32 32, %s16
        %p177 = scmp.lt.s32.totalorder %s176, 63
        %s178 = scalar_select %p177, %s176, 63
        %s179 = smul.addr %s178, 4
        %s180 = scalar_lea.vmem %s0, %s179
        %p181 = pneg %p37
        %p182 = pneg %p34
        %p183 = pneg %p58
        %p184 = pneg %p55
        %p185 = pneg %p79
        %p186 = pneg %p76
        %p187 = pneg %p105
        %p188 = pneg %p102
        %s189 = smul.u32 32, %s16
        %p190 = scmp.lt.s32.totalorder %s189, 63
        %s191 = scalar_select %p190, %s189, 63
        %s192 = smul.addr %s191, 4
        %s193 = scalar_lea.vmem %s3, %s192
        %s194 = smul.u32 32, %s16
        %p195 = scmp.lt.s32.totalorder %s194, 63
        %s196 = scalar_select %p195, %s194, 63
        %s197 = smul.addr %s196, 4
        %s198 = scalar_lea.vmem %s0, %s197
        %s199 = smul.u32 32, %s16
        %s200 = smul.u32 32, %s16
        %p201 = scmp.lt.s32.totalorder %s200, 63
        %s202 = scalar_select %p201, %s200, 63
        %s203 = smul.addr %s202, 4
        %s204 = scalar_lea.vmem %s3, %s203
        %s205 = smul.u32 32, %s16
        %v207 = vld [vmem:[%s198] sm:$0xf]
        %v208 = vld [vmem:[%s198 + $0x4] sm:$0xf]
        %v209 = vld [vmem:[%s198 + $0x8] sm:$0xf]
        %v210 = vld [vmem:[%s198 + $0xc] sm:$0xf]
        %v211 = vld [vmem:[%s198 + $0x10] sm:$0xf]
        %v212 = vld [vmem:[%s198 + $0x14] sm:$0xf]
        %v213 = vld [vmem:[%s198 + $0x18] sm:$0xf]
        %v214 = vld [vmem:[%s198 + $0x1c] sm:$0xf]
        %v215 = vld [vmem:[%s198 + $0x20] sm:$0xf]
        %v216 = vld [vmem:[%s198 + $0x24] sm:$0xf]
        %v217 = vld [vmem:[%s198 + $0x28] sm:$0xf]
        %v218 = vld [vmem:[%s198 + $0x2c] sm:$0xf]
        %v219 = vld [vmem:[%s198 + $0x30] sm:$0xf]
        %v220 = vld [vmem:[%s198 + $0x34] sm:$0xf]
        %v221 = vld [vmem:[%s198 + $0x38] sm:$0xf]
        %v222 = vld [vmem:[%s198 + $0x3c] sm:$0xf]
        %v223 = vld [vmem:[%s198 + $0x40] sm:$0xf]
        %v224 = vld [vmem:[%s198 + $0x44] sm:$0xf]
        %v225 = vld [vmem:[%s198 + $0x48] sm:$0xf]
        %v226 = vld [vmem:[%s198 + $0x4c] sm:$0xf]
        %v227 = vld [vmem:[%s198 + $0x50] sm:$0xf]
        %v228 = vld [vmem:[%s198 + $0x54] sm:$0xf]
        %v229 = vld [vmem:[%s198 + $0x58] sm:$0xf]
        %v230 = vld [vmem:[%s198 + $0x5c] sm:$0xf]
        %v231 = vld [vmem:[%s198 + $0x60] sm:$0xf]
        %v232 = vld [vmem:[%s198 + $0x64] sm:$0xf]
        %v233 = vld [vmem:[%s198 + $0x68] sm:$0xf]
        %v234 = vld [vmem:[%s198 + $0x6c] sm:$0xf]
        %v235 = vld [vmem:[%s198 + $0x70] sm:$0xf]
        %v236 = vld [vmem:[%s198 + $0x74] sm:$0xf]
        %v237 = vld [vmem:[%s198 + $0x78] sm:$0xf]
        %v238 = vld [vmem:[%s198 + $0x7c] sm:$0xf]
        %v239 = vld [vmem:[#allocation2] sm:$0xf]
        %v240 = vld [vmem:[#allocation2 + $0x4] sm:$0xf]
        %v241 = vld [vmem:[#allocation4] sm:$0x1]
        %v243 = vperm.slane %v241, 0
        %v277 = vunpack.c.l.b16 %v207
        %v278 = vunpack.c.l.b16 %v208
        %v279 = vunpack.c.l.b16 %v209
        %v280 = vunpack.c.l.b16 %v210
        %v281 = vunpack.c.l.b16 %v211
        %v282 = vunpack.c.l.b16 %v212
        %v283 = vunpack.c.l.b16 %v213
        %v284 = vunpack.c.l.b16 %v214
        %v285 = vunpack.c.l.b16 %v215
        %v286 = vunpack.c.l.b16 %v216
        %v287 = vunpack.c.l.b16 %v217
        %v288 = vunpack.c.l.b16 %v218
        %v289 = vunpack.c.l.b16 %v219
        %v290 = vunpack.c.l.b16 %v220
        %v291 = vunpack.c.l.b16 %v221
        %v292 = vunpack.c.l.b16 %v222
        %v293 = vunpack.c.l.b16 %v223
        %v294 = vunpack.c.l.b16 %v224
        %v295 = vunpack.c.l.b16 %v225
        %v296 = vunpack.c.l.b16 %v226
        %v297 = vunpack.c.l.b16 %v227
        %v298 = vunpack.c.l.b16 %v228
        %v299 = vunpack.c.l.b16 %v229
        %v300 = vunpack.c.l.b16 %v230
        %v301 = vunpack.c.l.b16 %v231
        %v302 = vunpack.c.l.b16 %v232
        %v303 = vunpack.c.l.b16 %v233
        %v304 = vunpack.c.l.b16 %v234
        %v305 = vunpack.c.l.b16 %v235
        %v306 = vunpack.c.l.b16 %v236
        %v307 = vunpack.c.l.b16 %v237
        %v308 = vunpack.c.l.b16 %v238
        %v309 = vpack.c.b16 %v278, %v277
        %v310 = vpack.c.b16 %v280, %v279
        %v311 = vpack.c.b16 %v282, %v281
        %v312 = vpack.c.b16 %v284, %v283
        %v313 = vpack.c.b16 %v286, %v285
        %v314 = vpack.c.b16 %v288, %v287
        %v315 = vpack.c.b16 %v290, %v289
        %v316 = vpack.c.b16 %v292, %v291
        %v317 = vpack.c.b16 %v294, %v293
        %v318 = vpack.c.b16 %v296, %v295
        %v319 = vpack.c.b16 %v298, %v297
        %v320 = vpack.c.b16 %v300, %v299
        %v321 = vpack.c.b16 %v302, %v301
        %v322 = vpack.c.b16 %v304, %v303
        %v323 = vpack.c.b16 %v306, %v305
        %v324 = vpack.c.b16 %v308, %v307
        %v327 = vunpack.c.l.b16 %v239
        %v328 = vunpack.c.l.b16 %v240
        %v329 = vpack.c.b16 %v328, %v327
        %vm331 = vcmask 130048
        %v333 = vsel %vm331, %v309, 0
        %v336 = vsel %vm331, %v310, 0
        %v339 = vsel %vm331, %v311, 0
        %v342 = vsel %vm331, %v312, 0
        %v345 = vsel %vm331, %v313, 0
        %v348 = vsel %vm331, %v314, 0
        %v351 = vsel %vm331, %v315, 0
        %v354 = vsel %vm331, %v316, 0
        %v357 = vsel %vm331, %v317, 0
        %v360 = vsel %vm331, %v318, 0
        %v363 = vsel %vm331, %v319, 0
        %v366 = vsel %vm331, %v320, 0
        %v369 = vsel %vm331, %v321, 0
        %v372 = vsel %vm331, %v322, 0
        %v375 = vsel %vm331, %v323, 0
        %v378 = vsel %vm331, %v324, 0
        %380 = vmatpush.bf16.msra.mxu0 0
        %381 = vmatpush.bf16.msra.mxu0 0
        %382 = vmatpush.bf16.msra.mxu0 0
        %383 = vmatpush.bf16.msra.mxu0 0
        %384 = vmatpush.bf16.msra.mxu0 0
        %385 = vmatpush.bf16.msra.mxu0 0
        %386 = vmatpush.bf16.msra.mxu0 0
        %387 = vmatpush.bf16.msra.mxu0 %v329
        %388 = vmatmul.bf16.gmra.mxu0 %v333
        %v389 = vpop.f32.mrf.mxu0
        %v390 = vadd.f32 %v243, %v389
        %v391 = vpop.f32.mrf.mxu0
        %v392 = vadd.f32 %v243, %v391
        %393 = vmatmul.bf16.gmra.mxu0 %v336
        %v394 = vpop.f32.mrf.mxu0
        %v395 = vadd.f32 %v243, %v394
        %v396 = vpop.f32.mrf.mxu0
        %v397 = vadd.f32 %v243, %v396
        %398 = vmatmul.bf16.gmra.mxu0 %v339
        %v399 = vpop.f32.mrf.mxu0
        %v400 = vadd.f32 %v243, %v399
        %v401 = vpop.f32.mrf.mxu0
        %v402 = vadd.f32 %v243, %v401
        %403 = vmatmul.bf16.gmra.mxu0 %v342
        %v404 = vpop.f32.mrf.mxu0
        %v405 = vadd.f32 %v243, %v404
        %v406 = vpop.f32.mrf.mxu0
        %v407 = vadd.f32 %v243, %v406
        %408 = vmatmul.bf16.gmra.mxu0 %v345
        %v409 = vpop.f32.mrf.mxu0
        %v410 = vadd.f32 %v243, %v409
        %v411 = vpop.f32.mrf.mxu0
        %v412 = vadd.f32 %v243, %v411
        %413 = vmatmul.bf16.gmra.mxu0 %v348
        %v414 = vpop.f32.mrf.mxu0
        %v415 = vadd.f32 %v243, %v414
        %v416 = vpop.f32.mrf.mxu0
        %v417 = vadd.f32 %v243, %v416
        %418 = vmatmul.bf16.gmra.mxu0 %v351
        %v419 = vpop.f32.mrf.mxu0
        %v420 = vadd.f32 %v243, %v419
        %v421 = vpop.f32.mrf.mxu0
        %v422 = vadd.f32 %v243, %v421
        %423 = vmatmul.bf16.gmra.mxu0 %v354
        %v424 = vpop.f32.mrf.mxu0
        %v425 = vadd.f32 %v243, %v424
        %v426 = vpop.f32.mrf.mxu0
        %v427 = vadd.f32 %v243, %v426
        %428 = vmatmul.bf16.gmra.mxu0 %v357
        %v429 = vpop.f32.mrf.mxu0
        %v430 = vadd.f32 %v243, %v429
        %v431 = vpop.f32.mrf.mxu0
        %v432 = vadd.f32 %v243, %v431
        %433 = vmatmul.bf16.gmra.mxu0 %v360
        %v434 = vpop.f32.mrf.mxu0
        %v435 = vadd.f32 %v243, %v434
        %v436 = vpop.f32.mrf.mxu0
        %v437 = vadd.f32 %v243, %v436
        %438 = vmatmul.bf16.gmra.mxu0 %v363
        %v439 = vpop.f32.mrf.mxu0
        %v440 = vadd.f32 %v243, %v439
        %v441 = vpop.f32.mrf.mxu0
        %v442 = vadd.f32 %v243, %v441
        %443 = vmatmul.bf16.gmra.mxu0 %v366
        %v444 = vpop.f32.mrf.mxu0
        %v445 = vadd.f32 %v243, %v444
        %v446 = vpop.f32.mrf.mxu0
        %v447 = vadd.f32 %v243, %v446
        %448 = vmatmul.bf16.gmra.mxu0 %v369
        %v449 = vpop.f32.mrf.mxu0
        %v450 = vadd.f32 %v243, %v449
        %v451 = vpop.f32.mrf.mxu0
        %v452 = vadd.f32 %v243, %v451
        %453 = vmatmul.bf16.gmra.mxu0 %v372
        %v454 = vpop.f32.mrf.mxu0
        %v455 = vadd.f32 %v243, %v454
        %v456 = vpop.f32.mrf.mxu0
        %v457 = vadd.f32 %v243, %v456
        %458 = vmatmul.bf16.gmra.mxu0 %v375
        %v459 = vpop.f32.mrf.mxu0
        %v460 = vadd.f32 %v243, %v459
        %v461 = vpop.f32.mrf.mxu0
        %v462 = vadd.f32 %v243, %v461
        %463 = vmatmul.bf16.gmra.mxu0 %v378
        %v464 = vpop.f32.mrf.mxu0
        %v465 = vadd.f32 %v243, %v464
        %v466 = vpop.f32.mrf.mxu0
        %v467 = vadd.f32 %v243, %v466
        %468 = vdwg.mxu0
        %v469 = vmul.f32 %v390, 0.1
        %v470 = vmul.f32 %v392, 0.1
        %v471 = vmul.f32 %v395, 0.1
        %v472 = vmul.f32 %v397, 0.1
        %v473 = vmul.f32 %v400, 0.1
        %v474 = vmul.f32 %v402, 0.1
        %v475 = vmul.f32 %v405, 0.1
        %v476 = vmul.f32 %v407, 0.1
        %v477 = vmul.f32 %v410, 0.1
        %v478 = vmul.f32 %v412, 0.1
        %v479 = vmul.f32 %v415, 0.1
        %v480 = vmul.f32 %v417, 0.1
        %v481 = vmul.f32 %v420, 0.1
        %v482 = vmul.f32 %v422, 0.1
        %v483 = vmul.f32 %v425, 0.1
        %v484 = vmul.f32 %v427, 0.1
        %v485 = vmul.f32 %v430, 0.1
        %v486 = vmul.f32 %v432, 0.1
        %v487 = vmul.f32 %v435, 0.1
        %v488 = vmul.f32 %v437, 0.1
        %v489 = vmul.f32 %v440, 0.1
        %v490 = vmul.f32 %v442, 0.1
        %v491 = vmul.f32 %v445, 0.1
        %v492 = vmul.f32 %v447, 0.1
        %v493 = vmul.f32 %v450, 0.1
        %v494 = vmul.f32 %v452, 0.1
        %v495 = vmul.f32 %v455, 0.1
        %v496 = vmul.f32 %v457, 0.1
        %v497 = vmul.f32 %v460, 0.1
        %v498 = vmul.f32 %v462, 0.1
        %v499 = vmul.f32 %v465, 0.1
        %v500 = vmul.f32 %v467, 0.1
        %v501 = vmax.f32 %v390, %v469
        %v502 = vmax.f32 %v392, %v470
        %v503 = vmax.f32 %v395, %v471
        %v504 = vmax.f32 %v397, %v472
        %v505 = vmax.f32 %v400, %v473
        %v506 = vmax.f32 %v402, %v474
        %v507 = vmax.f32 %v405, %v475
        %v508 = vmax.f32 %v407, %v476
        %v509 = vmax.f32 %v410, %v477
        %v510 = vmax.f32 %v412, %v478
        %v511 = vmax.f32 %v415, %v479
        %v512 = vmax.f32 %v417, %v480
        %v513 = vmax.f32 %v420, %v481
        %v514 = vmax.f32 %v422, %v482
        %v515 = vmax.f32 %v425, %v483
        %v516 = vmax.f32 %v427, %v484
        %v517 = vmax.f32 %v430, %v485
        %v518 = vmax.f32 %v432, %v486
        %v519 = vmax.f32 %v435, %v487
        %v520 = vmax.f32 %v437, %v488
        %v521 = vmax.f32 %v440, %v489
        %v522 = vmax.f32 %v442, %v490
        %v523 = vmax.f32 %v445, %v491
        %v524 = vmax.f32 %v447, %v492
        %v525 = vmax.f32 %v450, %v493
        %v526 = vmax.f32 %v452, %v494
        %v527 = vmax.f32 %v455, %v495
        %v528 = vmax.f32 %v457, %v496
        %v529 = vmax.f32 %v460, %v497
        %v530 = vmax.f32 %v462, %v498
        %v531 = vmax.f32 %v465, %v499
        %v532 = vmax.f32 %v467, %v500
        %v533 = vpack.c.bf16 %v501, %v501
        %v534 = vpack.c.bf16 %v502, %v502
        %v535 = vpack.c.bf16 %v503, %v503
        %v536 = vpack.c.bf16 %v504, %v504
        %v537 = vpack.c.bf16 %v505, %v505
        %v538 = vpack.c.bf16 %v506, %v506
        %v539 = vpack.c.bf16 %v507, %v507
        %v540 = vpack.c.bf16 %v508, %v508
        %v541 = vpack.c.bf16 %v509, %v509
        %v542 = vpack.c.bf16 %v510, %v510
        %v543 = vpack.c.bf16 %v511, %v511
        %v544 = vpack.c.bf16 %v512, %v512
        %v545 = vpack.c.bf16 %v513, %v513
        %v546 = vpack.c.bf16 %v514, %v514
        %v547 = vpack.c.bf16 %v515, %v515
        %v548 = vpack.c.bf16 %v516, %v516
        %v549 = vpack.c.bf16 %v517, %v517
        %v550 = vpack.c.bf16 %v518, %v518
        %v551 = vpack.c.bf16 %v519, %v519
        %v552 = vpack.c.bf16 %v520, %v520
        %v553 = vpack.c.bf16 %v521, %v521
        %v554 = vpack.c.bf16 %v522, %v522
        %v555 = vpack.c.bf16 %v523, %v523
        %v556 = vpack.c.bf16 %v524, %v524
        %v557 = vpack.c.bf16 %v525, %v525
        %v558 = vpack.c.bf16 %v526, %v526
        %v559 = vpack.c.bf16 %v527, %v527
        %v560 = vpack.c.bf16 %v528, %v528
        %v561 = vpack.c.bf16 %v529, %v529
        %v562 = vpack.c.bf16 %v530, %v530
        %v563 = vpack.c.bf16 %v531, %v531
        %v564 = vpack.c.bf16 %v532, %v532
        %vm565 = vcmask 257024
        %566 = vst.msk [vmem:[%s204] sm:$0xf] %vm565, %v533
        %567 = vst.msk [vmem:[%s204 + $0x4] sm:$0xf] %vm565, %v534
        %568 = vst.msk [vmem:[%s204 + $0x8] sm:$0xf] %vm565, %v535
        %569 = vst.msk [vmem:[%s204 + $0xc] sm:$0xf] %vm565, %v536
        %570 = vst.msk [vmem:[%s204 + $0x10] sm:$0xf] %vm565, %v537
        %571 = vst.msk [vmem:[%s204 + $0x14] sm:$0xf] %vm565, %v538
        %572 = vst.msk [vmem:[%s204 + $0x18] sm:$0xf] %vm565, %v539
        %573 = vst.msk [vmem:[%s204 + $0x1c] sm:$0xf] %vm565, %v540
        %574 = vst.msk [vmem:[%s204 + $0x20] sm:$0xf] %vm565, %v541
        %575 = vst.msk [vmem:[%s204 + $0x24] sm:$0xf] %vm565, %v542
        %576 = vst.msk [vmem:[%s204 + $0x28] sm:$0xf] %vm565, %v543
        %577 = vst.msk [vmem:[%s204 + $0x2c] sm:$0xf] %vm565, %v544
        %578 = vst.msk [vmem:[%s204 + $0x30] sm:$0xf] %vm565, %v545
        %579 = vst.msk [vmem:[%s204 + $0x34] sm:$0xf] %vm565, %v546
        %580 = vst.msk [vmem:[%s204 + $0x38] sm:$0xf] %vm565, %v547
        %581 = vst.msk [vmem:[%s204 + $0x3c] sm:$0xf] %vm565, %v548
        %582 = vst.msk [vmem:[%s204 + $0x40] sm:$0xf] %vm565, %v549
        %583 = vst.msk [vmem:[%s204 + $0x44] sm:$0xf] %vm565, %v550
        %584 = vst.msk [vmem:[%s204 + $0x48] sm:$0xf] %vm565, %v551
        %585 = vst.msk [vmem:[%s204 + $0x4c] sm:$0xf] %vm565, %v552
        %586 = vst.msk [vmem:[%s204 + $0x50] sm:$0xf] %vm565, %v553
        %587 = vst.msk [vmem:[%s204 + $0x54] sm:$0xf] %vm565, %v554
        %588 = vst.msk [vmem:[%s204 + $0x58] sm:$0xf] %vm565, %v555
        %589 = vst.msk [vmem:[%s204 + $0x5c] sm:$0xf] %vm565, %v556
        %590 = vst.msk [vmem:[%s204 + $0x60] sm:$0xf] %vm565, %v557
        %591 = vst.msk [vmem:[%s204 + $0x64] sm:$0xf] %vm565, %v558
        %592 = vst.msk [vmem:[%s204 + $0x68] sm:$0xf] %vm565, %v559
        %593 = vst.msk [vmem:[%s204 + $0x6c] sm:$0xf] %vm565, %v560
        %594 = vst.msk [vmem:[%s204 + $0x70] sm:$0xf] %vm565, %v561
        %595 = vst.msk [vmem:[%s204 + $0x74] sm:$0xf] %vm565, %v562
        %596 = vst.msk [vmem:[%s204 + $0x78] sm:$0xf] %vm565, %v563
        %597 = vst.msk [vmem:[%s204 + $0x7c] sm:$0xf] %vm565, %v564
        %s598 = smul.u32 32, %s16
        %p599 = scmp.lt.s32.totalorder %s598, 63
        %s600 = scalar_select %p599, %s598, 63
        %s601 = smul.addr %s600, 4
        %s602 = scalar_lea.vmem %s3, %s601
        // Predicated region
        $region41: #{discriminator_forward.3} parent=31 // pred_check
          %p603 = pneg %p102
        $region42: #{discriminator_forward.3} parent=31 // pred_check_branch
          %605 = sbr.rel (%p603) target = $region44
        $region43: #{discriminator_forward.3} parent=31 // pred_region
          %s606 = smul.u32 32, %s16
        $region44: #{discriminator_forward.3} parent=31 // pred_fallthru
          _
      $region32: #{discriminator_forward.3} parent=5 // pred_fallthru
        _
      %p607 = scmp.le.s32.totalorder 2, %s11
      // Predicated region
      $region45: #{discriminator_forward.3} parent=5 // pred_check
        %p608 = pneg %p607
      $region46: #{discriminator_forward.3} parent=5 // pred_check_branch
        %610 = sbr.rel (%p608) target = $region48
      $region47: #{discriminator_forward.3} parent=5 // pred_region
        %s611 = ssub.s32 %s11, 2
        // Predicated region
        $region49: #{discriminator_forward.3} parent=47 // pred_check
          %p612 = pneg %p108
        $region50: #{discriminator_forward.3} parent=47 // pred_check_branch
          %614 = sbr.rel (%p612) target = $region52
        $region51: #{discriminator_forward.3} parent=47 // pred_region
          %s615 = smul.u32 32, %s17
          %p616 = scmp.lt.s32.totalorder %s615, 63
          %s617 = scalar_select %p616, %s615, 63
          %s618 = smul.addr %s617, 4
          %s619 = scalar_lea.vmem %s3, %s618
        $region52: #{discriminator_forward.3} parent=47 // pred_fallthru
          _
      $region48: #{discriminator_forward.3} parent=5 // pred_fallthru
        _
    $region6: #{discriminator_forward.3} parent=1 // loop_footer
      %s15 = sadd.s32 1, %s11
    $region7: #{discriminator_forward.3} parent=1 // loop_footer_branch
      %10 = sbr.rel target = $region3
    $region8: #{discriminator_forward.3} parent=1 // loop_exit
      _
    %620 = vsyncpa [#allocation3], 1
    %s621 = scalar_lea.sflag [#allocation3], 1
    %622 = vsyncpa %s621, 1
    %623 = vsyncpa [#allocation5], 1

// kernel: discriminator_forward.4
$region0: #{discriminator_forward.4}
  #allocation0 [shape = 'u32[]', space=smem, size = 0x4, offset = 0x4, fixed_abs, tag = 'smem constant byte address 0x4 - core index']
  #allocation1 [shape = 'u32[72,128]{1,0:T(1,128)}', space=vmem, size = 0x9000, scoped, tag = 'internal scratch']
  %s0 = inlined_call_operand.vmem [shape: bf16[112,512], index: 0, kind: input, shape index: {}]
  %s1 = inlined_call_operand.vmem [shape: bf16[512,64], index: 1, kind: input, shape index: {}]
  %s2 = inlined_call_operand.vmem [shape: f32[1,64], index: 2, kind: input, shape index: {}]
  %s3 = inlined_call_operand.vmem [shape: bf16[112,64], index: 3, kind: output, shape index: {}]
  %s4 = sld [smem:[#allocation0]]
  $region22: #{discriminator_forward.4} parent=0
    _
  %s6 = ssub.s32 1, %s4
  %s7 = scalar_select 0, %s6, %s4
  // Predicated region
  $region2: #{discriminator_forward.4} parent=0 // pred_check
    _
  $region3: #{discriminator_forward.4} parent=0 // pred_check_branch
    %9 = sbr.rel (0) target = $region5
  $region4: #{discriminator_forward.4} parent=0 // pred_region
    _
  $region5: #{discriminator_forward.4} parent=0 // pred_fallthru
    _
  // Predicated region
  $region6: #{discriminator_forward.4} parent=0 // pred_check
    _
  $region7: #{discriminator_forward.4} parent=0 // pred_check_branch
    %11 = sbr.rel (0) target = $region9
  $region8: #{discriminator_forward.4} parent=0 // pred_region
    _
  $region9: #{discriminator_forward.4} parent=0 // pred_fallthru
    _
  // Predicated region
  $region10: #{discriminator_forward.4} parent=0 // pred_check
    _
  $region11: #{discriminator_forward.4} parent=0 // pred_check_branch
    %13 = sbr.rel (0) target = $region13
  $region12: #{discriminator_forward.4} parent=0 // pred_region
    _
  $region13: #{discriminator_forward.4} parent=0 // pred_fallthru
    _
  %v14 = vld [vmem:[%s0] sm:$0xff]
  %v15 = vld [vmem:[%s0 + $0x8] sm:$0xff]
  %v16 = vld [vmem:[%s0 + $0x10] sm:$0xff]
  %v17 = vld [vmem:[%s0 + $0x18] sm:$0xff]
  %v18 = vld [vmem:[%s0 + $0x20] sm:$0xff]
  %v19 = vld [vmem:[%s0 + $0x28] sm:$0xff]
  %v20 = vld [vmem:[%s0 + $0x30] sm:$0xff]
  %v21 = vld [vmem:[%s0 + $0x38] sm:$0xff]
  %v22 = vld [vmem:[%s0 + $0x40] sm:$0xff]
  %v23 = vld [vmem:[%s0 + $0x48] sm:$0xff]
  %v24 = vld [vmem:[%s0 + $0x50] sm:$0xff]
  %v25 = vld [vmem:[%s0 + $0x58] sm:$0xff]
  %v26 = vld [vmem:[%s0 + $0x60] sm:$0xff]
  %v27 = vld [vmem:[%s0 + $0x68] sm:$0xff]
  %v28 = vld [vmem:[%s0 + $0x70] sm:$0xff]
  %v29 = vld [vmem:[%s0 + $0x78] sm:$0xff]
  %v30 = vld [vmem:[%s0 + $0x80] sm:$0xff]
  %v31 = vld [vmem:[%s0 + $0x88] sm:$0xff]
  %v32 = vld [vmem:[%s0 + $0x90] sm:$0xff]
  %v33 = vld [vmem:[%s0 + $0x98] sm:$0xff]
  %v34 = vld [vmem:[%s0 + $0xa0] sm:$0xff]
  %v35 = vld [vmem:[%s0 + $0xa8] sm:$0xff]
  %v36 = vld [vmem:[%s0 + $0xb0] sm:$0xff]
  %v37 = vld [vmem:[%s0 + $0xb8] sm:$0xff]
  %v38 = vld [vmem:[%s0 + $0xc0] sm:$0xff]
  %v39 = vld [vmem:[%s0 + $0xc8] sm:$0xff]
  %v40 = vld [vmem:[%s0 + $0xd0] sm:$0xff]
  %v41 = vld [vmem:[%s0 + $0xd8] sm:$0xff]
  %v42 = vld [vmem:[%s1] sm:$0xf]
  %v43 = vld [vmem:[%s1 + $0x4] sm:$0xf]
  %v44 = vld [vmem:[%s1 + $0x8] sm:$0xf]
  %v45 = vld [vmem:[%s1 + $0xc] sm:$0xf]
  %v46 = vld [vmem:[%s1 + $0x10] sm:$0xf]
  %v47 = vld [vmem:[%s1 + $0x14] sm:$0xf]
  %v48 = vld [vmem:[%s1 + $0x18] sm:$0xf]
  %v49 = vld [vmem:[%s1 + $0x1c] sm:$0xf]
  %v50 = vld [vmem:[%s1 + $0x20] sm:$0xf]
  %v51 = vld [vmem:[%s1 + $0x24] sm:$0xf]
  %v52 = vld [vmem:[%s1 + $0x28] sm:$0xf]
  %v53 = vld [vmem:[%s1 + $0x2c] sm:$0xf]
  %v54 = vld [vmem:[%s1 + $0x30] sm:$0xf]
  %v55 = vld [vmem:[%s1 + $0x34] sm:$0xf]
  %v56 = vld [vmem:[%s1 + $0x38] sm:$0xf]
  %v57 = vld [vmem:[%s1 + $0x3c] sm:$0xf]
  %v58 = vld [vmem:[%s1 + $0x40] sm:$0xf]
  %v59 = vld [vmem:[%s1 + $0x44] sm:$0xf]
  %v60 = vld [vmem:[%s1 + $0x48] sm:$0xf]
  %v61 = vld [vmem:[%s1 + $0x4c] sm:$0xf]
  %v62 = vld [vmem:[%s1 + $0x50] sm:$0xf]
  %v63 = vld [vmem:[%s1 + $0x54] sm:$0xf]
  %v64 = vld [vmem:[%s1 + $0x58] sm:$0xf]
  %v65 = vld [vmem:[%s1 + $0x5c] sm:$0xf]
  %v66 = vld [vmem:[%s1 + $0x60] sm:$0xf]
  %v67 = vld [vmem:[%s1 + $0x64] sm:$0xf]
  %v68 = vld [vmem:[%s1 + $0x68] sm:$0xf]
  %v69 = vld [vmem:[%s1 + $0x6c] sm:$0xf]
  %v70 = vld [vmem:[%s1 + $0x70] sm:$0xf]
  %v71 = vld [vmem:[%s1 + $0x74] sm:$0xf]
  %v72 = vld [vmem:[%s1 + $0x78] sm:$0xf]
  %v73 = vld [vmem:[%s1 + $0x7c] sm:$0xf]
  %v74 = vld [vmem:[%s1 + $0x80] sm:$0xf]
  %v75 = vld [vmem:[%s1 + $0x84] sm:$0xf]
  %v76 = vld [vmem:[%s1 + $0x88] sm:$0xf]
  %v77 = vld [vmem:[%s1 + $0x8c] sm:$0xf]
  %v78 = vld [vmem:[%s1 + $0x90] sm:$0xf]
  %v79 = vld [vmem:[%s1 + $0x94] sm:$0xf]
  %v80 = vld [vmem:[%s1 + $0x98] sm:$0xf]
  %v81 = vld [vmem:[%s1 + $0x9c] sm:$0xf]
  %v82 = vld [vmem:[%s1 + $0xa0] sm:$0xf]
  %v83 = vld [vmem:[%s1 + $0xa4] sm:$0xf]
  %v84 = vld [vmem:[%s1 + $0xa8] sm:$0xf]
  %v85 = vld [vmem:[%s1 + $0xac] sm:$0xf]
  %v86 = vld [vmem:[%s1 + $0xb0] sm:$0xf]
  %v87 = vld [vmem:[%s1 + $0xb4] sm:$0xf]
  %v88 = vld [vmem:[%s1 + $0xb8] sm:$0xf]
  %v89 = vld [vmem:[%s1 + $0xbc] sm:$0xf]
  %v90 = vld [vmem:[%s1 + $0xc0] sm:$0xf]
  %v91 = vld [vmem:[%s1 + $0xc4] sm:$0xf]
  %v92 = vld [vmem:[%s1 + $0xc8] sm:$0xf]
  %v93 = vld [vmem:[%s1 + $0xcc] sm:$0xf]
  %v94 = vld [vmem:[%s1 + $0xd0] sm:$0xf]
  %v95 = vld [vmem:[%s1 + $0xd4] sm:$0xf]
  %v96 = vld [vmem:[%s1 + $0xd8] sm:$0xf]
  %v97 = vld [vmem:[%s1 + $0xdc] sm:$0xf]
  %v98 = vld [vmem:[%s1 + $0xe0] sm:$0xf]
  %v99 = vld [vmem:[%s1 + $0xe4] sm:$0xf]
  %v100 = vld [vmem:[%s1 + $0xe8] sm:$0xf]
  %v101 = vld [vmem:[%s1 + $0xec] sm:$0xf]
  %v102 = vld [vmem:[%s1 + $0xf0] sm:$0xf]
  %v103 = vld [vmem:[%s1 + $0xf4] sm:$0xf]
  %v104 = vld [vmem:[%s1 + $0xf8] sm:$0xf]
  %v105 = vld [vmem:[%s1 + $0xfc] sm:$0xf]
  %v106 = vld [vmem:[%s2] sm:$0x1]
  %v108 = vperm.slane %v106, 0
  %v138 = vunpack.c.l.b16 %v14
  %v139 = vunpack.c.h.b16 %v14
  %v140 = vunpack.c.l.b16 %v15
  %v141 = vunpack.c.h.b16 %v15
  %v142 = vunpack.c.l.b16 %v16
  %v143 = vunpack.c.h.b16 %v16
  %v144 = vunpack.c.l.b16 %v17
  %v145 = vunpack.c.h.b16 %v17
  %v146 = vunpack.c.l.b16 %v18
  %v147 = vunpack.c.h.b16 %v18
  %v148 = vunpack.c.l.b16 %v19
  %v149 = vunpack.c.h.b16 %v19
  %v150 = vunpack.c.l.b16 %v20
  %v151 = vunpack.c.h.b16 %v20
  %v152 = vunpack.c.l.b16 %v21
  %v153 = vunpack.c.h.b16 %v21
  %v154 = vunpack.c.l.b16 %v22
  %v155 = vunpack.c.h.b16 %v22
  %v156 = vunpack.c.l.b16 %v23
  %v157 = vunpack.c.h.b16 %v23
  %v158 = vunpack.c.l.b16 %v24
  %v159 = vunpack.c.h.b16 %v24
  %v160 = vunpack.c.l.b16 %v25
  %v161 = vunpack.c.h.b16 %v25
  %v162 = vunpack.c.l.b16 %v26
  %v163 = vunpack.c.h.b16 %v26
  %v164 = vunpack.c.l.b16 %v27
  %v165 = vunpack.c.h.b16 %v27
  %v166 = vunpack.c.l.b16 %v28
  %v167 = vunpack.c.h.b16 %v28
  %v168 = vunpack.c.l.b16 %v29
  %v169 = vunpack.c.h.b16 %v29
  %v170 = vunpack.c.l.b16 %v30
  %v171 = vunpack.c.h.b16 %v30
  %v172 = vunpack.c.l.b16 %v31
  %v173 = vunpack.c.h.b16 %v31
  %v174 = vunpack.c.l.b16 %v32
  %v175 = vunpack.c.h.b16 %v32
  %v176 = vunpack.c.l.b16 %v33
  %v177 = vunpack.c.h.b16 %v33
  %v178 = vunpack.c.l.b16 %v34
  %v179 = vunpack.c.h.b16 %v34
  %v180 = vunpack.c.l.b16 %v35
  %v181 = vunpack.c.h.b16 %v35
  %v182 = vunpack.c.l.b16 %v36
  %v183 = vunpack.c.h.b16 %v36
  %v184 = vunpack.c.l.b16 %v37
  %v185 = vunpack.c.h.b16 %v37
  %v186 = vunpack.c.l.b16 %v38
  %v187 = vunpack.c.h.b16 %v38
  %v188 = vunpack.c.l.b16 %v39
  %v189 = vunpack.c.h.b16 %v39
  %v190 = vunpack.c.l.b16 %v40
  %v191 = vunpack.c.h.b16 %v40
  %v192 = vunpack.c.l.b16 %v41
  %v193 = vunpack.c.h.b16 %v41
  %v194 = vpack.c.b16 %v142, %v138
  %v195 = vpack.c.b16 %v143, %v139
  %v196 = vpack.c.b16 %v144, %v140
  %v197 = vpack.c.b16 %v145, %v141
  %v198 = vpack.c.b16 %v150, %v146
  %v199 = vpack.c.b16 %v151, %v147
  %v200 = vpack.c.b16 %v152, %v148
  %v201 = vpack.c.b16 %v153, %v149
  %v202 = vpack.c.b16 %v158, %v154
  %v203 = vpack.c.b16 %v159, %v155
  %v204 = vpack.c.b16 %v160, %v156
  %v205 = vpack.c.b16 %v161, %v157
  %v206 = vpack.c.b16 %v166, %v162
  %v207 = vpack.c.b16 %v167, %v163
  %v208 = vpack.c.b16 %v168, %v164
  %v209 = vpack.c.b16 %v169, %v165
  %v210 = vpack.c.b16 %v174, %v170
  %v211 = vpack.c.b16 %v175, %v171
  %v212 = vpack.c.b16 %v176, %v172
  %v213 = vpack.c.b16 %v177, %v173
  %v214 = vpack.c.b16 %v182, %v178
  %v215 = vpack.c.b16 %v183, %v179
  %v216 = vpack.c.b16 %v184, %v180
  %v217 = vpack.c.b16 %v185, %v181
  %v218 = vpack.c.b16 %v190, %v186
  %v219 = vpack.c.b16 %v191, %v187
  %v220 = vpack.c.b16 %v192, %v188
  %v221 = vpack.c.b16 %v193, %v189
  %v314 = vunpack.c.l.b16 %v42
  %v315 = vunpack.c.l.b16 %v43
  %v316 = vunpack.c.l.b16 %v44
  %v317 = vunpack.c.l.b16 %v45
  %v318 = vunpack.c.l.b16 %v46
  %v319 = vunpack.c.l.b16 %v47
  %v320 = vunpack.c.l.b16 %v48
  %v321 = vunpack.c.l.b16 %v49
  %v322 = vunpack.c.l.b16 %v50
  %v323 = vunpack.c.l.b16 %v51
  %v324 = vunpack.c.l.b16 %v52
  %v325 = vunpack.c.l.b16 %v53
  %v326 = vunpack.c.l.b16 %v54
  %v327 = vunpack.c.l.b16 %v55
  %v328 = vunpack.c.l.b16 %v56
  %v329 = vunpack.c.l.b16 %v57
  %v330 = vunpack.c.l.b16 %v58
  %v331 = vunpack.c.l.b16 %v59
  %v332 = vunpack.c.l.b16 %v60
  %v333 = vunpack.c.l.b16 %v61
  %v334 = vunpack.c.l.b16 %v62
  %v335 = vunpack.c.l.b16 %v63
  %v336 = vunpack.c.l.b16 %v64
  %v337 = vunpack.c.l.b16 %v65
  %v338 = vunpack.c.l.b16 %v66
  %v339 = vunpack.c.l.b16 %v67
  %v340 = vunpack.c.l.b16 %v68
  %v341 = vunpack.c.l.b16 %v69
  %v342 = vunpack.c.l.b16 %v70
  %v343 = vunpack.c.l.b16 %v71
  %v344 = vunpack.c.l.b16 %v72
  %v345 = vunpack.c.l.b16 %v73
  %v346 = vunpack.c.l.b16 %v74
  %v347 = vunpack.c.l.b16 %v75
  %v348 = vunpack.c.l.b16 %v76
  %v349 = vunpack.c.l.b16 %v77
  %v350 = vunpack.c.l.b16 %v78
  %v351 = vunpack.c.l.b16 %v79
  %v352 = vunpack.c.l.b16 %v80
  %v353 = vunpack.c.l.b16 %v81
  %v354 = vunpack.c.l.b16 %v82
  %v355 = vunpack.c.l.b16 %v83
  %v356 = vunpack.c.l.b16 %v84
  %v357 = vunpack.c.l.b16 %v85
  %v358 = vunpack.c.l.b16 %v86
  %v359 = vunpack.c.l.b16 %v87
  %v360 = vunpack.c.l.b16 %v88
  %v361 = vunpack.c.l.b16 %v89
  %v362 = vunpack.c.l.b16 %v90
  %v363 = vunpack.c.l.b16 %v91
  %v364 = vunpack.c.l.b16 %v92
  %v365 = vunpack.c.l.b16 %v93
  %v366 = vunpack.c.l.b16 %v94
  %v367 = vunpack.c.l.b16 %v95
  %v368 = vunpack.c.l.b16 %v96
  %v369 = vunpack.c.l.b16 %v97
  %v370 = vunpack.c.l.b16 %v98
  %v371 = vunpack.c.l.b16 %v99
  %v372 = vunpack.c.l.b16 %v100
  %v373 = vunpack.c.l.b16 %v101
  %v374 = vunpack.c.l.b16 %v102
  %v375 = vunpack.c.l.b16 %v103
  %v376 = vunpack.c.l.b16 %v104
  %v377 = vunpack.c.l.b16 %v105
  %v378 = vpack.c.b16 %v315, %v314
  %v379 = vpack.c.b16 %v317, %v316
  %v380 = vpack.c.b16 %v319, %v318
  %v381 = vpack.c.b16 %v321, %v320
  %v382 = vpack.c.b16 %v323, %v322
  %v383 = vpack.c.b16 %v325, %v324
  %v384 = vpack.c.b16 %v327, %v326
  %v385 = vpack.c.b16 %v329, %v328
  %v386 = vpack.c.b16 %v331, %v330
  %v387 = vpack.c.b16 %v333, %v332
  %v388 = vpack.c.b16 %v335, %v334
  %v389 = vpack.c.b16 %v337, %v336
  %v390 = vpack.c.b16 %v339, %v338
  %v391 = vpack.c.b16 %v341, %v340
  %v392 = vpack.c.b16 %v343, %v342
  %v393 = vpack.c.b16 %v345, %v344
  %v394 = vpack.c.b16 %v347, %v346
  %v395 = vpack.c.b16 %v349, %v348
  %v396 = vpack.c.b16 %v351, %v350
  %v397 = vpack.c.b16 %v353, %v352
  %v398 = vpack.c.b16 %v355, %v354
  %v399 = vpack.c.b16 %v357, %v356
  %v400 = vpack.c.b16 %v359, %v358
  %v401 = vpack.c.b16 %v361, %v360
  %v402 = vpack.c.b16 %v363, %v362
  %v403 = vpack.c.b16 %v365, %v364
  %v404 = vpack.c.b16 %v367, %v366
  %v405 = vpack.c.b16 %v369, %v368
  %v406 = vpack.c.b16 %v371, %v370
  %v407 = vpack.c.b16 %v373, %v372
  %v408 = vpack.c.b16 %v375, %v374
  %v409 = vpack.c.b16 %v377, %v376
  %442 = vmatpush.bf16.msra.mxu0 %v385
  %443 = vmatpush.bf16.msra.mxu0 %v384
  %444 = vmatpush.bf16.msra.mxu0 %v383
  %445 = vmatpush.bf16.msra.mxu0 %v382
  %446 = vmatpush.bf16.msra.mxu0 %v381
  %447 = vmatpush.bf16.msra.mxu0 %v380
  %448 = vmatpush.bf16.msra.mxu0 %v379
  %449 = vmatpush.bf16.msra.mxu0 %v378
  %450 = vmatmul.bf16.gmra.mxu0 %v194
  %v451 = vpop.f32.mrf.mxu0
  %v452 = vadd.f32 %v108, %v451
  %v453 = vpop.f32.mrf.mxu0
  %v454 = vadd.f32 %v108, %v453
  %455 = vmatmul.bf16.gmra.mxu0 %v198
  %v456 = vpop.f32.mrf.mxu0
  %v457 = vadd.f32 %v108, %v456
  %v458 = vpop.f32.mrf.mxu0
  %v459 = vadd.f32 %v108, %v458
  %460 = vmatmul.bf16.gmra.mxu0 %v202
  %v461 = vpop.f32.mrf.mxu0
  %v462 = vadd.f32 %v108, %v461
  %v463 = vpop.f32.mrf.mxu0
  %v464 = vadd.f32 %v108, %v463
  %465 = vmatmul.bf16.gmra.mxu0 %v206
  %v466 = vpop.f32.mrf.mxu0
  %v467 = vadd.f32 %v108, %v466
  %v468 = vpop.f32.mrf.mxu0
  %v469 = vadd.f32 %v108, %v468
  %470 = vmatmul.bf16.gmra.mxu0 %v210
  %v471 = vpop.f32.mrf.mxu0
  %v472 = vadd.f32 %v108, %v471
  %v473 = vpop.f32.mrf.mxu0
  %v474 = vadd.f32 %v108, %v473
  %475 = vmatmul.bf16.gmra.mxu0 %v214
  %v476 = vpop.f32.mrf.mxu0
  %v477 = vadd.f32 %v108, %v476
  %v478 = vpop.f32.mrf.mxu0
  %v479 = vadd.f32 %v108, %v478
  %480 = vmatmul.bf16.gmra.mxu0 %v218
  %v481 = vpop.f32.mrf.mxu0
  %v482 = vadd.f32 %v108, %v481
  %v483 = vpop.f32.mrf.mxu0
  %v484 = vadd.f32 %v108, %v483
  %485 = vdwg.mxu0
  %486 = vmatpush.bf16.msra.mxu0 %v393
  %487 = vmatpush.bf16.msra.mxu0 %v392
  %488 = vmatpush.bf16.msra.mxu0 %v391
  %489 = vmatpush.bf16.msra.mxu0 %v390
  %490 = vmatpush.bf16.msra.mxu0 %v389
  %491 = vmatpush.bf16.msra.mxu0 %v388
  %492 = vmatpush.bf16.msra.mxu0 %v387
  %493 = vmatpush.bf16.msra.mxu0 %v386
  %494 = vmatmul.bf16.gmra.mxu0 %v195
  %v495 = vpop.f32.mrf.mxu0
  %v496 = vadd.f32 %v452, %v495
  %v497 = vpop.f32.mrf.mxu0
  %v498 = vadd.f32 %v454, %v497
  %499 = vmatmul.bf16.gmra.mxu0 %v199
  %v500 = vpop.f32.mrf.mxu0
  %v501 = vadd.f32 %v457, %v500
  %v502 = vpop.f32.mrf.mxu0
  %v503 = vadd.f32 %v459, %v502
  %504 = vmatmul.bf16.gmra.mxu0 %v203
  %v505 = vpop.f32.mrf.mxu0
  %v506 = vadd.f32 %v462, %v505
  %v507 = vpop.f32.mrf.mxu0
  %v508 = vadd.f32 %v464, %v507
  %509 = vmatmul.bf16.gmra.mxu0 %v207
  %v510 = vpop.f32.mrf.mxu0
  %v511 = vadd.f32 %v467, %v510
  %v512 = vpop.f32.mrf.mxu0
  %v513 = vadd.f32 %v469, %v512
  %514 = vmatmul.bf16.gmra.mxu0 %v211
  %v515 = vpop.f32.mrf.mxu0
  %v516 = vadd.f32 %v472, %v515
  %v517 = vpop.f32.mrf.mxu0
  %v518 = vadd.f32 %v474, %v517
  %519 = vmatmul.bf16.gmra.mxu0 %v215
  %v520 = vpop.f32.mrf.mxu0
  %v521 = vadd.f32 %v477, %v520
  %v522 = vpop.f32.mrf.mxu0
  %v523 = vadd.f32 %v479, %v522
  %524 = vmatmul.bf16.gmra.mxu0 %v219
  %v525 = vpop.f32.mrf.mxu0
  %v526 = vadd.f32 %v482, %v525
  %v527 = vpop.f32.mrf.mxu0
  %v528 = vadd.f32 %v484, %v527
  %529 = vdwg.mxu0
  %530 = vmatpush.bf16.msra.mxu0 %v401
  %531 = vmatpush.bf16.msra.mxu0 %v400
  %532 = vmatpush.bf16.msra.mxu0 %v399
  %533 = vmatpush.bf16.msra.mxu0 %v398
  %534 = vmatpush.bf16.msra.mxu0 %v397
  %535 = vmatpush.bf16.msra.mxu0 %v396
  %536 = vmatpush.bf16.msra.mxu0 %v395
  %537 = vmatpush.bf16.msra.mxu0 %v394
  %538 = vmatmul.bf16.gmra.mxu0 %v196
  %v539 = vpop.f32.mrf.mxu0
  %v540 = vadd.f32 %v496, %v539
  %v541 = vpop.f32.mrf.mxu0
  %v542 = vadd.f32 %v498, %v541
  %543 = vmatmul.bf16.gmra.mxu0 %v200
  %v544 = vpop.f32.mrf.mxu0
  %v545 = vadd.f32 %v501, %v544
  %v546 = vpop.f32.mrf.mxu0
  %v547 = vadd.f32 %v503, %v546
  %548 = vmatmul.bf16.gmra.mxu0 %v204
  %v549 = vpop.f32.mrf.mxu0
  %v550 = vadd.f32 %v506, %v549
  %v551 = vpop.f32.mrf.mxu0
  %v552 = vadd.f32 %v508, %v551
  %553 = vmatmul.bf16.gmra.mxu0 %v208
  %v554 = vpop.f32.mrf.mxu0
  %v555 = vadd.f32 %v511, %v554
  %v556 = vpop.f32.mrf.mxu0
  %v557 = vadd.f32 %v513, %v556
  %558 = vmatmul.bf16.gmra.mxu0 %v212
  %v559 = vpop.f32.mrf.mxu0
  %v560 = vadd.f32 %v516, %v559
  %v561 = vpop.f32.mrf.mxu0
  %v562 = vadd.f32 %v518, %v561
  %563 = vmatmul.bf16.gmra.mxu0 %v216
  %v564 = vpop.f32.mrf.mxu0
  %v565 = vadd.f32 %v521, %v564
  %v566 = vpop.f32.mrf.mxu0
  %v567 = vadd.f32 %v523, %v566
  %568 = vmatmul.bf16.gmra.mxu0 %v220
  %v569 = vpop.f32.mrf.mxu0
  %v570 = vadd.f32 %v526, %v569
  %v571 = vpop.f32.mrf.mxu0
  %v572 = vadd.f32 %v528, %v571
  %573 = vdwg.mxu0
  %574 = vmatpush.bf16.msra.mxu0 %v409
  %575 = vmatpush.bf16.msra.mxu0 %v408
  %576 = vmatpush.bf16.msra.mxu0 %v407
  %577 = vmatpush.bf16.msra.mxu0 %v406
  %578 = vmatpush.bf16.msra.mxu0 %v405
  %579 = vmatpush.bf16.msra.mxu0 %v404
  %580 = vmatpush.bf16.msra.mxu0 %v403
  %581 = vmatpush.bf16.msra.mxu0 %v402
  %582 = vmatmul.bf16.gmra.mxu0 %v197
  %v583 = vpop.f32.mrf.mxu0
  %v584 = vadd.f32 %v540, %v583
  %v585 = vpop.f32.mrf.mxu0
  %v586 = vadd.f32 %v542, %v585
  %587 = vmatmul.bf16.gmra.mxu0 %v201
  %v588 = vpop.f32.mrf.mxu0
  %v589 = vadd.f32 %v545, %v588
  %v590 = vpop.f32.mrf.mxu0
  %v591 = vadd.f32 %v547, %v590
  %592 = vmatmul.bf16.gmra.mxu0 %v205
  %v593 = vpop.f32.mrf.mxu0
  %v594 = vadd.f32 %v550, %v593
  %v595 = vpop.f32.mrf.mxu0
  %v596 = vadd.f32 %v552, %v595
  %597 = vmatmul.bf16.gmra.mxu0 %v209
  %v598 = vpop.f32.mrf.mxu0
  %v599 = vadd.f32 %v555, %v598
  %v600 = vpop.f32.mrf.mxu0
  %v601 = vadd.f32 %v557, %v600
  %602 = vmatmul.bf16.gmra.mxu0 %v213
  %v603 = vpop.f32.mrf.mxu0
  %v604 = vadd.f32 %v560, %v603
  %v605 = vpop.f32.mrf.mxu0
  %v606 = vadd.f32 %v562, %v605
  %607 = vmatmul.bf16.gmra.mxu0 %v217
  %v608 = vpop.f32.mrf.mxu0
  %v609 = vadd.f32 %v565, %v608
  %v610 = vpop.f32.mrf.mxu0
  %v611 = vadd.f32 %v567, %v610
  %612 = vmatmul.bf16.gmra.mxu0 %v221
  %v613 = vpop.f32.mrf.mxu0
  %v614 = vadd.f32 %v570, %v613
  %v615 = vpop.f32.mrf.mxu0
  %v616 = vadd.f32 %v572, %v615
  %617 = vdwg.mxu0
  %v618 = vmul.f32 %v584, 0.1
  %v619 = vmul.f32 %v586, 0.1
  %v620 = vmul.f32 %v589, 0.1
  %v621 = vmul.f32 %v591, 0.1
  %v622 = vmul.f32 %v594, 0.1
  %v623 = vmul.f32 %v596, 0.1
  %v624 = vmul.f32 %v599, 0.1
  %v625 = vmul.f32 %v601, 0.1
  %v626 = vmul.f32 %v604, 0.1
  %v627 = vmul.f32 %v606, 0.1
  %v628 = vmul.f32 %v609, 0.1
  %v629 = vmul.f32 %v611, 0.1
  %v630 = vmul.f32 %v614, 0.1
  %v631 = vmul.f32 %v616, 0.1
  %v632 = vmax.f32 %v584, %v618
  %v633 = vmax.f32 %v586, %v619
  %v634 = vmax.f32 %v589, %v620
  %v635 = vmax.f32 %v591, %v621
  %v636 = vmax.f32 %v594, %v622
  %v637 = vmax.f32 %v596, %v623
  %v638 = vmax.f32 %v599, %v624
  %v639 = vmax.f32 %v601, %v625
  %v640 = vmax.f32 %v604, %v626
  %v641 = vmax.f32 %v606, %v627
  %v642 = vmax.f32 %v609, %v628
  %v643 = vmax.f32 %v611, %v629
  %v644 = vmax.f32 %v614, %v630
  %v645 = vmax.f32 %v616, %v631
  %v646 = vpack.c.bf16 %v632, %v632
  %v647 = vpack.c.bf16 %v633, %v633
  %v648 = vpack.c.bf16 %v634, %v634
  %v649 = vpack.c.bf16 %v635, %v635
  %v650 = vpack.c.bf16 %v636, %v636
  %v651 = vpack.c.bf16 %v637, %v637
  %v652 = vpack.c.bf16 %v638, %v638
  %v653 = vpack.c.bf16 %v639, %v639
  %v654 = vpack.c.bf16 %v640, %v640
  %v655 = vpack.c.bf16 %v641, %v641
  %v656 = vpack.c.bf16 %v642, %v642
  %v657 = vpack.c.bf16 %v643, %v643
  %v658 = vpack.c.bf16 %v644, %v644
  %v659 = vpack.c.bf16 %v645, %v645
  %vm660 = vcmask 519168
  %661 = vst.msk [vmem:[%s3] sm:$0xf] %vm660, %v646
  %662 = vst.msk [vmem:[%s3 + $0x4] sm:$0xf] %vm660, %v647
  %663 = vst.msk [vmem:[%s3 + $0x8] sm:$0xf] %vm660, %v648
  %664 = vst.msk [vmem:[%s3 + $0xc] sm:$0xf] %vm660, %v649
  %665 = vst.msk [vmem:[%s3 + $0x10] sm:$0xf] %vm660, %v650
  %666 = vst.msk [vmem:[%s3 + $0x14] sm:$0xf] %vm660, %v651
  %667 = vst.msk [vmem:[%s3 + $0x18] sm:$0xf] %vm660, %v652
  %668 = vst.msk [vmem:[%s3 + $0x1c] sm:$0xf] %vm660, %v653
  %669 = vst.msk [vmem:[%s3 + $0x20] sm:$0xf] %vm660, %v654
  %670 = vst.msk [vmem:[%s3 + $0x24] sm:$0xf] %vm660, %v655
  %671 = vst.msk [vmem:[%s3 + $0x28] sm:$0xf] %vm660, %v656
  %672 = vst.msk [vmem:[%s3 + $0x2c] sm:$0xf] %vm660, %v657
  %673 = vst.msk [vmem:[%s3 + $0x30] sm:$0xf] %vm660, %v658
  %674 = vst.msk [vmem:[%s3 + $0x34] sm:$0xf] %vm660, %v659
  // Predicated region
  $region14: #{discriminator_forward.4} parent=0 // pred_check
    _
  $region15: #{discriminator_forward.4} parent=0 // pred_check_branch
    %676 = sbr.rel (0) target = $region17
  $region16: #{discriminator_forward.4} parent=0 // pred_region
    _
  $region17: #{discriminator_forward.4} parent=0 // pred_fallthru
    _
  // Predicated region
  $region18: #{discriminator_forward.4} parent=0 // pred_check
    _
  $region19: #{discriminator_forward.4} parent=0 // pred_check_branch
    %678 = sbr.rel (0) target = $region21
  $region20: #{discriminator_forward.4} parent=0 // pred_region
    _
  $region21: #{discriminator_forward.4} parent=0 // pred_fallthru
    _

// kernel: discriminator_forward.5
$region0: #{discriminator_forward.5}
  #allocation0 [shape = 'u32[]', space=smem, size = 0x4, offset = 0x4, fixed_abs, tag = 'smem constant byte address 0x4 - core index']
  #allocation1 [shape = 'u32[72,128]{1,0:T(1,128)}', space=vmem, size = 0x9000, scoped, tag = 'internal scratch']
  #allocation2 [shape = 'f32[1,1]{1,0:T(1,128)S(1)}', space=vmem, size = 0x200, scoped, tag = 'scoped memory for discriminator_forward.5']
  %s0 = inlined_call_operand.vmem [shape: bf16[16,3136], index: 0, kind: input, shape index: {}]
  %s1 = inlined_call_operand.vmem [shape: bf16[3136,512], index: 1, kind: input, shape index: {}]
  %s2 = inlined_call_operand.vmem [shape: f32[1,512], index: 2, kind: input, shape index: {}]
  %s3 = inlined_call_operand.vmem [shape: f32[1,512], index: 3, kind: input, shape index: {}]
  %s4 = inlined_call_operand.<no memory space> [shape: f32[1,1], index: 4, kind: input, shape index: {}]
  %s5 = inlined_call_operand.vmem [shape: f32[16,1], index: 5, kind: output, shape index: {}]
  %s6 = sld [smem:[#allocation0]]
  $region30: #{discriminator_forward.5} parent=0
    _
  %s8 = ssub.s32 1, %s6
  %s9 = scalar_select 0, %s8, %s6
  %v10 = vstv %s4
  %11 = vst [vmem:[#allocation2] sm:$0x1] %v10
  // Predicated region
  $region2: #{discriminator_forward.5} parent=0 // pred_check
    _
  $region3: #{discriminator_forward.5} parent=0 // pred_check_branch
    %13 = sbr.rel (0) target = $region5
  $region4: #{discriminator_forward.5} parent=0 // pred_region
    _
  $region5: #{discriminator_forward.5} parent=0 // pred_fallthru
    _
  // Predicated region
  $region6: #{discriminator_forward.5} parent=0 // pred_check
    _
  $region7: #{discriminator_forward.5} parent=0 // pred_check_branch
    %15 = sbr.rel (0) target = $region9
  $region8: #{discriminator_forward.5} parent=0 // pred_region
    _
  $region9: #{discriminator_forward.5} parent=0 // pred_fallthru
    _
  // Predicated region
  $region10: #{discriminator_forward.5} parent=0 // pred_check
    _
  $region11: #{discriminator_forward.5} parent=0 // pred_check_branch
    %17 = sbr.rel (0) target = $region13
  $region12: #{discriminator_forward.5} parent=0 // pred_region
    _
  $region13: #{discriminator_forward.5} parent=0 // pred_fallthru
    _
  // Predicated region
  $region14: #{discriminator_forward.5} parent=0 // pred_check
    _
  $region15: #{discriminator_forward.5} parent=0 // pred_check_branch
    %19 = sbr.rel (0) target = $region17
  $region16: #{discriminator_forward.5} parent=0 // pred_region
    _
  $region17: #{discriminator_forward.5} parent=0 // pred_fallthru
    _
  // Predicated region
  $region18: #{discriminator_forward.5} parent=0 // pred_check
    _
  $region19: #{discriminator_forward.5} parent=0 // pred_check_branch
    %21 = sbr.rel (0) target = $region21
  $region20: #{discriminator_forward.5} parent=0 // pred_region
    _
  $region21: #{discriminator_forward.5} parent=0 // pred_fallthru
    _
  %v23 = vld [vmem:[%s0] sm:$0xff]
  %v24 = vld [vmem:[%s0 + $0x8] sm:$0xff]
  %v25 = vld [vmem:[%s0 + $0x10] sm:$0xff]
  %v26 = vld [vmem:[%s0 + $0x18] sm:$0xff]
  %v27 = vld [vmem:[%s0 + $0x20] sm:$0xff]
  %v28 = vld [vmem:[%s0 + $0x28] sm:$0xff]
  %v29 = vld [vmem:[%s0 + $0x30] sm:$0xff]
  %v30 = vld [vmem:[%s0 + $0x38] sm:$0xff]
  %v31 = vld [vmem:[%s0 + $0x40] sm:$0xff]
  %v32 = vld [vmem:[%s0 + $0x48] sm:$0xff]
  %v33 = vld [vmem:[%s0 + $0x50] sm:$0xff]
  %v34 = vld [vmem:[%s0 + $0x58] sm:$0xff]
  %v35 = vld [vmem:[%s0 + $0x60] sm:$0xf]
  %v36 = vld [vmem:[%s0 + $0x64] sm:$0xff]
  %v37 = vld [vmem:[%s0 + $0x6c] sm:$0xff]
  %v38 = vld [vmem:[%s0 + $0x74] sm:$0xff]
  %v39 = vld [vmem:[%s0 + $0x7c] sm:$0xff]
  %v40 = vld [vmem:[%s0 + $0x84] sm:$0xff]
  %v41 = vld [vmem:[%s0 + $0x8c] sm:$0xff]
  %v42 = vld [vmem:[%s0 + $0x94] sm:$0xff]
  %v43 = vld [vmem:[%s0 + $0x9c] sm:$0xff]
  %v44 = vld [vmem:[%s0 + $0xa4] sm:$0xff]
  %v45 = vld [vmem:[%s0 + $0xac] sm:$0xff]
  %v46 = vld [vmem:[%s0 + $0xb4] sm:$0xff]
  %v47 = vld [vmem:[%s0 + $0xbc] sm:$0xff]
  %v48 = vld [vmem:[%s0 + $0xc4] sm:$0xf]
  %v49 = vld [vmem:[%s1] sm:$0xff]
  %v50 = vld [vmem:[%s1 + $0x8] sm:$0xff]
  %v51 = vld [vmem:[%s1 + $0x10] sm:$0xff]
  %v52 = vld [vmem:[%s1 + $0x18] sm:$0xff]
  %v53 = vld [vmem:[%s1 + $0x20] sm:$0xff]
  %v54 = vld [vmem:[%s1 + $0x28] sm:$0xff]
  %v55 = vld [vmem:[%s1 + $0x30] sm:$0xff]
  %v56 = vld [vmem:[%s1 + $0x38] sm:$0xff]
  %v57 = vld [vmem:[%s1 + $0x40] sm:$0xff]
  %v58 = vld [vmem:[%s1 + $0x48] sm:$0xff]
  %v59 = vld [vmem:[%s1 + $0x50] sm:$0xff]
  %v60 = vld [vmem:[%s1 + $0x58] sm:$0xff]
  %v61 = vld [vmem:[%s1 + $0x60] sm:$0xff]
  %v62 = vld [vmem:[%s1 + $0x68] sm:$0xff]
  %v63 = vld [vmem:[%s1 + $0x70] sm:$0xff]
  %v64 = vld [vmem:[%s1 + $0x78] sm:$0xff]
  %v65 = vld [vmem:[%s1 + $0x80] sm:$0xff]
  %v66 = vld [vmem:[%s1 + $0x88] sm:$0xff]
  %v67 = vld [vmem:[%s1 + $0x90] sm:$0xff]
  %v68 = vld [vmem:[%s1 + $0x98] sm:$0xff]
  %v69 = vld [vmem:[%s1 + $0xa0] sm:$0xff]
  %v70 = vld [vmem:[%s1 + $0xa8] sm:$0xff]
  %v71 = vld [vmem:[%s1 + $0xb0] sm:$0xff]
  %v72 = vld [vmem:[%s1 + $0xb8] sm:$0xff]
  %v73 = vld [vmem:[%s1 + $0xc0] sm:$0xff]
  %v74 = vld [vmem:[%s1 + $0xc8] sm:$0xff]
  %v75 = vld [vmem:[%s1 + $0xd0] sm:$0xff]
  %v76 = vld [vmem:[%s1 + $0xd8] sm:$0xff]
  %v77 = vld [vmem:[%s1 + $0xe0] sm:$0xff]
  %v78 = vld [vmem:[%s1 + $0xe8] sm:$0xff]
  %v79 = vld [vmem:[%s1 + $0xf0] sm:$0xff]
  %v80 = vld [vmem:[%s1 + $0xf8] sm:$0xff]
  %v81 = vld [vmem:[%s1 + $0x100] sm:$0xff]
  %v82 = vld [vmem:[%s1 + $0x108] sm:$0xff]
  %v83 = vld [vmem:[%s1 + $0x110] sm:$0xff]
  %v84 = vld [vmem:[%s1 + $0x118] sm:$0xff]
  %v85 = vld [vmem:[%s1 + $0x120] sm:$0xff]
  %v86 = vld [vmem:[%s1 + $0x128] sm:$0xff]
  %v87 = vld [vmem:[%s1 + $0x130] sm:$0xff]
  %v88 = vld [vmem:[%s1 + $0x138] sm:$0xff]
  %v89 = vld [vmem:[%s1 + $0x140] sm:$0xff]
  %v90 = vld [vmem:[%s1 + $0x148] sm:$0xff]
  %v91 = vld [vmem:[%s1 + $0x150] sm:$0xff]
  %v92 = vld [vmem:[%s1 + $0x158] sm:$0xff]
  %v93 = vld [vmem:[%s1 + $0x160] sm:$0xff]
  %v94 = vld [vmem:[%s1 + $0x168] sm:$0xff]
  %v95 = vld [vmem:[%s1 + $0x170] sm:$0xff]
  %v96 = vld [vmem:[%s1 + $0x178] sm:$0xff]
  %v97 = vld [vmem:[%s1 + $0x180] sm:$0xff]
  %v98 = vld [vmem:[%s1 + $0x188] sm:$0xff]
  %v99 = vld [vmem:[%s1 + $0x190] sm:$0xff]
  %v100 = vld [vmem:[%s1 + $0x198] sm:$0xff]
  %v101 = vld [vmem:[%s1 + $0x1a0] sm:$0xff]
  %v102 = vld [vmem:[%s1 + $0x1a8] sm:$0xff]
  %v103 = vld [vmem:[%s1 + $0x1b0] sm:$0xff]
  %v104 = vld [vmem:[%s1 + $0x1b8] sm:$0xff]
  %v105 = vld [vmem:[%s1 + $0x1c0] sm:$0xff]
  %v106 = vld [vmem:[%s1 + $0x1c8] sm:$0xff]
  %v107 = vld [vmem:[%s1 + $0x1d0] sm:$0xff]
  %v108 = vld [vmem:[%s1 + $0x1d8] sm:$0xff]
  %v109 = vld [vmem:[%s1 + $0x1e0] sm:$0xff]
  %v110 = vld [vmem:[%s1 + $0x1e8] sm:$0xff]
  %v111 = vld [vmem:[%s1 + $0x1f0] sm:$0xff]
  %v112 = vld [vmem:[%s1 + $0x1f8] sm:$0xff]
  %v113 = vld [vmem:[%s1 + $0x200] sm:$0xff]
  %v114 = vld [vmem:[%s1 + $0x208] sm:$0xff]
  %v115 = vld [vmem:[%s1 + $0x210] sm:$0xff]
  %v116 = vld [vmem:[%s1 + $0x218] sm:$0xff]
  %v117 = vld [vmem:[%s1 + $0x220] sm:$0xff]
  %v118 = vld [vmem:[%s1 + $0x228] sm:$0xff]
  %v119 = vld [vmem:[%s1 + $0x230] sm:$0xff]
  %v120 = vld [vmem:[%s1 + $0x238] sm:$0xff]
  %v121 = vld [vmem:[%s1 + $0x240] sm:$0xff]
  %v122 = vld [vmem:[%s1 + $0x248] sm:$0xff]
  %v123 = vld [vmem:[%s1 + $0x250] sm:$0xff]
  %v124 = vld [vmem:[%s1 + $0x258] sm:$0xff]
  %v125 = vld [vmem:[%s1 + $0x260] sm:$0xff]
  %v126 = vld [vmem:[%s1 + $0x268] sm:$0xff]
  %v127 = vld [vmem:[%s1 + $0x270] sm:$0xff]
  %v128 = vld [vmem:[%s1 + $0x278] sm:$0xff]
  %v129 = vld [vmem:[%s1 + $0x280] sm:$0xff]
  %v130 = vld [vmem:[%s1 + $0x288] sm:$0xff]
  %v131 = vld [vmem:[%s1 + $0x290] sm:$0xff]
  %v132 = vld [vmem:[%s1 + $0x298] sm:$0xff]
  %v133 = vld [vmem:[%s1 + $0x2a0] sm:$0xff]
  %v134 = vld [vmem:[%s1 + $0x2a8] sm:$0xff]
  %v135 = vld [vmem:[%s1 + $0x2b0] sm:$0xff]
  %v136 = vld [vmem:[%s1 + $0x2b8] sm:$0xff]
  %v137 = vld [vmem:[%s1 + $0x2c0] sm:$0xff]
  %v138 = vld [vmem:[%s1 + $0x2c8] sm:$0xff]
  %v139 = vld [vmem:[%s1 + $0x2d0] sm:$0xff]
  %v140 = vld [vmem:[%s1 + $0x2d8] sm:$0xff]
  %v141 = vld [vmem:[%s1 + $0x2e0] sm:$0xff]
  %v142 = vld [vmem:[%s1 + $0x2e8] sm:$0xff]
  %v143 = vld [vmem:[%s1 + $0x2f0] sm:$0xff]
  %v144 = vld [vmem:[%s1 + $0x2f8] sm:$0xff]
  %v145 = vld [vmem:[%s1 + $0x300] sm:$0xff]
  %v146 = vld [vmem:[%s1 + $0x308] sm:$0xff]
  %v147 = vld [vmem:[%s1 + $0x310] sm:$0xff]
  %v148 = vld [vmem:[%s1 + $0x318] sm:$0xff]
  %v149 = vld [vmem:[%s1 + $0x320] sm:$0xff]
  %v150 = vld [vmem:[%s1 + $0x328] sm:$0xff]
  %v151 = vld [vmem:[%s1 + $0x330] sm:$0xff]
  %v152 = vld [vmem:[%s1 + $0x338] sm:$0xff]
  %v153 = vld [vmem:[%s1 + $0x340] sm:$0xff]
  %v154 = vld [vmem:[%s1 + $0x348] sm:$0xff]
  %v155 = vld [vmem:[%s1 + $0x350] sm:$0xff]
  %v156 = vld [vmem:[%s1 + $0x358] sm:$0xff]
  %v157 = vld [vmem:[%s1 + $0x360] sm:$0xff]
  %v158 = vld [vmem:[%s1 + $0x368] sm:$0xff]
  %v159 = vld [vmem:[%s1 + $0x370] sm:$0xff]
  %v160 = vld [vmem:[%s1 + $0x378] sm:$0xff]
  %v161 = vld [vmem:[%s1 + $0x380] sm:$0xff]
  %v162 = vld [vmem:[%s1 + $0x388] sm:$0xff]
  %v163 = vld [vmem:[%s1 + $0x390] sm:$0xff]
  %v164 = vld [vmem:[%s1 + $0x398] sm:$0xff]
  %v165 = vld [vmem:[%s1 + $0x3a0] sm:$0xff]
  %v166 = vld [vmem:[%s1 + $0x3a8] sm:$0xff]
  %v167 = vld [vmem:[%s1 + $0x3b0] sm:$0xff]
  %v168 = vld [vmem:[%s1 + $0x3b8] sm:$0xff]
  %v169 = vld [vmem:[%s1 + $0x3c0] sm:$0xff]
  %v170 = vld [vmem:[%s1 + $0x3c8] sm:$0xff]
  %v171 = vld [vmem:[%s1 + $0x3d0] sm:$0xff]
  %v172 = vld [vmem:[%s1 + $0x3d8] sm:$0xff]
  %v173 = vld [vmem:[%s1 + $0x3e0] sm:$0xff]
  %v174 = vld [vmem:[%s1 + $0x3e8] sm:$0xff]
  %v175 = vld [vmem:[%s1 + $0x3f0] sm:$0xff]
  %v176 = vld [vmem:[%s1 + $0x3f8] sm:$0xff]
  %v177 = vld [vmem:[%s1 + $0x400] sm:$0xff]
  %v178 = vld [vmem:[%s1 + $0x408] sm:$0xff]
  %v179 = vld [vmem:[%s1 + $0x410] sm:$0xff]
  %v180 = vld [vmem:[%s1 + $0x418] sm:$0xff]
  %v181 = vld [vmem:[%s1 + $0x420] sm:$0xff]
  %v182 = vld [vmem:[%s1 + $0x428] sm:$0xff]
  %v183 = vld [vmem:[%s1 + $0x430] sm:$0xff]
  %v184 = vld [vmem:[%s1 + $0x438] sm:$0xff]
  %v185 = vld [vmem:[%s1 + $0x440] sm:$0xff]
  %v186 = vld [vmem:[%s1 + $0x448] sm:$0xff]
  %v187 = vld [vmem:[%s1 + $0x450] sm:$0xff]
  %v188 = vld [vmem:[%s1 + $0x458] sm:$0xff]
  %v189 = vld [vmem:[%s1 + $0x460] sm:$0xff]
  %v190 = vld [vmem:[%s1 + $0x468] sm:$0xff]
  %v191 = vld [vmem:[%s1 + $0x470] sm:$0xff]
  %v192 = vld [vmem:[%s1 + $0x478] sm:$0xff]
  %v193 = vld [vmem:[%s1 + $0x480] sm:$0xff]
  %v194 = vld [vmem:[%s1 + $0x488] sm:$0xff]
  %v195 = vld [vmem:[%s1 + $0x490] sm:$0xff]
  %v196 = vld [vmem:[%s1 + $0x498] sm:$0xff]
  %v197 = vld [vmem:[%s1 + $0x4a0] sm:$0xff]
  %v198 = vld [vmem:[%s1 + $0x4a8] sm:$0xff]
  %v199 = vld [vmem:[%s1 + $0x4b0] sm:$0xff]
  %v200 = vld [vmem:[%s1 + $0x4b8] sm:$0xff]
  %v201 = vld [vmem:[%s1 + $0x4c0] sm:$0xff]
  %v202 = vld [vmem:[%s1 + $0x4c8] sm:$0xff]
  %v203 = vld [vmem:[%s1 + $0x4d0] sm:$0xff]
  %v204 = vld [vmem:[%s1 + $0x4d8] sm:$0xff]
  %v205 = vld [vmem:[%s1 + $0x4e0] sm:$0xff]
  %v206 = vld [vmem:[%s1 + $0x4e8] sm:$0xff]
  %v207 = vld [vmem:[%s1 + $0x4f0] sm:$0xff]
  %v208 = vld [vmem:[%s1 + $0x4f8] sm:$0xff]
  %v209 = vld [vmem:[%s1 + $0x500] sm:$0xff]
  %v210 = vld [vmem:[%s1 + $0x508] sm:$0xff]
  %v211 = vld [vmem:[%s1 + $0x510] sm:$0xff]
  %v212 = vld [vmem:[%s1 + $0x518] sm:$0xff]
  %v213 = vld [vmem:[%s1 + $0x520] sm:$0xff]
  %v214 = vld [vmem:[%s1 + $0x528] sm:$0xff]
  %v215 = vld [vmem:[%s1 + $0x530] sm:$0xff]
  %v216 = vld [vmem:[%s1 + $0x538] sm:$0xff]
  %v217 = vld [vmem:[%s1 + $0x540] sm:$0xff]
  %v218 = vld [vmem:[%s1 + $0x548] sm:$0xff]
  %v219 = vld [vmem:[%s1 + $0x550] sm:$0xff]
  %v220 = vld [vmem:[%s1 + $0x558] sm:$0xff]
  %v221 = vld [vmem:[%s1 + $0x560] sm:$0xff]
  %v222 = vld [vmem:[%s1 + $0x568] sm:$0xff]
  %v223 = vld [vmem:[%s1 + $0x570] sm:$0xff]
  %v224 = vld [vmem:[%s1 + $0x578] sm:$0xff]
  %v225 = vld [vmem:[%s1 + $0x580] sm:$0xff]
  %v226 = vld [vmem:[%s1 + $0x588] sm:$0xff]
  %v227 = vld [vmem:[%s1 + $0x590] sm:$0xff]
  %v228 = vld [vmem:[%s1 + $0x598] sm:$0xff]
  %v229 = vld [vmem:[%s1 + $0x5a0] sm:$0xff]
  %v230 = vld [vmem:[%s1 + $0x5a8] sm:$0xff]
  %v231 = vld [vmem:[%s1 + $0x5b0] sm:$0xff]
  %v232 = vld [vmem:[%s1 + $0x5b8] sm:$0xff]
  %v233 = vld [vmem:[%s1 + $0x5c0] sm:$0xff]
  %v234 = vld [vmem:[%s1 + $0x5c8] sm:$0xff]
  %v235 = vld [vmem:[%s1 + $0x5d0] sm:$0xff]
  %v236 = vld [vmem:[%s1 + $0x5d8] sm:$0xff]
  %v237 = vld [vmem:[%s1 + $0x5e0] sm:$0xff]
  %v238 = vld [vmem:[%s1 + $0x5e8] sm:$0xff]
  %v239 = vld [vmem:[%s1 + $0x5f0] sm:$0xff]
  %v240 = vld [vmem:[%s1 + $0x5f8] sm:$0xff]
  %v241 = vld [vmem:[%s1 + $0x600] sm:$0xff]
  %v242 = vld [vmem:[%s1 + $0x608] sm:$0xff]
  %v243 = vld [vmem:[%s1 + $0x610] sm:$0xff]
  %v244 = vld [vmem:[%s1 + $0x618] sm:$0xff]
  %v245 = vld [vmem:[%s1 + $0x620] sm:$0xff]
  %v246 = vld [vmem:[%s1 + $0x628] sm:$0xff]
  %v247 = vld [vmem:[%s1 + $0x630] sm:$0xff]
  %v248 = vld [vmem:[%s1 + $0x638] sm:$0xff]
  %v249 = vld [vmem:[%s1 + $0x640] sm:$0xff]
  %v250 = vld [vmem:[%s1 + $0x648] sm:$0xff]
  %v251 = vld [vmem:[%s1 + $0x650] sm:$0xff]
  %v252 = vld [vmem:[%s1 + $0x658] sm:$0xff]
  %v253 = vld [vmem:[%s1 + $0x660] sm:$0xff]
  %v254 = vld [vmem:[%s1 + $0x668] sm:$0xff]
  %v255 = vld [vmem:[%s1 + $0x670] sm:$0xff]
  %v256 = vld [vmem:[%s1 + $0x678] sm:$0xff]
  %v257 = vld [vmem:[%s1 + $0x680] sm:$0xff]
  %v258 = vld [vmem:[%s1 + $0x688] sm:$0xff]
  %v259 = vld [vmem:[%s1 + $0x690] sm:$0xff]
  %v260 = vld [vmem:[%s1 + $0x698] sm:$0xff]
  %v261 = vld [vmem:[%s1 + $0x6a0] sm:$0xff]
  %v262 = vld [vmem:[%s1 + $0x6a8] sm:$0xff]
  %v263 = vld [vmem:[%s1 + $0x6b0] sm:$0xff]
  %v264 = vld [vmem:[%s1 + $0x6b8] sm:$0xff]
  %v265 = vld [vmem:[%s1 + $0x6c0] sm:$0xff]
  %v266 = vld [vmem:[%s1 + $0x6c8] sm:$0xff]
  %v267 = vld [vmem:[%s1 + $0x6d0] sm:$0xff]
  %v268 = vld [vmem:[%s1 + $0x6d8] sm:$0xff]
  %v269 = vld [vmem:[%s1 + $0x6e0] sm:$0xff]
  %v270 = vld [vmem:[%s1 + $0x6e8] sm:$0xff]
  %v271 = vld [vmem:[%s1 + $0x6f0] sm:$0xff]
  %v272 = vld [vmem:[%s1 + $0x6f8] sm:$0xff]
  %v273 = vld [vmem:[%s1 + $0x700] sm:$0xff]
  %v274 = vld [vmem:[%s1 + $0x708] sm:$0xff]
  %v275 = vld [vmem:[%s1 + $0x710] sm:$0xff]
  %v276 = vld [vmem:[%s1 + $0x718] sm:$0xff]
  %v277 = vld [vmem:[%s1 + $0x720] sm:$0xff]
  %v278 = vld [vmem:[%s1 + $0x728] sm:$0xff]
  %v279 = vld [vmem:[%s1 + $0x730] sm:$0xff]
  %v280 = vld [vmem:[%s1 + $0x738] sm:$0xff]
  %v281 = vld [vmem:[%s1 + $0x740] sm:$0xff]
  %v282 = vld [vmem:[%s1 + $0x748] sm:$0xff]
  %v283 = vld [vmem:[%s1 + $0x750] sm:$0xff]
  %v284 = vld [vmem:[%s1 + $0x758] sm:$0xff]
  %v285 = vld [vmem:[%s1 + $0x760] sm:$0xff]
  %v286 = vld [vmem:[%s1 + $0x768] sm:$0xff]
  %v287 = vld [vmem:[%s1 + $0x770] sm:$0xff]
  %v288 = vld [vmem:[%s1 + $0x778] sm:$0xff]
  %v289 = vld [vmem:[%s1 + $0x780] sm:$0xff]
  %v290 = vld [vmem:[%s1 + $0x788] sm:$0xff]
  %v291 = vld [vmem:[%s1 + $0x790] sm:$0xff]
  %v292 = vld [vmem:[%s1 + $0x798] sm:$0xff]
  %v293 = vld [vmem:[%s1 + $0x7a0] sm:$0xff]
  %v294 = vld [vmem:[%s1 + $0x7a8] sm:$0xff]
  %v295 = vld [vmem:[%s1 + $0x7b0] sm:$0xff]
  %v296 = vld [vmem:[%s1 + $0x7b8] sm:$0xff]
  %v297 = vld [vmem:[%s1 + $0x7c0] sm:$0xff]
  %v298 = vld [vmem:[%s1 + $0x7c8] sm:$0xff]
  %v299 = vld [vmem:[%s1 + $0x7d0] sm:$0xff]
  %v300 = vld [vmem:[%s1 + $0x7d8] sm:$0xff]
  %v301 = vld [vmem:[%s1 + $0x7e0] sm:$0xff]
  %v302 = vld [vmem:[%s1 + $0x7e8] sm:$0xff]
  %v303 = vld [vmem:[%s1 + $0x7f0] sm:$0xff]
  %v304 = vld [vmem:[%s1 + $0x7f8] sm:$0xff]
  %v305 = vld [vmem:[%s1 + $0x800] sm:$0xff]
  %v306 = vld [vmem:[%s1 + $0x808] sm:$0xff]
  %v307 = vld [vmem:[%s1 + $0x810] sm:$0xff]
  %v308 = vld [vmem:[%s1 + $0x818] sm:$0xff]
  %v309 = vld [vmem:[%s1 + $0x820] sm:$0xff]
  %v310 = vld [vmem:[%s1 + $0x828] sm:$0xff]
  %v311 = vld [vmem:[%s1 + $0x830] sm:$0xff]
  %v312 = vld [vmem:[%s1 + $0x838] sm:$0xff]
  %v313 = vld [vmem:[%s1 + $0x840] sm:$0xff]
  %v314 = vld [vmem:[%s1 + $0x848] sm:$0xff]
  %v315 = vld [vmem:[%s1 + $0x850] sm:$0xff]
  %v316 = vld [vmem:[%s1 + $0x858] sm:$0xff]
  %v317 = vld [vmem:[%s1 + $0x860] sm:$0xff]
  %v318 = vld [vmem:[%s1 + $0x868] sm:$0xff]
  %v319 = vld [vmem:[%s1 + $0x870] sm:$0xff]
  %v320 = vld [vmem:[%s1 + $0x878] sm:$0xff]
  %v321 = vld [vmem:[%s1 + $0x880] sm:$0xff]
  %v322 = vld [vmem:[%s1 + $0x888] sm:$0xff]
  %v323 = vld [vmem:[%s1 + $0x890] sm:$0xff]
  %v324 = vld [vmem:[%s1 + $0x898] sm:$0xff]
  %v325 = vld [vmem:[%s1 + $0x8a0] sm:$0xff]
  %v326 = vld [vmem:[%s1 + $0x8a8] sm:$0xff]
  %v327 = vld [vmem:[%s1 + $0x8b0] sm:$0xff]
  %v328 = vld [vmem:[%s1 + $0x8b8] sm:$0xff]
  %v329 = vld [vmem:[%s1 + $0x8c0] sm:$0xff]
  %v330 = vld [vmem:[%s1 + $0x8c8] sm:$0xff]
  %v331 = vld [vmem:[%s1 + $0x8d0] sm:$0xff]
  %v332 = vld [vmem:[%s1 + $0x8d8] sm:$0xff]
  %v333 = vld [vmem:[%s1 + $0x8e0] sm:$0xff]
  %v334 = vld [vmem:[%s1 + $0x8e8] sm:$0xff]
  %v335 = vld [vmem:[%s1 + $0x8f0] sm:$0xff]
  %v336 = vld [vmem:[%s1 + $0x8f8] sm:$0xff]
  %v337 = vld [vmem:[%s1 + $0x900] sm:$0xff]
  %v338 = vld [vmem:[%s1 + $0x908] sm:$0xff]
  %v339 = vld [vmem:[%s1 + $0x910] sm:$0xff]
  %v340 = vld [vmem:[%s1 + $0x918] sm:$0xff]
  %v341 = vld [vmem:[%s1 + $0x920] sm:$0xff]
  %v342 = vld [vmem:[%s1 + $0x928] sm:$0xff]
  %v343 = vld [vmem:[%s1 + $0x930] sm:$0xff]
  %v344 = vld [vmem:[%s1 + $0x938] sm:$0xff]
  %v345 = vld [vmem:[%s1 + $0x940] sm:$0xff]
  %v346 = vld [vmem:[%s1 + $0x948] sm:$0xff]
  %v347 = vld [vmem:[%s1 + $0x950] sm:$0xff]
  %v348 = vld [vmem:[%s1 + $0x958] sm:$0xff]
  %v349 = vld [vmem:[%s1 + $0x960] sm:$0xff]
  %v350 = vld [vmem:[%s1 + $0x968] sm:$0xff]
  %v351 = vld [vmem:[%s1 + $0x970] sm:$0xff]
  %v352 = vld [vmem:[%s1 + $0x978] sm:$0xff]
  %v353 = vld [vmem:[%s1 + $0x980] sm:$0xff]
  %v354 = vld [vmem:[%s1 + $0x988] sm:$0xff]
  %v355 = vld [vmem:[%s1 + $0x990] sm:$0xff]
  %v356 = vld [vmem:[%s1 + $0x998] sm:$0xff]
  %v357 = vld [vmem:[%s1 + $0x9a0] sm:$0xff]
  %v358 = vld [vmem:[%s1 + $0x9a8] sm:$0xff]
  %v359 = vld [vmem:[%s1 + $0x9b0] sm:$0xff]
  %v360 = vld [vmem:[%s1 + $0x9b8] sm:$0xff]
  %v361 = vld [vmem:[%s1 + $0x9c0] sm:$0xff]
  %v362 = vld [vmem:[%s1 + $0x9c8] sm:$0xff]
  %v363 = vld [vmem:[%s1 + $0x9d0] sm:$0xff]
  %v364 = vld [vmem:[%s1 + $0x9d8] sm:$0xff]
  %v365 = vld [vmem:[%s1 + $0x9e0] sm:$0xff]
  %v366 = vld [vmem:[%s1 + $0x9e8] sm:$0xff]
  %v367 = vld [vmem:[%s1 + $0x9f0] sm:$0xff]
  %v368 = vld [vmem:[%s1 + $0x9f8] sm:$0xff]
  %v369 = vld [vmem:[%s1 + $0xa00] sm:$0xff]
  %v370 = vld [vmem:[%s1 + $0xa08] sm:$0xff]
  %v371 = vld [vmem:[%s1 + $0xa10] sm:$0xff]
  %v372 = vld [vmem:[%s1 + $0xa18] sm:$0xff]
  %v373 = vld [vmem:[%s1 + $0xa20] sm:$0xff]
  %v374 = vld [vmem:[%s1 + $0xa28] sm:$0xff]
  %v375 = vld [vmem:[%s1 + $0xa30] sm:$0xff]
  %v376 = vld [vmem:[%s1 + $0xa38] sm:$0xff]
  %v377 = vld [vmem:[%s1 + $0xa40] sm:$0xff]
  %v378 = vld [vmem:[%s1 + $0xa48] sm:$0xff]
  %v379 = vld [vmem:[%s1 + $0xa50] sm:$0xff]
  %v380 = vld [vmem:[%s1 + $0xa58] sm:$0xff]
  %v381 = vld [vmem:[%s1 + $0xa60] sm:$0xff]
  %v382 = vld [vmem:[%s1 + $0xa68] sm:$0xff]
  %v383 = vld [vmem:[%s1 + $0xa70] sm:$0xff]
  %v384 = vld [vmem:[%s1 + $0xa78] sm:$0xff]
  %v385 = vld [vmem:[%s1 + $0xa80] sm:$0xff]
  %v386 = vld [vmem:[%s1 + $0xa88] sm:$0xff]
  %v387 = vld [vmem:[%s1 + $0xa90] sm:$0xff]
  %v388 = vld [vmem:[%s1 + $0xa98] sm:$0xff]
  %v389 = vld [vmem:[%s1 + $0xaa0] sm:$0xff]
  %v390 = vld [vmem:[%s1 + $0xaa8] sm:$0xff]
  %v391 = vld [vmem:[%s1 + $0xab0] sm:$0xff]
  %v392 = vld [vmem:[%s1 + $0xab8] sm:$0xff]
  %v393 = vld [vmem:[%s1 + $0xac0] sm:$0xff]
  %v394 = vld [vmem:[%s1 + $0xac8] sm:$0xff]
  %v395 = vld [vmem:[%s1 + $0xad0] sm:$0xff]
  %v396 = vld [vmem:[%s1 + $0xad8] sm:$0xff]
  %v397 = vld [vmem:[%s1 + $0xae0] sm:$0xff]
  %v398 = vld [vmem:[%s1 + $0xae8] sm:$0xff]
  %v399 = vld [vmem:[%s1 + $0xaf0] sm:$0xff]
  %v400 = vld [vmem:[%s1 + $0xaf8] sm:$0xff]
  %v401 = vld [vmem:[%s1 + $0xb00] sm:$0xff]
  %v402 = vld [vmem:[%s1 + $0xb08] sm:$0xff]
  %v403 = vld [vmem:[%s1 + $0xb10] sm:$0xff]
  %v404 = vld [vmem:[%s1 + $0xb18] sm:$0xff]
  %v405 = vld [vmem:[%s1 + $0xb20] sm:$0xff]
  %v406 = vld [vmem:[%s1 + $0xb28] sm:$0xff]
  %v407 = vld [vmem:[%s1 + $0xb30] sm:$0xff]
  %v408 = vld [vmem:[%s1 + $0xb38] sm:$0xff]
  %v409 = vld [vmem:[%s1 + $0xb40] sm:$0xff]
  %v410 = vld [vmem:[%s1 + $0xb48] sm:$0xff]
  %v411 = vld [vmem:[%s1 + $0xb50] sm:$0xff]
  %v412 = vld [vmem:[%s1 + $0xb58] sm:$0xff]
  %v413 = vld [vmem:[%s1 + $0xb60] sm:$0xff]
  %v414 = vld [vmem:[%s1 + $0xb68] sm:$0xff]
  %v415 = vld [vmem:[%s1 + $0xb70] sm:$0xff]
  %v416 = vld [vmem:[%s1 + $0xb78] sm:$0xff]
  %v417 = vld [vmem:[%s1 + $0xb80] sm:$0xff]
  %v418 = vld [vmem:[%s1 + $0xb88] sm:$0xff]
  %v419 = vld [vmem:[%s1 + $0xb90] sm:$0xff]
  %v420 = vld [vmem:[%s1 + $0xb98] sm:$0xff]
  %v421 = vld [vmem:[%s1 + $0xba0] sm:$0xff]
  %v422 = vld [vmem:[%s1 + $0xba8] sm:$0xff]
  %v423 = vld [vmem:[%s1 + $0xbb0] sm:$0xff]
  %v424 = vld [vmem:[%s1 + $0xbb8] sm:$0xff]
  %v425 = vld [vmem:[%s1 + $0xbc0] sm:$0xff]
  %v426 = vld [vmem:[%s1 + $0xbc8] sm:$0xff]
  %v427 = vld [vmem:[%s1 + $0xbd0] sm:$0xff]
  %v428 = vld [vmem:[%s1 + $0xbd8] sm:$0xff]
  %v429 = vld [vmem:[%s1 + $0xbe0] sm:$0xff]
  %v430 = vld [vmem:[%s1 + $0xbe8] sm:$0xff]
  %v431 = vld [vmem:[%s1 + $0xbf0] sm:$0xff]
  %v432 = vld [vmem:[%s1 + $0xbf8] sm:$0xff]
  %v433 = vld [vmem:[%s1 + $0xc00] sm:$0xff]
  %v434 = vld [vmem:[%s1 + $0xc08] sm:$0xff]
  %v435 = vld [vmem:[%s1 + $0xc10] sm:$0xff]
  %v436 = vld [vmem:[%s1 + $0xc18] sm:$0xff]
  %v437 = vld [vmem:[%s1 + $0xc20] sm:$0xff]
  %v438 = vld [vmem:[%s1 + $0xc28] sm:$0xff]
  %v439 = vld [vmem:[%s1 + $0xc30] sm:$0xff]
  %v440 = vld [vmem:[%s1 + $0xc38] sm:$0xff]
  %v441 = vld [vmem:[%s1 + $0xc40] sm:$0xff]
  %v442 = vld [vmem:[%s1 + $0xc48] sm:$0xff]
  %v443 = vld [vmem:[%s1 + $0xc50] sm:$0xff]
  %v444 = vld [vmem:[%s1 + $0xc58] sm:$0xff]
  %v445 = vld [vmem:[%s1 + $0xc60] sm:$0xff]
  %v446 = vld [vmem:[%s1 + $0xc68] sm:$0xff]
  %v447 = vld [vmem:[%s1 + $0xc70] sm:$0xff]
  %v448 = vld [vmem:[%s1 + $0xc78] sm:$0xff]
  %v449 = vld [vmem:[%s1 + $0xc80] sm:$0xff]
  %v450 = vld [vmem:[%s1 + $0xc88] sm:$0xff]
  %v451 = vld [vmem:[%s1 + $0xc90] sm:$0xff]
  %v452 = vld [vmem:[%s1 + $0xc98] sm:$0xff]
  %v453 = vld [vmem:[%s1 + $0xca0] sm:$0xff]
  %v454 = vld [vmem:[%s1 + $0xca8] sm:$0xff]
  %v455 = vld [vmem:[%s1 + $0xcb0] sm:$0xff]
  %v456 = vld [vmem:[%s1 + $0xcb8] sm:$0xff]
  %v457 = vld [vmem:[%s1 + $0xcc0] sm:$0xff]
  %v458 = vld [vmem:[%s1 + $0xcc8] sm:$0xff]
  %v459 = vld [vmem:[%s1 + $0xcd0] sm:$0xff]
  %v460 = vld [vmem:[%s1 + $0xcd8] sm:$0xff]
  %v461 = vld [vmem:[%s1 + $0xce0] sm:$0xff]
  %v462 = vld [vmem:[%s1 + $0xce8] sm:$0xff]
  %v463 = vld [vmem:[%s1 + $0xcf0] sm:$0xff]
  %v464 = vld [vmem:[%s1 + $0xcf8] sm:$0xff]
  %v465 = vld [vmem:[%s1 + $0xd00] sm:$0xff]
  %v466 = vld [vmem:[%s1 + $0xd08] sm:$0xff]
  %v467 = vld [vmem:[%s1 + $0xd10] sm:$0xff]
  %v468 = vld [vmem:[%s1 + $0xd18] sm:$0xff]
  %v469 = vld [vmem:[%s1 + $0xd20] sm:$0xff]
  %v470 = vld [vmem:[%s1 + $0xd28] sm:$0xff]
  %v471 = vld [vmem:[%s1 + $0xd30] sm:$0xff]
  %v472 = vld [vmem:[%s1 + $0xd38] sm:$0xff]
  %v473 = vld [vmem:[%s1 + $0xd40] sm:$0xff]
  %v474 = vld [vmem:[%s1 + $0xd48] sm:$0xff]
  %v475 = vld [vmem:[%s1 + $0xd50] sm:$0xff]
  %v476 = vld [vmem:[%s1 + $0xd58] sm:$0xff]
  %v477 = vld [vmem:[%s1 + $0xd60] sm:$0xff]
  %v478 = vld [vmem:[%s1 + $0xd68] sm:$0xff]
  %v479 = vld [vmem:[%s1 + $0xd70] sm:$0xff]
  %v480 = vld [vmem:[%s1 + $0xd78] sm:$0xff]
  %v481 = vld [vmem:[%s1 + $0xd80] sm:$0xff]
  %v482 = vld [vmem:[%s1 + $0xd88] sm:$0xff]
  %v483 = vld [vmem:[%s1 + $0xd90] sm:$0xff]
  %v484 = vld [vmem:[%s1 + $0xd98] sm:$0xff]
  %v485 = vld [vmem:[%s1 + $0xda0] sm:$0xff]
  %v486 = vld [vmem:[%s1 + $0xda8] sm:$0xff]
  %v487 = vld [vmem:[%s1 + $0xdb0] sm:$0xff]
  %v488 = vld [vmem:[%s1 + $0xdb8] sm:$0xff]
  %v489 = vld [vmem:[%s1 + $0xdc0] sm:$0xff]
  %v490 = vld [vmem:[%s1 + $0xdc8] sm:$0xff]
  %v491 = vld [vmem:[%s1 + $0xdd0] sm:$0xff]
  %v492 = vld [vmem:[%s1 + $0xdd8] sm:$0xff]
  %v493 = vld [vmem:[%s1 + $0xde0] sm:$0xff]
  %v494 = vld [vmem:[%s1 + $0xde8] sm:$0xff]
  %v495 = vld [vmem:[%s1 + $0xdf0] sm:$0xff]
  %v496 = vld [vmem:[%s1 + $0xdf8] sm:$0xff]
  %v497 = vld [vmem:[%s1 + $0xe00] sm:$0xff]
  %v498 = vld [vmem:[%s1 + $0xe08] sm:$0xff]
  %v499 = vld [vmem:[%s1 + $0xe10] sm:$0xff]
  %v500 = vld [vmem:[%s1 + $0xe18] sm:$0xff]
  %v501 = vld [vmem:[%s1 + $0xe20] sm:$0xff]
  %v502 = vld [vmem:[%s1 + $0xe28] sm:$0xff]
  %v503 = vld [vmem:[%s1 + $0xe30] sm:$0xff]
  %v504 = vld [vmem:[%s1 + $0xe38] sm:$0xff]
  %v505 = vld [vmem:[%s1 + $0xe40] sm:$0xff]
  %v506 = vld [vmem:[%s1 + $0xe48] sm:$0xff]
  %v507 = vld [vmem:[%s1 + $0xe50] sm:$0xff]
  %v508 = vld [vmem:[%s1 + $0xe58] sm:$0xff]
  %v509 = vld [vmem:[%s1 + $0xe60] sm:$0xff]
  %v510 = vld [vmem:[%s1 + $0xe68] sm:$0xff]
  %v511 = vld [vmem:[%s1 + $0xe70] sm:$0xff]
  %v512 = vld [vmem:[%s1 + $0xe78] sm:$0xff]
  %v513 = vld [vmem:[%s1 + $0xe80] sm:$0xff]
  %v514 = vld [vmem:[%s1 + $0xe88] sm:$0xff]
  %v515 = vld [vmem:[%s1 + $0xe90] sm:$0xff]
  %v516 = vld [vmem:[%s1 + $0xe98] sm:$0xff]
  %v517 = vld [vmem:[%s1 + $0xea0] sm:$0xff]
  %v518 = vld [vmem:[%s1 + $0xea8] sm:$0xff]
  %v519 = vld [vmem:[%s1 + $0xeb0] sm:$0xff]
  %v520 = vld [vmem:[%s1 + $0xeb8] sm:$0xff]
  %v521 = vld [vmem:[%s1 + $0xec0] sm:$0xff]
  %v522 = vld [vmem:[%s1 + $0xec8] sm:$0xff]
  %v523 = vld [vmem:[%s1 + $0xed0] sm:$0xff]
  %v524 = vld [vmem:[%s1 + $0xed8] sm:$0xff]
  %v525 = vld [vmem:[%s1 + $0xee0] sm:$0xff]
  %v526 = vld [vmem:[%s1 + $0xee8] sm:$0xff]
  %v527 = vld [vmem:[%s1 + $0xef0] sm:$0xff]
  %v528 = vld [vmem:[%s1 + $0xef8] sm:$0xff]
  %v529 = vld [vmem:[%s1 + $0xf00] sm:$0xff]
  %v530 = vld [vmem:[%s1 + $0xf08] sm:$0xff]
  %v531 = vld [vmem:[%s1 + $0xf10] sm:$0xff]
  %v532 = vld [vmem:[%s1 + $0xf18] sm:$0xff]
  %v533 = vld [vmem:[%s1 + $0xf20] sm:$0xff]
  %v534 = vld [vmem:[%s1 + $0xf28] sm:$0xff]
  %v535 = vld [vmem:[%s1 + $0xf30] sm:$0xff]
  %v536 = vld [vmem:[%s1 + $0xf38] sm:$0xff]
  %v537 = vld [vmem:[%s1 + $0xf40] sm:$0xff]
  %v538 = vld [vmem:[%s1 + $0xf48] sm:$0xff]
  %v539 = vld [vmem:[%s1 + $0xf50] sm:$0xff]
  %v540 = vld [vmem:[%s1 + $0xf58] sm:$0xff]
  %v541 = vld [vmem:[%s1 + $0xf60] sm:$0xff]
  %v542 = vld [vmem:[%s1 + $0xf68] sm:$0xff]
  %v543 = vld [vmem:[%s1 + $0xf70] sm:$0xff]
  %v544 = vld [vmem:[%s1 + $0xf78] sm:$0xff]
  %v545 = vld [vmem:[%s1 + $0xf80] sm:$0xff]
  %v546 = vld [vmem:[%s1 + $0xf88] sm:$0xff]
  %v547 = vld [vmem:[%s1 + $0xf90] sm:$0xff]
  %v548 = vld [vmem:[%s1 + $0xf98] sm:$0xff]
  %v549 = vld [vmem:[%s1 + $0xfa0] sm:$0xff]
  %v550 = vld [vmem:[%s1 + $0xfa8] sm:$0xff]
  %v551 = vld [vmem:[%s1 + $0xfb0] sm:$0xff]
  %v552 = vld [vmem:[%s1 + $0xfb8] sm:$0xff]
  %v553 = vld [vmem:[%s1 + $0xfc0] sm:$0xff]
  %v554 = vld [vmem:[%s1 + $0xfc8] sm:$0xff]
  %v555 = vld [vmem:[%s1 + $0xfd0] sm:$0xff]
  %v556 = vld [vmem:[%s1 + $0xfd8] sm:$0xff]
  %v557 = vld [vmem:[%s1 + $0xfe0] sm:$0xff]
  %v558 = vld [vmem:[%s1 + $0xfe8] sm:$0xff]
  %v559 = vld [vmem:[%s1 + $0xff0] sm:$0xff]
  %v560 = vld [vmem:[%s1 + $0xff8] sm:$0xff]
  %v561 = vld [vmem:[%s1 + $0x1000] sm:$0xff]
  %v562 = vld [vmem:[%s1 + $0x1008] sm:$0xff]
  %v563 = vld [vmem:[%s1 + $0x1010] sm:$0xff]
  %v564 = vld [vmem:[%s1 + $0x1018] sm:$0xff]
  %v565 = vld [vmem:[%s1 + $0x1020] sm:$0xff]
  %v566 = vld [vmem:[%s1 + $0x1028] sm:$0xff]
  %v567 = vld [vmem:[%s1 + $0x1030] sm:$0xff]
  %v568 = vld [vmem:[%s1 + $0x1038] sm:$0xff]
  %v569 = vld [vmem:[%s1 + $0x1040] sm:$0xff]
  %v570 = vld [vmem:[%s1 + $0x1048] sm:$0xff]
  %v571 = vld [vmem:[%s1 + $0x1050] sm:$0xff]
  %v572 = vld [vmem:[%s1 + $0x1058] sm:$0xff]
  %v573 = vld [vmem:[%s1 + $0x1060] sm:$0xff]
  %v574 = vld [vmem:[%s1 + $0x1068] sm:$0xff]
  %v575 = vld [vmem:[%s1 + $0x1070] sm:$0xff]
  %v576 = vld [vmem:[%s1 + $0x1078] sm:$0xff]
  %v577 = vld [vmem:[%s1 + $0x1080] sm:$0xff]
  %v578 = vld [vmem:[%s1 + $0x1088] sm:$0xff]
  %v579 = vld [vmem:[%s1 + $0x1090] sm:$0xff]
  %v580 = vld [vmem:[%s1 + $0x1098] sm:$0xff]
  %v581 = vld [vmem:[%s1 + $0x10a0] sm:$0xff]
  %v582 = vld [vmem:[%s1 + $0x10a8] sm:$0xff]
  %v583 = vld [vmem:[%s1 + $0x10b0] sm:$0xff]
  %v584 = vld [vmem:[%s1 + $0x10b8] sm:$0xff]
  %v585 = vld [vmem:[%s1 + $0x10c0] sm:$0xff]
  %v586 = vld [vmem:[%s1 + $0x10c8] sm:$0xff]
  %v587 = vld [vmem:[%s1 + $0x10d0] sm:$0xff]
  %v588 = vld [vmem:[%s1 + $0x10d8] sm:$0xff]
  %v589 = vld [vmem:[%s1 + $0x10e0] sm:$0xff]
  %v590 = vld [vmem:[%s1 + $0x10e8] sm:$0xff]
  %v591 = vld [vmem:[%s1 + $0x10f0] sm:$0xff]
  %v592 = vld [vmem:[%s1 + $0x10f8] sm:$0xff]
  %v593 = vld [vmem:[%s1 + $0x1100] sm:$0xff]
  %v594 = vld [vmem:[%s1 + $0x1108] sm:$0xff]
  %v595 = vld [vmem:[%s1 + $0x1110] sm:$0xff]
  %v596 = vld [vmem:[%s1 + $0x1118] sm:$0xff]
  %v597 = vld [vmem:[%s1 + $0x1120] sm:$0xff]
  %v598 = vld [vmem:[%s1 + $0x1128] sm:$0xff]
  %v599 = vld [vmem:[%s1 + $0x1130] sm:$0xff]
  %v600 = vld [vmem:[%s1 + $0x1138] sm:$0xff]
  %v601 = vld [vmem:[%s1 + $0x1140] sm:$0xff]
  %v602 = vld [vmem:[%s1 + $0x1148] sm:$0xff]
  %v603 = vld [vmem:[%s1 + $0x1150] sm:$0xff]
  %v604 = vld [vmem:[%s1 + $0x1158] sm:$0xff]
  %v605 = vld [vmem:[%s1 + $0x1160] sm:$0xff]
  %v606 = vld [vmem:[%s1 + $0x1168] sm:$0xff]
  %v607 = vld [vmem:[%s1 + $0x1170] sm:$0xff]
  %v608 = vld [vmem:[%s1 + $0x1178] sm:$0xff]
  %v609 = vld [vmem:[%s1 + $0x1180] sm:$0xff]
  %v610 = vld [vmem:[%s1 + $0x1188] sm:$0xff]
  %v611 = vld [vmem:[%s1 + $0x1190] sm:$0xff]
  %v612 = vld [vmem:[%s1 + $0x1198] sm:$0xff]
  %v613 = vld [vmem:[%s1 + $0x11a0] sm:$0xff]
  %v614 = vld [vmem:[%s1 + $0x11a8] sm:$0xff]
  %v615 = vld [vmem:[%s1 + $0x11b0] sm:$0xff]
  %v616 = vld [vmem:[%s1 + $0x11b8] sm:$0xff]
  %v617 = vld [vmem:[%s1 + $0x11c0] sm:$0xff]
  %v618 = vld [vmem:[%s1 + $0x11c8] sm:$0xff]
  %v619 = vld [vmem:[%s1 + $0x11d0] sm:$0xff]
  %v620 = vld [vmem:[%s1 + $0x11d8] sm:$0xff]
  %v621 = vld [vmem:[%s1 + $0x11e0] sm:$0xff]
  %v622 = vld [vmem:[%s1 + $0x11e8] sm:$0xff]
  %v623 = vld [vmem:[%s1 + $0x11f0] sm:$0xff]
  %v624 = vld [vmem:[%s1 + $0x11f8] sm:$0xff]
  %v625 = vld [vmem:[%s1 + $0x1200] sm:$0xff]
  %v626 = vld [vmem:[%s1 + $0x1208] sm:$0xff]
  %v627 = vld [vmem:[%s1 + $0x1210] sm:$0xff]
  %v628 = vld [vmem:[%s1 + $0x1218] sm:$0xff]
  %v629 = vld [vmem:[%s1 + $0x1220] sm:$0xff]
  %v630 = vld [vmem:[%s1 + $0x1228] sm:$0xff]
  %v631 = vld [vmem:[%s1 + $0x1230] sm:$0xff]
  %v632 = vld [vmem:[%s1 + $0x1238] sm:$0xff]
  %v633 = vld [vmem:[%s1 + $0x1240] sm:$0xff]
  %v634 = vld [vmem:[%s1 + $0x1248] sm:$0xff]
  %v635 = vld [vmem:[%s1 + $0x1250] sm:$0xff]
  %v636 = vld [vmem:[%s1 + $0x1258] sm:$0xff]
  %v637 = vld [vmem:[%s1 + $0x1260] sm:$0xff]
  %v638 = vld [vmem:[%s1 + $0x1268] sm:$0xff]
  %v639 = vld [vmem:[%s1 + $0x1270] sm:$0xff]
  %v640 = vld [vmem:[%s1 + $0x1278] sm:$0xff]
  %v641 = vld [vmem:[%s1 + $0x1280] sm:$0xff]
  %v642 = vld [vmem:[%s1 + $0x1288] sm:$0xff]
  %v643 = vld [vmem:[%s1 + $0x1290] sm:$0xff]
  %v644 = vld [vmem:[%s1 + $0x1298] sm:$0xff]
  %v645 = vld [vmem:[%s1 + $0x12a0] sm:$0xff]
  %v646 = vld [vmem:[%s1 + $0x12a8] sm:$0xff]
  %v647 = vld [vmem:[%s1 + $0x12b0] sm:$0xff]
  %v648 = vld [vmem:[%s1 + $0x12b8] sm:$0xff]
  %v649 = vld [vmem:[%s1 + $0x12c0] sm:$0xff]
  %v650 = vld [vmem:[%s1 + $0x12c8] sm:$0xff]
  %v651 = vld [vmem:[%s1 + $0x12d0] sm:$0xff]
  %v652 = vld [vmem:[%s1 + $0x12d8] sm:$0xff]
  %v653 = vld [vmem:[%s1 + $0x12e0] sm:$0xff]
  %v654 = vld [vmem:[%s1 + $0x12e8] sm:$0xff]
  %v655 = vld [vmem:[%s1 + $0x12f0] sm:$0xff]
  %v656 = vld [vmem:[%s1 + $0x12f8] sm:$0xff]
  %v657 = vld [vmem:[%s1 + $0x1300] sm:$0xff]
  %v658 = vld [vmem:[%s1 + $0x1308] sm:$0xff]
  %v659 = vld [vmem:[%s1 + $0x1310] sm:$0xff]
  %v660 = vld [vmem:[%s1 + $0x1318] sm:$0xff]
  %v661 = vld [vmem:[%s1 + $0x1320] sm:$0xff]
  %v662 = vld [vmem:[%s1 + $0x1328] sm:$0xff]
  %v663 = vld [vmem:[%s1 + $0x1330] sm:$0xff]
  %v664 = vld [vmem:[%s1 + $0x1338] sm:$0xff]
  %v665 = vld [vmem:[%s1 + $0x1340] sm:$0xff]
  %v666 = vld [vmem:[%s1 + $0x1348] sm:$0xff]
  %v667 = vld [vmem:[%s1 + $0x1350] sm:$0xff]
  %v668 = vld [vmem:[%s1 + $0x1358] sm:$0xff]
  %v669 = vld [vmem:[%s1 + $0x1360] sm:$0xff]
  %v670 = vld [vmem:[%s1 + $0x1368] sm:$0xff]
  %v671 = vld [vmem:[%s1 + $0x1370] sm:$0xff]
  %v672 = vld [vmem:[%s1 + $0x1378] sm:$0xff]
  %v673 = vld [vmem:[%s1 + $0x1380] sm:$0xff]
  %v674 = vld [vmem:[%s1 + $0x1388] sm:$0xff]
  %v675 = vld [vmem:[%s1 + $0x1390] sm:$0xff]
  %v676 = vld [vmem:[%s1 + $0x1398] sm:$0xff]
  %v677 = vld [vmem:[%s1 + $0x13a0] sm:$0xff]
  %v678 = vld [vmem:[%s1 + $0x13a8] sm:$0xff]
  %v679 = vld [vmem:[%s1 + $0x13b0] sm:$0xff]
  %v680 = vld [vmem:[%s1 + $0x13b8] sm:$0xff]
  %v681 = vld [vmem:[%s1 + $0x13c0] sm:$0xff]
  %v682 = vld [vmem:[%s1 + $0x13c8] sm:$0xff]
  %v683 = vld [vmem:[%s1 + $0x13d0] sm:$0xff]
  %v684 = vld [vmem:[%s1 + $0x13d8] sm:$0xff]
  %v685 = vld [vmem:[%s1 + $0x13e0] sm:$0xff]
  %v686 = vld [vmem:[%s1 + $0x13e8] sm:$0xff]
  %v687 = vld [vmem:[%s1 + $0x13f0] sm:$0xff]
  %v688 = vld [vmem:[%s1 + $0x13f8] sm:$0xff]
  %v689 = vld [vmem:[%s1 + $0x1400] sm:$0xff]
  %v690 = vld [vmem:[%s1 + $0x1408] sm:$0xff]
  %v691 = vld [vmem:[%s1 + $0x1410] sm:$0xff]
  %v692 = vld [vmem:[%s1 + $0x1418] sm:$0xff]
  %v693 = vld [vmem:[%s1 + $0x1420] sm:$0xff]
  %v694 = vld [vmem:[%s1 + $0x1428] sm:$0xff]
  %v695 = vld [vmem:[%s1 + $0x1430] sm:$0xff]
  %v696 = vld [vmem:[%s1 + $0x1438] sm:$0xff]
  %v697 = vld [vmem:[%s1 + $0x1440] sm:$0xff]
  %v698 = vld [vmem:[%s1 + $0x1448] sm:$0xff]
  %v699 = vld [vmem:[%s1 + $0x1450] sm:$0xff]
  %v700 = vld [vmem:[%s1 + $0x1458] sm:$0xff]
  %v701 = vld [vmem:[%s1 + $0x1460] sm:$0xff]
  %v702 = vld [vmem:[%s1 + $0x1468] sm:$0xff]
  %v703 = vld [vmem:[%s1 + $0x1470] sm:$0xff]
  %v704 = vld [vmem:[%s1 + $0x1478] sm:$0xff]
  %v705 = vld [vmem:[%s1 + $0x1480] sm:$0xff]
  %v706 = vld [vmem:[%s1 + $0x1488] sm:$0xff]
  %v707 = vld [vmem:[%s1 + $0x1490] sm:$0xff]
  %v708 = vld [vmem:[%s1 + $0x1498] sm:$0xff]
  %v709 = vld [vmem:[%s1 + $0x14a0] sm:$0xff]
  %v710 = vld [vmem:[%s1 + $0x14a8] sm:$0xff]
  %v711 = vld [vmem:[%s1 + $0x14b0] sm:$0xff]
  %v712 = vld [vmem:[%s1 + $0x14b8] sm:$0xff]
  %v713 = vld [vmem:[%s1 + $0x14c0] sm:$0xff]
  %v714 = vld [vmem:[%s1 + $0x14c8] sm:$0xff]
  %v715 = vld [vmem:[%s1 + $0x14d0] sm:$0xff]
  %v716 = vld [vmem:[%s1 + $0x14d8] sm:$0xff]
  %v717 = vld [vmem:[%s1 + $0x14e0] sm:$0xff]
  %v718 = vld [vmem:[%s1 + $0x14e8] sm:$0xff]
  %v719 = vld [vmem:[%s1 + $0x14f0] sm:$0xff]
  %v720 = vld [vmem:[%s1 + $0x14f8] sm:$0xff]
  %v721 = vld [vmem:[%s1 + $0x1500] sm:$0xff]
  %v722 = vld [vmem:[%s1 + $0x1508] sm:$0xff]
  %v723 = vld [vmem:[%s1 + $0x1510] sm:$0xff]
  %v724 = vld [vmem:[%s1 + $0x1518] sm:$0xff]
  %v725 = vld [vmem:[%s1 + $0x1520] sm:$0xff]
  %v726 = vld [vmem:[%s1 + $0x1528] sm:$0xff]
  %v727 = vld [vmem:[%s1 + $0x1530] sm:$0xff]
  %v728 = vld [vmem:[%s1 + $0x1538] sm:$0xff]
  %v729 = vld [vmem:[%s1 + $0x1540] sm:$0xff]
  %v730 = vld [vmem:[%s1 + $0x1548] sm:$0xff]
  %v731 = vld [vmem:[%s1 + $0x1550] sm:$0xff]
  %v732 = vld [vmem:[%s1 + $0x1558] sm:$0xff]
  %v733 = vld [vmem:[%s1 + $0x1560] sm:$0xff]
  %v734 = vld [vmem:[%s1 + $0x1568] sm:$0xff]
  %v735 = vld [vmem:[%s1 + $0x1570] sm:$0xff]
  %v736 = vld [vmem:[%s1 + $0x1578] sm:$0xff]
  %v737 = vld [vmem:[%s1 + $0x1580] sm:$0xff]
  %v738 = vld [vmem:[%s1 + $0x1588] sm:$0xff]
  %v739 = vld [vmem:[%s1 + $0x1590] sm:$0xff]
  %v740 = vld [vmem:[%s1 + $0x1598] sm:$0xff]
  %v741 = vld [vmem:[%s1 + $0x15a0] sm:$0xff]
  %v742 = vld [vmem:[%s1 + $0x15a8] sm:$0xff]
  %v743 = vld [vmem:[%s1 + $0x15b0] sm:$0xff]
  %v744 = vld [vmem:[%s1 + $0x15b8] sm:$0xff]
  %v745 = vld [vmem:[%s1 + $0x15c0] sm:$0xff]
  %v746 = vld [vmem:[%s1 + $0x15c8] sm:$0xff]
  %v747 = vld [vmem:[%s1 + $0x15d0] sm:$0xff]
  %v748 = vld [vmem:[%s1 + $0x15d8] sm:$0xff]
  %v749 = vld [vmem:[%s1 + $0x15e0] sm:$0xff]
  %v750 = vld [vmem:[%s1 + $0x15e8] sm:$0xff]
  %v751 = vld [vmem:[%s1 + $0x15f0] sm:$0xff]
  %v752 = vld [vmem:[%s1 + $0x15f8] sm:$0xff]
  %v753 = vld [vmem:[%s1 + $0x1600] sm:$0xff]
  %v754 = vld [vmem:[%s1 + $0x1608] sm:$0xff]
  %v755 = vld [vmem:[%s1 + $0x1610] sm:$0xff]
  %v756 = vld [vmem:[%s1 + $0x1618] sm:$0xff]
  %v757 = vld [vmem:[%s1 + $0x1620] sm:$0xff]
  %v758 = vld [vmem:[%s1 + $0x1628] sm:$0xff]
  %v759 = vld [vmem:[%s1 + $0x1630] sm:$0xff]
  %v760 = vld [vmem:[%s1 + $0x1638] sm:$0xff]
  %v761 = vld [vmem:[%s1 + $0x1640] sm:$0xff]
  %v762 = vld [vmem:[%s1 + $0x1648] sm:$0xff]
  %v763 = vld [vmem:[%s1 + $0x1650] sm:$0xff]
  %v764 = vld [vmem:[%s1 + $0x1658] sm:$0xff]
  %v765 = vld [vmem:[%s1 + $0x1660] sm:$0xff]
  %v766 = vld [vmem:[%s1 + $0x1668] sm:$0xff]
  %v767 = vld [vmem:[%s1 + $0x1670] sm:$0xff]
  %v768 = vld [vmem:[%s1 + $0x1678] sm:$0xff]
  %v769 = vld [vmem:[%s1 + $0x1680] sm:$0xff]
  %v770 = vld [vmem:[%s1 + $0x1688] sm:$0xff]
  %v771 = vld [vmem:[%s1 + $0x1690] sm:$0xff]
  %v772 = vld [vmem:[%s1 + $0x1698] sm:$0xff]
  %v773 = vld [vmem:[%s1 + $0x16a0] sm:$0xff]
  %v774 = vld [vmem:[%s1 + $0x16a8] sm:$0xff]
  %v775 = vld [vmem:[%s1 + $0x16b0] sm:$0xff]
  %v776 = vld [vmem:[%s1 + $0x16b8] sm:$0xff]
  %v777 = vld [vmem:[%s1 + $0x16c0] sm:$0xff]
  %v778 = vld [vmem:[%s1 + $0x16c8] sm:$0xff]
  %v779 = vld [vmem:[%s1 + $0x16d0] sm:$0xff]
  %v780 = vld [vmem:[%s1 + $0x16d8] sm:$0xff]
  %v781 = vld [vmem:[%s1 + $0x16e0] sm:$0xff]
  %v782 = vld [vmem:[%s1 + $0x16e8] sm:$0xff]
  %v783 = vld [vmem:[%s1 + $0x16f0] sm:$0xff]
  %v784 = vld [vmem:[%s1 + $0x16f8] sm:$0xff]
  %v785 = vld [vmem:[%s1 + $0x1700] sm:$0xff]
  %v786 = vld [vmem:[%s1 + $0x1708] sm:$0xff]
  %v787 = vld [vmem:[%s1 + $0x1710] sm:$0xff]
  %v788 = vld [vmem:[%s1 + $0x1718] sm:$0xff]
  %v789 = vld [vmem:[%s1 + $0x1720] sm:$0xff]
  %v790 = vld [vmem:[%s1 + $0x1728] sm:$0xff]
  %v791 = vld [vmem:[%s1 + $0x1730] sm:$0xff]
  %v792 = vld [vmem:[%s1 + $0x1738] sm:$0xff]
  %v793 = vld [vmem:[%s1 + $0x1740] sm:$0xff]
  %v794 = vld [vmem:[%s1 + $0x1748] sm:$0xff]
  %v795 = vld [vmem:[%s1 + $0x1750] sm:$0xff]
  %v796 = vld [vmem:[%s1 + $0x1758] sm:$0xff]
  %v797 = vld [vmem:[%s1 + $0x1760] sm:$0xff]
  %v798 = vld [vmem:[%s1 + $0x1768] sm:$0xff]
  %v799 = vld [vmem:[%s1 + $0x1770] sm:$0xff]
  %v800 = vld [vmem:[%s1 + $0x1778] sm:$0xff]
  %v801 = vld [vmem:[%s1 + $0x1780] sm:$0xff]
  %v802 = vld [vmem:[%s1 + $0x1788] sm:$0xff]
  %v803 = vld [vmem:[%s1 + $0x1790] sm:$0xff]
  %v804 = vld [vmem:[%s1 + $0x1798] sm:$0xff]
  %v805 = vld [vmem:[%s1 + $0x17a0] sm:$0xff]
  %v806 = vld [vmem:[%s1 + $0x17a8] sm:$0xff]
  %v807 = vld [vmem:[%s1 + $0x17b0] sm:$0xff]
  %v808 = vld [vmem:[%s1 + $0x17b8] sm:$0xff]
  %v809 = vld [vmem:[%s1 + $0x17c0] sm:$0xff]
  %v810 = vld [vmem:[%s1 + $0x17c8] sm:$0xff]
  %v811 = vld [vmem:[%s1 + $0x17d0] sm:$0xff]
  %v812 = vld [vmem:[%s1 + $0x17d8] sm:$0xff]
  %v813 = vld [vmem:[%s1 + $0x17e0] sm:$0xff]
  %v814 = vld [vmem:[%s1 + $0x17e8] sm:$0xff]
  %v815 = vld [vmem:[%s1 + $0x17f0] sm:$0xff]
  %v816 = vld [vmem:[%s1 + $0x17f8] sm:$0xff]
  %v817 = vld [vmem:[%s1 + $0x1800] sm:$0xff]
  %v818 = vld [vmem:[%s1 + $0x1808] sm:$0xff]
  %v819 = vld [vmem:[%s1 + $0x1810] sm:$0xff]
  %v820 = vld [vmem:[%s1 + $0x1818] sm:$0xff]
  %v821 = vld [vmem:[%s1 + $0x1820] sm:$0xff]
  %v822 = vld [vmem:[%s1 + $0x1828] sm:$0xff]
  %v823 = vld [vmem:[%s1 + $0x1830] sm:$0xff]
  %v824 = vld [vmem:[%s1 + $0x1838] sm:$0xff]
  %v825 = vld [vmem:[%s1 + $0x1840] sm:$0xff]
  %v826 = vld [vmem:[%s1 + $0x1848] sm:$0xff]
  %v827 = vld [vmem:[%s1 + $0x1850] sm:$0xff]
  %v828 = vld [vmem:[%s1 + $0x1858] sm:$0xff]
  %v829 = vld [vmem:[%s1 + $0x1860] sm:$0xff]
  %v830 = vld [vmem:[%s1 + $0x1868] sm:$0xff]
  %v831 = vld [vmem:[%s1 + $0x1870] sm:$0xff]
  %v832 = vld [vmem:[%s1 + $0x1878] sm:$0xff]
  %v833 = vld [vmem:[%s2] sm:$0xf]
  %v835 = vperm.slane %v833, 0
  %v836 = vperm.slane %v833, 1
  %v837 = vperm.slane %v833, 2
  %v838 = vperm.slane %v833, 3
  %v869 = vunpack.c.l.b16 %v23
  %v870 = vunpack.c.h.b16 %v23
  %v871 = vunpack.c.l.b16 %v24
  %v872 = vunpack.c.h.b16 %v24
  %v873 = vunpack.c.l.b16 %v25
  %v874 = vunpack.c.h.b16 %v25
  %v875 = vunpack.c.l.b16 %v26
  %v876 = vunpack.c.h.b16 %v26
  %v877 = vunpack.c.l.b16 %v27
  %v878 = vunpack.c.h.b16 %v27
  %v879 = vunpack.c.l.b16 %v28
  %v880 = vunpack.c.h.b16 %v28
  %v881 = vunpack.c.l.b16 %v29
  %v882 = vunpack.c.h.b16 %v29
  %v883 = vunpack.c.l.b16 %v30
  %v884 = vunpack.c.h.b16 %v30
  %v885 = vunpack.c.l.b16 %v31
  %v886 = vunpack.c.h.b16 %v31
  %v887 = vunpack.c.l.b16 %v32
  %v888 = vunpack.c.h.b16 %v32
  %v889 = vunpack.c.l.b16 %v33
  %v890 = vunpack.c.h.b16 %v33
  %v891 = vunpack.c.l.b16 %v34
  %v892 = vunpack.c.h.b16 %v34
  %v893 = vunpack.c.l.b16 %v35
  %v894 = vunpack.c.l.b16 %v36
  %v895 = vunpack.c.h.b16 %v36
  %v896 = vunpack.c.l.b16 %v37
  %v897 = vunpack.c.h.b16 %v37
  %v898 = vunpack.c.l.b16 %v38
  %v899 = vunpack.c.h.b16 %v38
  %v900 = vunpack.c.l.b16 %v39
  %v901 = vunpack.c.h.b16 %v39
  %v902 = vunpack.c.l.b16 %v40
  %v903 = vunpack.c.h.b16 %v40
  %v904 = vunpack.c.l.b16 %v41
  %v905 = vunpack.c.h.b16 %v41
  %v906 = vunpack.c.l.b16 %v42
  %v907 = vunpack.c.h.b16 %v42
  %v908 = vunpack.c.l.b16 %v43
  %v909 = vunpack.c.h.b16 %v43
  %v910 = vunpack.c.l.b16 %v44
  %v911 = vunpack.c.h.b16 %v44
  %v912 = vunpack.c.l.b16 %v45
  %v913 = vunpack.c.h.b16 %v45
  %v914 = vunpack.c.l.b16 %v46
  %v915 = vunpack.c.h.b16 %v46
  %v916 = vunpack.c.l.b16 %v47
  %v917 = vunpack.c.h.b16 %v47
  %v918 = vunpack.c.l.b16 %v48
  %v919 = vpack.c.b16 %v894, %v869
  %v920 = vpack.c.b16 %v895, %v870
  %v921 = vpack.c.b16 %v896, %v871
  %v922 = vpack.c.b16 %v897, %v872
  %v923 = vpack.c.b16 %v898, %v873
  %v924 = vpack.c.b16 %v899, %v874
  %v925 = vpack.c.b16 %v900, %v875
  %v926 = vpack.c.b16 %v901, %v876
  %v927 = vpack.c.b16 %v902, %v877
  %v928 = vpack.c.b16 %v903, %v878
  %v929 = vpack.c.b16 %v904, %v879
  %v930 = vpack.c.b16 %v905, %v880
  %v931 = vpack.c.b16 %v906, %v881
  %v932 = vpack.c.b16 %v907, %v882
  %v933 = vpack.c.b16 %v908, %v883
  %v934 = vpack.c.b16 %v909, %v884
  %v935 = vpack.c.b16 %v910, %v885
  %v936 = vpack.c.b16 %v911, %v886
  %v937 = vpack.c.b16 %v912, %v887
  %v938 = vpack.c.b16 %v913, %v888
  %v939 = vpack.c.b16 %v914, %v889
  %v940 = vpack.c.b16 %v915, %v890
  %v941 = vpack.c.b16 %v916, %v891
  %v942 = vpack.c.b16 %v917, %v892
  %v943 = vpack.c.b16 %v918, %v893
  %v1752 = vunpack.c.l.b16 %v49
  %v1753 = vunpack.c.h.b16 %v49
  %v1754 = vunpack.c.l.b16 %v50
  %v1755 = vunpack.c.h.b16 %v50
  %v1756 = vunpack.c.l.b16 %v51
  %v1757 = vunpack.c.h.b16 %v51
  %v1758 = vunpack.c.l.b16 %v52
  %v1759 = vunpack.c.h.b16 %v52
  %v1760 = vunpack.c.l.b16 %v53
  %v1761 = vunpack.c.h.b16 %v53
  %v1762 = vunpack.c.l.b16 %v54
  %v1763 = vunpack.c.h.b16 %v54
  %v1764 = vunpack.c.l.b16 %v55
  %v1765 = vunpack.c.h.b16 %v55
  %v1766 = vunpack.c.l.b16 %v56
  %v1767 = vunpack.c.h.b16 %v56
  %v1768 = vunpack.c.l.b16 %v57
  %v1769 = vunpack.c.h.b16 %v57
  %v1770 = vunpack.c.l.b16 %v58
  %v1771 = vunpack.c.h.b16 %v58
  %v1772 = vunpack.c.l.b16 %v59
  %v1773 = vunpack.c.h.b16 %v59
  %v1774 = vunpack.c.l.b16 %v60
  %v1775 = vunpack.c.h.b16 %v60
  %v1776 = vunpack.c.l.b16 %v61
  %v1777 = vunpack.c.h.b16 %v61
  %v1778 = vunpack.c.l.b16 %v62
  %v1779 = vunpack.c.h.b16 %v62
  %v1780 = vunpack.c.l.b16 %v63
  %v1781 = vunpack.c.h.b16 %v63
  %v1782 = vunpack.c.l.b16 %v64
  %v1783 = vunpack.c.h.b16 %v64
  %v1784 = vunpack.c.l.b16 %v65
  %v1785 = vunpack.c.h.b16 %v65
  %v1786 = vunpack.c.l.b16 %v66
  %v1787 = vunpack.c.h.b16 %v66
  %v1788 = vunpack.c.l.b16 %v67
  %v1789 = vunpack.c.h.b16 %v67
  %v1790 = vunpack.c.l.b16 %v68
  %v1791 = vunpack.c.h.b16 %v68
  %v1792 = vunpack.c.l.b16 %v69
  %v1793 = vunpack.c.h.b16 %v69
  %v1794 = vunpack.c.l.b16 %v70
  %v1795 = vunpack.c.h.b16 %v70
  %v1796 = vunpack.c.l.b16 %v71
  %v1797 = vunpack.c.h.b16 %v71
  %v1798 = vunpack.c.l.b16 %v72
  %v1799 = vunpack.c.h.b16 %v72
  %v1800 = vunpack.c.l.b16 %v73
  %v1801 = vunpack.c.h.b16 %v73
  %v1802 = vunpack.c.l.b16 %v74
  %v1803 = vunpack.c.h.b16 %v74
  %v1804 = vunpack.c.l.b16 %v75
  %v1805 = vunpack.c.h.b16 %v75
  %v1806 = vunpack.c.l.b16 %v76
  %v1807 = vunpack.c.h.b16 %v76
  %v1808 = vunpack.c.l.b16 %v77
  %v1809 = vunpack.c.h.b16 %v77
  %v1810 = vunpack.c.l.b16 %v78
  %v1811 = vunpack.c.h.b16 %v78
  %v1812 = vunpack.c.l.b16 %v79
  %v1813 = vunpack.c.h.b16 %v79
  %v1814 = vunpack.c.l.b16 %v80
  %v1815 = vunpack.c.h.b16 %v80
  %v1816 = vunpack.c.l.b16 %v81
  %v1817 = vunpack.c.h.b16 %v81
  %v1818 = vunpack.c.l.b16 %v82
  %v1819 = vunpack.c.h.b16 %v82
  %v1820 = vunpack.c.l.b16 %v83
  %v1821 = vunpack.c.h.b16 %v83
  %v1822 = vunpack.c.l.b16 %v84
  %v1823 = vunpack.c.h.b16 %v84
  %v1824 = vunpack.c.l.b16 %v85
  %v1825 = vunpack.c.h.b16 %v85
  %v1826 = vunpack.c.l.b16 %v86
  %v1827 = vunpack.c.h.b16 %v86
  %v1828 = vunpack.c.l.b16 %v87
  %v1829 = vunpack.c.h.b16 %v87
  %v1830 = vunpack.c.l.b16 %v88
  %v1831 = vunpack.c.h.b16 %v88
  %v1832 = vunpack.c.l.b16 %v89
  %v1833 = vunpack.c.h.b16 %v89
  %v1834 = vunpack.c.l.b16 %v90
  %v1835 = vunpack.c.h.b16 %v90
  %v1836 = vunpack.c.l.b16 %v91
  %v1837 = vunpack.c.h.b16 %v91
  %v1838 = vunpack.c.l.b16 %v92
  %v1839 = vunpack.c.h.b16 %v92
  %v1840 = vunpack.c.l.b16 %v93
  %v1841 = vunpack.c.h.b16 %v93
  %v1842 = vunpack.c.l.b16 %v94
  %v1843 = vunpack.c.h.b16 %v94
  %v1844 = vunpack.c.l.b16 %v95
  %v1845 = vunpack.c.h.b16 %v95
  %v1846 = vunpack.c.l.b16 %v96
  %v1847 = vunpack.c.h.b16 %v96
  %v1848 = vunpack.c.l.b16 %v97
  %v1849 = vunpack.c.h.b16 %v97
  %v1850 = vunpack.c.l.b16 %v98
  %v1851 = vunpack.c.h.b16 %v98
  %v1852 = vunpack.c.l.b16 %v99
  %v1853 = vunpack.c.h.b16 %v99
  %v1854 = vunpack.c.l.b16 %v100
  %v1855 = vunpack.c.h.b16 %v100
  %v1856 = vunpack.c.l.b16 %v101
  %v1857 = vunpack.c.h.b16 %v101
  %v1858 = vunpack.c.l.b16 %v102
  %v1859 = vunpack.c.h.b16 %v102
  %v1860 = vunpack.c.l.b16 %v103
  %v1861 = vunpack.c.h.b16 %v103
  %v1862 = vunpack.c.l.b16 %v104
  %v1863 = vunpack.c.h.b16 %v104
  %v1864 = vunpack.c.l.b16 %v105
  %v1865 = vunpack.c.h.b16 %v105
  %v1866 = vunpack.c.l.b16 %v106
  %v1867 = vunpack.c.h.b16 %v106
  %v1868 = vunpack.c.l.b16 %v107
  %v1869 = vunpack.c.h.b16 %v107
  %v1870 = vunpack.c.l.b16 %v108
  %v1871 = vunpack.c.h.b16 %v108
  %v1872 = vunpack.c.l.b16 %v109
  %v1873 = vunpack.c.h.b16 %v109
  %v1874 = vunpack.c.l.b16 %v110
  %v1875 = vunpack.c.h.b16 %v110
  %v1876 = vunpack.c.l.b16 %v111
  %v1877 = vunpack.c.h.b16 %v111
  %v1878 = vunpack.c.l.b16 %v112
  %v1879 = vunpack.c.h.b16 %v112
  %v1880 = vunpack.c.l.b16 %v113
  %v1881 = vunpack.c.h.b16 %v113
  %v1882 = vunpack.c.l.b16 %v114
  %v1883 = vunpack.c.h.b16 %v114
  %v1884 = vunpack.c.l.b16 %v115
  %v1885 = vunpack.c.h.b16 %v115
  %v1886 = vunpack.c.l.b16 %v116
  %v1887 = vunpack.c.h.b16 %v116
  %v1888 = vunpack.c.l.b16 %v117
  %v1889 = vunpack.c.h.b16 %v117
  %v1890 = vunpack.c.l.b16 %v118
  %v1891 = vunpack.c.h.b16 %v118
  %v1892 = vunpack.c.l.b16 %v119
  %v1893 = vunpack.c.h.b16 %v119
  %v1894 = vunpack.c.l.b16 %v120
  %v1895 = vunpack.c.h.b16 %v120
  %v1896 = vunpack.c.l.b16 %v121
  %v1897 = vunpack.c.h.b16 %v121
  %v1898 = vunpack.c.l.b16 %v122
  %v1899 = vunpack.c.h.b16 %v122
  %v1900 = vunpack.c.l.b16 %v123
  %v1901 = vunpack.c.h.b16 %v123
  %v1902 = vunpack.c.l.b16 %v124
  %v1903 = vunpack.c.h.b16 %v124
  %v1904 = vunpack.c.l.b16 %v125
  %v1905 = vunpack.c.h.b16 %v125
  %v1906 = vunpack.c.l.b16 %v126
  %v1907 = vunpack.c.h.b16 %v126
  %v1908 = vunpack.c.l.b16 %v127
  %v1909 = vunpack.c.h.b16 %v127
  %v1910 = vunpack.c.l.b16 %v128
  %v1911 = vunpack.c.h.b16 %v128
  %v1912 = vunpack.c.l.b16 %v129
  %v1913 = vunpack.c.h.b16 %v129
  %v1914 = vunpack.c.l.b16 %v130
  %v1915 = vunpack.c.h.b16 %v130
  %v1916 = vunpack.c.l.b16 %v131
  %v1917 = vunpack.c.h.b16 %v131
  %v1918 = vunpack.c.l.b16 %v132
  %v1919 = vunpack.c.h.b16 %v132
  %v1920 = vunpack.c.l.b16 %v133
  %v1921 = vunpack.c.h.b16 %v133
  %v1922 = vunpack.c.l.b16 %v134
  %v1923 = vunpack.c.h.b16 %v134
  %v1924 = vunpack.c.l.b16 %v135
  %v1925 = vunpack.c.h.b16 %v135
  %v1926 = vunpack.c.l.b16 %v136
  %v1927 = vunpack.c.h.b16 %v136
  %v1928 = vunpack.c.l.b16 %v137
  %v1929 = vunpack.c.h.b16 %v137
  %v1930 = vunpack.c.l.b16 %v138
  %v1931 = vunpack.c.h.b16 %v138
  %v1932 = vunpack.c.l.b16 %v139
  %v1933 = vunpack.c.h.b16 %v139
  %v1934 = vunpack.c.l.b16 %v140
  %v1935 = vunpack.c.h.b16 %v140
  %v1936 = vunpack.c.l.b16 %v141
  %v1937 = vunpack.c.h.b16 %v141
  %v1938 = vunpack.c.l.b16 %v142
  %v1939 = vunpack.c.h.b16 %v142
  %v1940 = vunpack.c.l.b16 %v143
  %v1941 = vunpack.c.h.b16 %v143
  %v1942 = vunpack.c.l.b16 %v144
  %v1943 = vunpack.c.h.b16 %v144
  %v1944 = vunpack.c.l.b16 %v145
  %v1945 = vunpack.c.h.b16 %v145
  %v1946 = vunpack.c.l.b16 %v146
  %v1947 = vunpack.c.h.b16 %v146
  %v1948 = vunpack.c.l.b16 %v147
  %v1949 = vunpack.c.h.b16 %v147
  %v1950 = vunpack.c.l.b16 %v148
  %v1951 = vunpack.c.h.b16 %v148
  %v1952 = vunpack.c.l.b16 %v149
  %v1953 = vunpack.c.h.b16 %v149
  %v1954 = vunpack.c.l.b16 %v150
  %v1955 = vunpack.c.h.b16 %v150
  %v1956 = vunpack.c.l.b16 %v151
  %v1957 = vunpack.c.h.b16 %v151
  %v1958 = vunpack.c.l.b16 %v152
  %v1959 = vunpack.c.h.b16 %v152
  %v1960 = vunpack.c.l.b16 %v153
  %v1961 = vunpack.c.h.b16 %v153
  %v1962 = vunpack.c.l.b16 %v154
  %v1963 = vunpack.c.h.b16 %v154
  %v1964 = vunpack.c.l.b16 %v155
  %v1965 = vunpack.c.h.b16 %v155
  %v1966 = vunpack.c.l.b16 %v156
  %v1967 = vunpack.c.h.b16 %v156
  %v1968 = vunpack.c.l.b16 %v157
  %v1969 = vunpack.c.h.b16 %v157
  %v1970 = vunpack.c.l.b16 %v158
  %v1971 = vunpack.c.h.b16 %v158
  %v1972 = vunpack.c.l.b16 %v159
  %v1973 = vunpack.c.h.b16 %v159
  %v1974 = vunpack.c.l.b16 %v160
  %v1975 = vunpack.c.h.b16 %v160
  %v1976 = vunpack.c.l.b16 %v161
  %v1977 = vunpack.c.h.b16 %v161
  %v1978 = vunpack.c.l.b16 %v162
  %v1979 = vunpack.c.h.b16 %v162
  %v1980 = vunpack.c.l.b16 %v163
  %v1981 = vunpack.c.h.b16 %v163
  %v1982 = vunpack.c.l.b16 %v164
  %v1983 = vunpack.c.h.b16 %v164
  %v1984 = vunpack.c.l.b16 %v165
  %v1985 = vunpack.c.h.b16 %v165
  %v1986 = vunpack.c.l.b16 %v166
  %v1987 = vunpack.c.h.b16 %v166
  %v1988 = vunpack.c.l.b16 %v167
  %v1989 = vunpack.c.h.b16 %v167
  %v1990 = vunpack.c.l.b16 %v168
  %v1991 = vunpack.c.h.b16 %v168
  %v1992 = vunpack.c.l.b16 %v169
  %v1993 = vunpack.c.h.b16 %v169
  %v1994 = vunpack.c.l.b16 %v170
  %v1995 = vunpack.c.h.b16 %v170
  %v1996 = vunpack.c.l.b16 %v171
  %v1997 = vunpack.c.h.b16 %v171
  %v1998 = vunpack.c.l.b16 %v172
  %v1999 = vunpack.c.h.b16 %v172
  %v2000 = vunpack.c.l.b16 %v173
  %v2001 = vunpack.c.h.b16 %v173
  %v2002 = vunpack.c.l.b16 %v174
  %v2003 = vunpack.c.h.b16 %v174
  %v2004 = vunpack.c.l.b16 %v175
  %v2005 = vunpack.c.h.b16 %v175
  %v2006 = vunpack.c.l.b16 %v176
  %v2007 = vunpack.c.h.b16 %v176
  %v2008 = vunpack.c.l.b16 %v177
  %v2009 = vunpack.c.h.b16 %v177
  %v2010 = vunpack.c.l.b16 %v178
  %v2011 = vunpack.c.h.b16 %v178
  %v2012 = vunpack.c.l.b16 %v179
  %v2013 = vunpack.c.h.b16 %v179
  %v2014 = vunpack.c.l.b16 %v180
  %v2015 = vunpack.c.h.b16 %v180
  %v2016 = vunpack.c.l.b16 %v181
  %v2017 = vunpack.c.h.b16 %v181
  %v2018 = vunpack.c.l.b16 %v182
  %v2019 = vunpack.c.h.b16 %v182
  %v2020 = vunpack.c.l.b16 %v183
  %v2021 = vunpack.c.h.b16 %v183
  %v2022 = vunpack.c.l.b16 %v184
  %v2023 = vunpack.c.h.b16 %v184
  %v2024 = vunpack.c.l.b16 %v185
  %v2025 = vunpack.c.h.b16 %v185
  %v2026 = vunpack.c.l.b16 %v186
  %v2027 = vunpack.c.h.b16 %v186
  %v2028 = vunpack.c.l.b16 %v187
  %v2029 = vunpack.c.h.b16 %v187
  %v2030 = vunpack.c.l.b16 %v188
  %v2031 = vunpack.c.h.b16 %v188
  %v2032 = vunpack.c.l.b16 %v189
  %v2033 = vunpack.c.h.b16 %v189
  %v2034 = vunpack.c.l.b16 %v190
  %v2035 = vunpack.c.h.b16 %v190
  %v2036 = vunpack.c.l.b16 %v191
  %v2037 = vunpack.c.h.b16 %v191
  %v2038 = vunpack.c.l.b16 %v192
  %v2039 = vunpack.c.h.b16 %v192
  %v2040 = vunpack.c.l.b16 %v193
  %v2041 = vunpack.c.h.b16 %v193
  %v2042 = vunpack.c.l.b16 %v194
  %v2043 = vunpack.c.h.b16 %v194
  %v2044 = vunpack.c.l.b16 %v195
  %v2045 = vunpack.c.h.b16 %v195
  %v2046 = vunpack.c.l.b16 %v196
  %v2047 = vunpack.c.h.b16 %v196
  %v2048 = vunpack.c.l.b16 %v197
  %v2049 = vunpack.c.h.b16 %v197
  %v2050 = vunpack.c.l.b16 %v198
  %v2051 = vunpack.c.h.b16 %v198
  %v2052 = vunpack.c.l.b16 %v199
  %v2053 = vunpack.c.h.b16 %v199
  %v2054 = vunpack.c.l.b16 %v200
  %v2055 = vunpack.c.h.b16 %v200
  %v2056 = vunpack.c.l.b16 %v201
  %v2057 = vunpack.c.h.b16 %v201
  %v2058 = vunpack.c.l.b16 %v202
  %v2059 = vunpack.c.h.b16 %v202
  %v2060 = vunpack.c.l.b16 %v203
  %v2061 = vunpack.c.h.b16 %v203
  %v2062 = vunpack.c.l.b16 %v204
  %v2063 = vunpack.c.h.b16 %v204
  %v2064 = vunpack.c.l.b16 %v205
  %v2065 = vunpack.c.h.b16 %v205
  %v2066 = vunpack.c.l.b16 %v206
  %v2067 = vunpack.c.h.b16 %v206
  %v2068 = vunpack.c.l.b16 %v207
  %v2069 = vunpack.c.h.b16 %v207
  %v2070 = vunpack.c.l.b16 %v208
  %v2071 = vunpack.c.h.b16 %v208
  %v2072 = vunpack.c.l.b16 %v209
  %v2073 = vunpack.c.h.b16 %v209
  %v2074 = vunpack.c.l.b16 %v210
  %v2075 = vunpack.c.h.b16 %v210
  %v2076 = vunpack.c.l.b16 %v211
  %v2077 = vunpack.c.h.b16 %v211
  %v2078 = vunpack.c.l.b16 %v212
  %v2079 = vunpack.c.h.b16 %v212
  %v2080 = vunpack.c.l.b16 %v213
  %v2081 = vunpack.c.h.b16 %v213
  %v2082 = vunpack.c.l.b16 %v214
  %v2083 = vunpack.c.h.b16 %v214
  %v2084 = vunpack.c.l.b16 %v215
  %v2085 = vunpack.c.h.b16 %v215
  %v2086 = vunpack.c.l.b16 %v216
  %v2087 = vunpack.c.h.b16 %v216
  %v2088 = vunpack.c.l.b16 %v217
  %v2089 = vunpack.c.h.b16 %v217
  %v2090 = vunpack.c.l.b16 %v218
  %v2091 = vunpack.c.h.b16 %v218
  %v2092 = vunpack.c.l.b16 %v219
  %v2093 = vunpack.c.h.b16 %v219
  %v2094 = vunpack.c.l.b16 %v220
  %v2095 = vunpack.c.h.b16 %v220
  %v2096 = vunpack.c.l.b16 %v221
  %v2097 = vunpack.c.h.b16 %v221
  %v2098 = vunpack.c.l.b16 %v222
  %v2099 = vunpack.c.h.b16 %v222
  %v2100 = vunpack.c.l.b16 %v223
  %v2101 = vunpack.c.h.b16 %v223
  %v2102 = vunpack.c.l.b16 %v224
  %v2103 = vunpack.c.h.b16 %v224
  %v2104 = vunpack.c.l.b16 %v225
  %v2105 = vunpack.c.h.b16 %v225
  %v2106 = vunpack.c.l.b16 %v226
  %v2107 = vunpack.c.h.b16 %v226
  %v2108 = vunpack.c.l.b16 %v227
  %v2109 = vunpack.c.h.b16 %v227
  %v2110 = vunpack.c.l.b16 %v228
  %v2111 = vunpack.c.h.b16 %v228
  %v2112 = vunpack.c.l.b16 %v229
  %v2113 = vunpack.c.h.b16 %v229
  %v2114 = vunpack.c.l.b16 %v230
  %v2115 = vunpack.c.h.b16 %v230
  %v2116 = vunpack.c.l.b16 %v231
  %v2117 = vunpack.c.h.b16 %v231
  %v2118 = vunpack.c.l.b16 %v232
  %v2119 = vunpack.c.h.b16 %v232
  %v2120 = vunpack.c.l.b16 %v233
  %v2121 = vunpack.c.h.b16 %v233
  %v2122 = vunpack.c.l.b16 %v234
  %v2123 = vunpack.c.h.b16 %v234
  %v2124 = vunpack.c.l.b16 %v235
  %v2125 = vunpack.c.h.b16 %v235
  %v2126 = vunpack.c.l.b16 %v236
  %v2127 = vunpack.c.h.b16 %v236
  %v2128 = vunpack.c.l.b16 %v237
  %v2129 = vunpack.c.h.b16 %v237
  %v2130 = vunpack.c.l.b16 %v238
  %v2131 = vunpack.c.h.b16 %v238
  %v2132 = vunpack.c.l.b16 %v239
  %v2133 = vunpack.c.h.b16 %v239
  %v2134 = vunpack.c.l.b16 %v240
  %v2135 = vunpack.c.h.b16 %v240
  %v2136 = vunpack.c.l.b16 %v241
  %v2137 = vunpack.c.h.b16 %v241
  %v2138 = vunpack.c.l.b16 %v242
  %v2139 = vunpack.c.h.b16 %v242
  %v2140 = vunpack.c.l.b16 %v243
  %v2141 = vunpack.c.h.b16 %v243
  %v2142 = vunpack.c.l.b16 %v244
  %v2143 = vunpack.c.h.b16 %v244
  %v2144 = vunpack.c.l.b16 %v245
  %v2145 = vunpack.c.h.b16 %v245
  %v2146 = vunpack.c.l.b16 %v246
  %v2147 = vunpack.c.h.b16 %v246
  %v2148 = vunpack.c.l.b16 %v247
  %v2149 = vunpack.c.h.b16 %v247
  %v2150 = vunpack.c.l.b16 %v248
  %v2151 = vunpack.c.h.b16 %v248
  %v2152 = vunpack.c.l.b16 %v249
  %v2153 = vunpack.c.h.b16 %v249
  %v2154 = vunpack.c.l.b16 %v250
  %v2155 = vunpack.c.h.b16 %v250
  %v2156 = vunpack.c.l.b16 %v251
  %v2157 = vunpack.c.h.b16 %v251
  %v2158 = vunpack.c.l.b16 %v252
  %v2159 = vunpack.c.h.b16 %v252
  %v2160 = vunpack.c.l.b16 %v253
  %v2161 = vunpack.c.h.b16 %v253
  %v2162 = vunpack.c.l.b16 %v254
  %v2163 = vunpack.c.h.b16 %v254
  %v2164 = vunpack.c.l.b16 %v255
  %v2165 = vunpack.c.h.b16 %v255
  %v2166 = vunpack.c.l.b16 %v256
  %v2167 = vunpack.c.h.b16 %v256
  %v2168 = vunpack.c.l.b16 %v257
  %v2169 = vunpack.c.h.b16 %v257
  %v2170 = vunpack.c.l.b16 %v258
  %v2171 = vunpack.c.h.b16 %v258
  %v2172 = vunpack.c.l.b16 %v259
  %v2173 = vunpack.c.h.b16 %v259
  %v2174 = vunpack.c.l.b16 %v260
  %v2175 = vunpack.c.h.b16 %v260
  %v2176 = vunpack.c.l.b16 %v261
  %v2177 = vunpack.c.h.b16 %v261
  %v2178 = vunpack.c.l.b16 %v262
  %v2179 = vunpack.c.h.b16 %v262
  %v2180 = vunpack.c.l.b16 %v263
  %v2181 = vunpack.c.h.b16 %v263
  %v2182 = vunpack.c.l.b16 %v264
  %v2183 = vunpack.c.h.b16 %v264
  %v2184 = vunpack.c.l.b16 %v265
  %v2185 = vunpack.c.h.b16 %v265
  %v2186 = vunpack.c.l.b16 %v266
  %v2187 = vunpack.c.h.b16 %v266
  %v2188 = vunpack.c.l.b16 %v267
  %v2189 = vunpack.c.h.b16 %v267
  %v2190 = vunpack.c.l.b16 %v268
  %v2191 = vunpack.c.h.b16 %v268
  %v2192 = vunpack.c.l.b16 %v269
  %v2193 = vunpack.c.h.b16 %v269
  %v2194 = vunpack.c.l.b16 %v270
  %v2195 = vunpack.c.h.b16 %v270
  %v2196 = vunpack.c.l.b16 %v271
  %v2197 = vunpack.c.h.b16 %v271
  %v2198 = vunpack.c.l.b16 %v272
  %v2199 = vunpack.c.h.b16 %v272
  %v2200 = vunpack.c.l.b16 %v273
  %v2201 = vunpack.c.h.b16 %v273
  %v2202 = vunpack.c.l.b16 %v274
  %v2203 = vunpack.c.h.b16 %v274
  %v2204 = vunpack.c.l.b16 %v275
  %v2205 = vunpack.c.h.b16 %v275
  %v2206 = vunpack.c.l.b16 %v276
  %v2207 = vunpack.c.h.b16 %v276
  %v2208 = vunpack.c.l.b16 %v277
  %v2209 = vunpack.c.h.b16 %v277
  %v2210 = vunpack.c.l.b16 %v278
  %v2211 = vunpack.c.h.b16 %v278
  %v2212 = vunpack.c.l.b16 %v279
  %v2213 = vunpack.c.h.b16 %v279
  %v2214 = vunpack.c.l.b16 %v280
  %v2215 = vunpack.c.h.b16 %v280
  %v2216 = vunpack.c.l.b16 %v281
  %v2217 = vunpack.c.h.b16 %v281
  %v2218 = vunpack.c.l.b16 %v282
  %v2219 = vunpack.c.h.b16 %v282
  %v2220 = vunpack.c.l.b16 %v283
  %v2221 = vunpack.c.h.b16 %v283
  %v2222 = vunpack.c.l.b16 %v284
  %v2223 = vunpack.c.h.b16 %v284
  %v2224 = vunpack.c.l.b16 %v285
  %v2225 = vunpack.c.h.b16 %v285
  %v2226 = vunpack.c.l.b16 %v286
  %v2227 = vunpack.c.h.b16 %v286
  %v2228 = vunpack.c.l.b16 %v287
  %v2229 = vunpack.c.h.b16 %v287
  %v2230 = vunpack.c.l.b16 %v288
  %v2231 = vunpack.c.h.b16 %v288
  %v2232 = vunpack.c.l.b16 %v289
  %v2233 = vunpack.c.h.b16 %v289
  %v2234 = vunpack.c.l.b16 %v290
  %v2235 = vunpack.c.h.b16 %v290
  %v2236 = vunpack.c.l.b16 %v291
  %v2237 = vunpack.c.h.b16 %v291
  %v2238 = vunpack.c.l.b16 %v292
  %v2239 = vunpack.c.h.b16 %v292
  %v2240 = vunpack.c.l.b16 %v293
  %v2241 = vunpack.c.h.b16 %v293
  %v2242 = vunpack.c.l.b16 %v294
  %v2243 = vunpack.c.h.b16 %v294
  %v2244 = vunpack.c.l.b16 %v295
  %v2245 = vunpack.c.h.b16 %v295
  %v2246 = vunpack.c.l.b16 %v296
  %v2247 = vunpack.c.h.b16 %v296
  %v2248 = vunpack.c.l.b16 %v297
  %v2249 = vunpack.c.h.b16 %v297
  %v2250 = vunpack.c.l.b16 %v298
  %v2251 = vunpack.c.h.b16 %v298
  %v2252 = vunpack.c.l.b16 %v299
  %v2253 = vunpack.c.h.b16 %v299
  %v2254 = vunpack.c.l.b16 %v300
  %v2255 = vunpack.c.h.b16 %v300
  %v2256 = vunpack.c.l.b16 %v301
  %v2257 = vunpack.c.h.b16 %v301
  %v2258 = vunpack.c.l.b16 %v302
  %v2259 = vunpack.c.h.b16 %v302
  %v2260 = vunpack.c.l.b16 %v303
  %v2261 = vunpack.c.h.b16 %v303
  %v2262 = vunpack.c.l.b16 %v304
  %v2263 = vunpack.c.h.b16 %v304
  %v2264 = vunpack.c.l.b16 %v305
  %v2265 = vunpack.c.h.b16 %v305
  %v2266 = vunpack.c.l.b16 %v306
  %v2267 = vunpack.c.h.b16 %v306
  %v2268 = vunpack.c.l.b16 %v307
  %v2269 = vunpack.c.h.b16 %v307
  %v2270 = vunpack.c.l.b16 %v308
  %v2271 = vunpack.c.h.b16 %v308
  %v2272 = vunpack.c.l.b16 %v309
  %v2273 = vunpack.c.h.b16 %v309
  %v2274 = vunpack.c.l.b16 %v310
  %v2275 = vunpack.c.h.b16 %v310
  %v2276 = vunpack.c.l.b16 %v311
  %v2277 = vunpack.c.h.b16 %v311
  %v2278 = vunpack.c.l.b16 %v312
  %v2279 = vunpack.c.h.b16 %v312
  %v2280 = vunpack.c.l.b16 %v313
  %v2281 = vunpack.c.h.b16 %v313
  %v2282 = vunpack.c.l.b16 %v314
  %v2283 = vunpack.c.h.b16 %v314
  %v2284 = vunpack.c.l.b16 %v315
  %v2285 = vunpack.c.h.b16 %v315
  %v2286 = vunpack.c.l.b16 %v316
  %v2287 = vunpack.c.h.b16 %v316
  %v2288 = vunpack.c.l.b16 %v317
  %v2289 = vunpack.c.h.b16 %v317
  %v2290 = vunpack.c.l.b16 %v318
  %v2291 = vunpack.c.h.b16 %v318
  %v2292 = vunpack.c.l.b16 %v319
  %v2293 = vunpack.c.h.b16 %v319
  %v2294 = vunpack.c.l.b16 %v320
  %v2295 = vunpack.c.h.b16 %v320
  %v2296 = vunpack.c.l.b16 %v321
  %v2297 = vunpack.c.h.b16 %v321
  %v2298 = vunpack.c.l.b16 %v322
  %v2299 = vunpack.c.h.b16 %v322
  %v2300 = vunpack.c.l.b16 %v323
  %v2301 = vunpack.c.h.b16 %v323
  %v2302 = vunpack.c.l.b16 %v324
  %v2303 = vunpack.c.h.b16 %v324
  %v2304 = vunpack.c.l.b16 %v325
  %v2305 = vunpack.c.h.b16 %v325
  %v2306 = vunpack.c.l.b16 %v326
  %v2307 = vunpack.c.h.b16 %v326
  %v2308 = vunpack.c.l.b16 %v327
  %v2309 = vunpack.c.h.b16 %v327
  %v2310 = vunpack.c.l.b16 %v328
  %v2311 = vunpack.c.h.b16 %v328
  %v2312 = vunpack.c.l.b16 %v329
  %v2313 = vunpack.c.h.b16 %v329
  %v2314 = vunpack.c.l.b16 %v330
  %v2315 = vunpack.c.h.b16 %v330
  %v2316 = vunpack.c.l.b16 %v331
  %v2317 = vunpack.c.h.b16 %v331
  %v2318 = vunpack.c.l.b16 %v332
  %v2319 = vunpack.c.h.b16 %v332
  %v2320 = vunpack.c.l.b16 %v333
  %v2321 = vunpack.c.h.b16 %v333
  %v2322 = vunpack.c.l.b16 %v334
  %v2323 = vunpack.c.h.b16 %v334
  %v2324 = vunpack.c.l.b16 %v335
  %v2325 = vunpack.c.h.b16 %v335
  %v2326 = vunpack.c.l.b16 %v336
  %v2327 = vunpack.c.h.b16 %v336
  %v2328 = vunpack.c.l.b16 %v337
  %v2329 = vunpack.c.h.b16 %v337
  %v2330 = vunpack.c.l.b16 %v338
  %v2331 = vunpack.c.h.b16 %v338
  %v2332 = vunpack.c.l.b16 %v339
  %v2333 = vunpack.c.h.b16 %v339
  %v2334 = vunpack.c.l.b16 %v340
  %v2335 = vunpack.c.h.b16 %v340
  %v2336 = vunpack.c.l.b16 %v341
  %v2337 = vunpack.c.h.b16 %v341
  %v2338 = vunpack.c.l.b16 %v342
  %v2339 = vunpack.c.h.b16 %v342
  %v2340 = vunpack.c.l.b16 %v343
  %v2341 = vunpack.c.h.b16 %v343
  %v2342 = vunpack.c.l.b16 %v344
  %v2343 = vunpack.c.h.b16 %v344
  %v2344 = vunpack.c.l.b16 %v345
  %v2345 = vunpack.c.h.b16 %v345
  %v2346 = vunpack.c.l.b16 %v346
  %v2347 = vunpack.c.h.b16 %v346
  %v2348 = vunpack.c.l.b16 %v347
  %v2349 = vunpack.c.h.b16 %v347
  %v2350 = vunpack.c.l.b16 %v348
  %v2351 = vunpack.c.h.b16 %v348
  %v2352 = vunpack.c.l.b16 %v349
  %v2353 = vunpack.c.h.b16 %v349
  %v2354 = vunpack.c.l.b16 %v350
  %v2355 = vunpack.c.h.b16 %v350
  %v2356 = vunpack.c.l.b16 %v351
  %v2357 = vunpack.c.h.b16 %v351
  %v2358 = vunpack.c.l.b16 %v352
  %v2359 = vunpack.c.h.b16 %v352
  %v2360 = vunpack.c.l.b16 %v353
  %v2361 = vunpack.c.h.b16 %v353
  %v2362 = vunpack.c.l.b16 %v354
  %v2363 = vunpack.c.h.b16 %v354
  %v2364 = vunpack.c.l.b16 %v355
  %v2365 = vunpack.c.h.b16 %v355
  %v2366 = vunpack.c.l.b16 %v356
  %v2367 = vunpack.c.h.b16 %v356
  %v2368 = vunpack.c.l.b16 %v357
  %v2369 = vunpack.c.h.b16 %v357
  %v2370 = vunpack.c.l.b16 %v358
  %v2371 = vunpack.c.h.b16 %v358
  %v2372 = vunpack.c.l.b16 %v359
  %v2373 = vunpack.c.h.b16 %v359
  %v2374 = vunpack.c.l.b16 %v360
  %v2375 = vunpack.c.h.b16 %v360
  %v2376 = vunpack.c.l.b16 %v361
  %v2377 = vunpack.c.h.b16 %v361
  %v2378 = vunpack.c.l.b16 %v362
  %v2379 = vunpack.c.h.b16 %v362
  %v2380 = vunpack.c.l.b16 %v363
  %v2381 = vunpack.c.h.b16 %v363
  %v2382 = vunpack.c.l.b16 %v364
  %v2383 = vunpack.c.h.b16 %v364
  %v2384 = vunpack.c.l.b16 %v365
  %v2385 = vunpack.c.h.b16 %v365
  %v2386 = vunpack.c.l.b16 %v366
  %v2387 = vunpack.c.h.b16 %v366
  %v2388 = vunpack.c.l.b16 %v367
  %v2389 = vunpack.c.h.b16 %v367
  %v2390 = vunpack.c.l.b16 %v368
  %v2391 = vunpack.c.h.b16 %v368
  %v2392 = vunpack.c.l.b16 %v369
  %v2393 = vunpack.c.h.b16 %v369
  %v2394 = vunpack.c.l.b16 %v370
  %v2395 = vunpack.c.h.b16 %v370
  %v2396 = vunpack.c.l.b16 %v371
  %v2397 = vunpack.c.h.b16 %v371
  %v2398 = vunpack.c.l.b16 %v372
  %v2399 = vunpack.c.h.b16 %v372
  %v2400 = vunpack.c.l.b16 %v373
  %v2401 = vunpack.c.h.b16 %v373
  %v2402 = vunpack.c.l.b16 %v374
  %v2403 = vunpack.c.h.b16 %v374
  %v2404 = vunpack.c.l.b16 %v375
  %v2405 = vunpack.c.h.b16 %v375
  %v2406 = vunpack.c.l.b16 %v376
  %v2407 = vunpack.c.h.b16 %v376
  %v2408 = vunpack.c.l.b16 %v377
  %v2409 = vunpack.c.h.b16 %v377
  %v2410 = vunpack.c.l.b16 %v378
  %v2411 = vunpack.c.h.b16 %v378
  %v2412 = vunpack.c.l.b16 %v379
  %v2413 = vunpack.c.h.b16 %v379
  %v2414 = vunpack.c.l.b16 %v380
  %v2415 = vunpack.c.h.b16 %v380
  %v2416 = vunpack.c.l.b16 %v381
  %v2417 = vunpack.c.h.b16 %v381
  %v2418 = vunpack.c.l.b16 %v382
  %v2419 = vunpack.c.h.b16 %v382
  %v2420 = vunpack.c.l.b16 %v383
  %v2421 = vunpack.c.h.b16 %v383
  %v2422 = vunpack.c.l.b16 %v384
  %v2423 = vunpack.c.h.b16 %v384
  %v2424 = vunpack.c.l.b16 %v385
  %v2425 = vunpack.c.h.b16 %v385
  %v2426 = vunpack.c.l.b16 %v386
  %v2427 = vunpack.c.h.b16 %v386
  %v2428 = vunpack.c.l.b16 %v387
  %v2429 = vunpack.c.h.b16 %v387
  %v2430 = vunpack.c.l.b16 %v388
  %v2431 = vunpack.c.h.b16 %v388
  %v2432 = vunpack.c.l.b16 %v389
  %v2433 = vunpack.c.h.b16 %v389
  %v2434 = vunpack.c.l.b16 %v390
  %v2435 = vunpack.c.h.b16 %v390
  %v2436 = vunpack.c.l.b16 %v391
  %v2437 = vunpack.c.h.b16 %v391
  %v2438 = vunpack.c.l.b16 %v392
  %v2439 = vunpack.c.h.b16 %v392
  %v2440 = vunpack.c.l.b16 %v393
  %v2441 = vunpack.c.h.b16 %v393
  %v2442 = vunpack.c.l.b16 %v394
  %v2443 = vunpack.c.h.b16 %v394
  %v2444 = vunpack.c.l.b16 %v395
  %v2445 = vunpack.c.h.b16 %v395
  %v2446 = vunpack.c.l.b16 %v396
  %v2447 = vunpack.c.h.b16 %v396
  %v2448 = vunpack.c.l.b16 %v397
  %v2449 = vunpack.c.h.b16 %v397
  %v2450 = vunpack.c.l.b16 %v398
  %v2451 = vunpack.c.h.b16 %v398
  %v2452 = vunpack.c.l.b16 %v399
  %v2453 = vunpack.c.h.b16 %v399
  %v2454 = vunpack.c.l.b16 %v400
  %v2455 = vunpack.c.h.b16 %v400
  %v2456 = vunpack.c.l.b16 %v401
  %v2457 = vunpack.c.h.b16 %v401
  %v2458 = vunpack.c.l.b16 %v402
  %v2459 = vunpack.c.h.b16 %v402
  %v2460 = vunpack.c.l.b16 %v403
  %v2461 = vunpack.c.h.b16 %v403
  %v2462 = vunpack.c.l.b16 %v404
  %v2463 = vunpack.c.h.b16 %v404
  %v2464 = vunpack.c.l.b16 %v405
  %v2465 = vunpack.c.h.b16 %v405
  %v2466 = vunpack.c.l.b16 %v406
  %v2467 = vunpack.c.h.b16 %v406
  %v2468 = vunpack.c.l.b16 %v407
  %v2469 = vunpack.c.h.b16 %v407
  %v2470 = vunpack.c.l.b16 %v408
  %v2471 = vunpack.c.h.b16 %v408
  %v2472 = vunpack.c.l.b16 %v409
  %v2473 = vunpack.c.h.b16 %v409
  %v2474 = vunpack.c.l.b16 %v410
  %v2475 = vunpack.c.h.b16 %v410
  %v2476 = vunpack.c.l.b16 %v411
  %v2477 = vunpack.c.h.b16 %v411
  %v2478 = vunpack.c.l.b16 %v412
  %v2479 = vunpack.c.h.b16 %v412
  %v2480 = vunpack.c.l.b16 %v413
  %v2481 = vunpack.c.h.b16 %v413
  %v2482 = vunpack.c.l.b16 %v414
  %v2483 = vunpack.c.h.b16 %v414
  %v2484 = vunpack.c.l.b16 %v415
  %v2485 = vunpack.c.h.b16 %v415
  %v2486 = vunpack.c.l.b16 %v416
  %v2487 = vunpack.c.h.b16 %v416
  %v2488 = vunpack.c.l.b16 %v417
  %v2489 = vunpack.c.h.b16 %v417
  %v2490 = vunpack.c.l.b16 %v418
  %v2491 = vunpack.c.h.b16 %v418
  %v2492 = vunpack.c.l.b16 %v419
  %v2493 = vunpack.c.h.b16 %v419
  %v2494 = vunpack.c.l.b16 %v420
  %v2495 = vunpack.c.h.b16 %v420
  %v2496 = vunpack.c.l.b16 %v421
  %v2497 = vunpack.c.h.b16 %v421
  %v2498 = vunpack.c.l.b16 %v422
  %v2499 = vunpack.c.h.b16 %v422
  %v2500 = vunpack.c.l.b16 %v423
  %v2501 = vunpack.c.h.b16 %v423
  %v2502 = vunpack.c.l.b16 %v424
  %v2503 = vunpack.c.h.b16 %v424
  %v2504 = vunpack.c.l.b16 %v425
  %v2505 = vunpack.c.h.b16 %v425
  %v2506 = vunpack.c.l.b16 %v426
  %v2507 = vunpack.c.h.b16 %v426
  %v2508 = vunpack.c.l.b16 %v427
  %v2509 = vunpack.c.h.b16 %v427
  %v2510 = vunpack.c.l.b16 %v428
  %v2511 = vunpack.c.h.b16 %v428
  %v2512 = vunpack.c.l.b16 %v429
  %v2513 = vunpack.c.h.b16 %v429
  %v2514 = vunpack.c.l.b16 %v430
  %v2515 = vunpack.c.h.b16 %v430
  %v2516 = vunpack.c.l.b16 %v431
  %v2517 = vunpack.c.h.b16 %v431
  %v2518 = vunpack.c.l.b16 %v432
  %v2519 = vunpack.c.h.b16 %v432
  %v2520 = vunpack.c.l.b16 %v433
  %v2521 = vunpack.c.h.b16 %v433
  %v2522 = vunpack.c.l.b16 %v434
  %v2523 = vunpack.c.h.b16 %v434
  %v2524 = vunpack.c.l.b16 %v435
  %v2525 = vunpack.c.h.b16 %v435
  %v2526 = vunpack.c.l.b16 %v436
  %v2527 = vunpack.c.h.b16 %v436
  %v2528 = vunpack.c.l.b16 %v437
  %v2529 = vunpack.c.h.b16 %v437
  %v2530 = vunpack.c.l.b16 %v438
  %v2531 = vunpack.c.h.b16 %v438
  %v2532 = vunpack.c.l.b16 %v439
  %v2533 = vunpack.c.h.b16 %v439
  %v2534 = vunpack.c.l.b16 %v440
  %v2535 = vunpack.c.h.b16 %v440
  %v2536 = vunpack.c.l.b16 %v441
  %v2537 = vunpack.c.h.b16 %v441
  %v2538 = vunpack.c.l.b16 %v442
  %v2539 = vunpack.c.h.b16 %v442
  %v2540 = vunpack.c.l.b16 %v443
  %v2541 = vunpack.c.h.b16 %v443
  %v2542 = vunpack.c.l.b16 %v444
  %v2543 = vunpack.c.h.b16 %v444
  %v2544 = vunpack.c.l.b16 %v445
  %v2545 = vunpack.c.h.b16 %v445
  %v2546 = vunpack.c.l.b16 %v446
  %v2547 = vunpack.c.h.b16 %v446
  %v2548 = vunpack.c.l.b16 %v447
  %v2549 = vunpack.c.h.b16 %v447
  %v2550 = vunpack.c.l.b16 %v448
  %v2551 = vunpack.c.h.b16 %v448
  %v2552 = vunpack.c.l.b16 %v449
  %v2553 = vunpack.c.h.b16 %v449
  %v2554 = vunpack.c.l.b16 %v450
  %v2555 = vunpack.c.h.b16 %v450
  %v2556 = vunpack.c.l.b16 %v451
  %v2557 = vunpack.c.h.b16 %v451
  %v2558 = vunpack.c.l.b16 %v452
  %v2559 = vunpack.c.h.b16 %v452
  %v2560 = vunpack.c.l.b16 %v453
  %v2561 = vunpack.c.h.b16 %v453
  %v2562 = vunpack.c.l.b16 %v454
  %v2563 = vunpack.c.h.b16 %v454
  %v2564 = vunpack.c.l.b16 %v455
  %v2565 = vunpack.c.h.b16 %v455
  %v2566 = vunpack.c.l.b16 %v456
  %v2567 = vunpack.c.h.b16 %v456
  %v2568 = vunpack.c.l.b16 %v457
  %v2569 = vunpack.c.h.b16 %v457
  %v2570 = vunpack.c.l.b16 %v458
  %v2571 = vunpack.c.h.b16 %v458
  %v2572 = vunpack.c.l.b16 %v459
  %v2573 = vunpack.c.h.b16 %v459
  %v2574 = vunpack.c.l.b16 %v460
  %v2575 = vunpack.c.h.b16 %v460
  %v2576 = vunpack.c.l.b16 %v461
  %v2577 = vunpack.c.h.b16 %v461
  %v2578 = vunpack.c.l.b16 %v462
  %v2579 = vunpack.c.h.b16 %v462
  %v2580 = vunpack.c.l.b16 %v463
  %v2581 = vunpack.c.h.b16 %v463
  %v2582 = vunpack.c.l.b16 %v464
  %v2583 = vunpack.c.h.b16 %v464
  %v2584 = vunpack.c.l.b16 %v465
  %v2585 = vunpack.c.h.b16 %v465
  %v2586 = vunpack.c.l.b16 %v466
  %v2587 = vunpack.c.h.b16 %v466
  %v2588 = vunpack.c.l.b16 %v467
  %v2589 = vunpack.c.h.b16 %v467
  %v2590 = vunpack.c.l.b16 %v468
  %v2591 = vunpack.c.h.b16 %v468
  %v2592 = vunpack.c.l.b16 %v469
  %v2593 = vunpack.c.h.b16 %v469
  %v2594 = vunpack.c.l.b16 %v470
  %v2595 = vunpack.c.h.b16 %v470
  %v2596 = vunpack.c.l.b16 %v471
  %v2597 = vunpack.c.h.b16 %v471
  %v2598 = vunpack.c.l.b16 %v472
  %v2599 = vunpack.c.h.b16 %v472
  %v2600 = vunpack.c.l.b16 %v473
  %v2601 = vunpack.c.h.b16 %v473
  %v2602 = vunpack.c.l.b16 %v474
  %v2603 = vunpack.c.h.b16 %v474
  %v2604 = vunpack.c.l.b16 %v475
  %v2605 = vunpack.c.h.b16 %v475
  %v2606 = vunpack.c.l.b16 %v476
  %v2607 = vunpack.c.h.b16 %v476
  %v2608 = vunpack.c.l.b16 %v477
  %v2609 = vunpack.c.h.b16 %v477
  %v2610 = vunpack.c.l.b16 %v478
  %v2611 = vunpack.c.h.b16 %v478
  %v2612 = vunpack.c.l.b16 %v479
  %v2613 = vunpack.c.h.b16 %v479
  %v2614 = vunpack.c.l.b16 %v480
  %v2615 = vunpack.c.h.b16 %v480
  %v2616 = vunpack.c.l.b16 %v481
  %v2617 = vunpack.c.h.b16 %v481
  %v2618 = vunpack.c.l.b16 %v482
  %v2619 = vunpack.c.h.b16 %v482
  %v2620 = vunpack.c.l.b16 %v483
  %v2621 = vunpack.c.h.b16 %v483
  %v2622 = vunpack.c.l.b16 %v484
  %v2623 = vunpack.c.h.b16 %v484
  %v2624 = vunpack.c.l.b16 %v485
  %v2625 = vunpack.c.h.b16 %v485
  %v2626 = vunpack.c.l.b16 %v486
  %v2627 = vunpack.c.h.b16 %v486
  %v2628 = vunpack.c.l.b16 %v487
  %v2629 = vunpack.c.h.b16 %v487
  %v2630 = vunpack.c.l.b16 %v488
  %v2631 = vunpack.c.h.b16 %v488
  %v2632 = vunpack.c.l.b16 %v489
  %v2633 = vunpack.c.h.b16 %v489
  %v2634 = vunpack.c.l.b16 %v490
  %v2635 = vunpack.c.h.b16 %v490
  %v2636 = vunpack.c.l.b16 %v491
  %v2637 = vunpack.c.h.b16 %v491
  %v2638 = vunpack.c.l.b16 %v492
  %v2639 = vunpack.c.h.b16 %v492
  %v2640 = vunpack.c.l.b16 %v493
  %v2641 = vunpack.c.h.b16 %v493
  %v2642 = vunpack.c.l.b16 %v494
  %v2643 = vunpack.c.h.b16 %v494
  %v2644 = vunpack.c.l.b16 %v495
  %v2645 = vunpack.c.h.b16 %v495
  %v2646 = vunpack.c.l.b16 %v496
  %v2647 = vunpack.c.h.b16 %v496
  %v2648 = vunpack.c.l.b16 %v497
  %v2649 = vunpack.c.h.b16 %v497
  %v2650 = vunpack.c.l.b16 %v498
  %v2651 = vunpack.c.h.b16 %v498
  %v2652 = vunpack.c.l.b16 %v499
  %v2653 = vunpack.c.h.b16 %v499
  %v2654 = vunpack.c.l.b16 %v500
  %v2655 = vunpack.c.h.b16 %v500
  %v2656 = vunpack.c.l.b16 %v501
  %v2657 = vunpack.c.h.b16 %v501
  %v2658 = vunpack.c.l.b16 %v502
  %v2659 = vunpack.c.h.b16 %v502
  %v2660 = vunpack.c.l.b16 %v503
  %v2661 = vunpack.c.h.b16 %v503
  %v2662 = vunpack.c.l.b16 %v504
  %v2663 = vunpack.c.h.b16 %v504
  %v2664 = vunpack.c.l.b16 %v505
  %v2665 = vunpack.c.h.b16 %v505
  %v2666 = vunpack.c.l.b16 %v506
  %v2667 = vunpack.c.h.b16 %v506
  %v2668 = vunpack.c.l.b16 %v507
  %v2669 = vunpack.c.h.b16 %v507
  %v2670 = vunpack.c.l.b16 %v508
  %v2671 = vunpack.c.h.b16 %v508
  %v2672 = vunpack.c.l.b16 %v509
  %v2673 = vunpack.c.h.b16 %v509
  %v2674 = vunpack.c.l.b16 %v510
  %v2675 = vunpack.c.h.b16 %v510
  %v2676 = vunpack.c.l.b16 %v511
  %v2677 = vunpack.c.h.b16 %v511
  %v2678 = vunpack.c.l.b16 %v512
  %v2679 = vunpack.c.h.b16 %v512
  %v2680 = vunpack.c.l.b16 %v513
  %v2681 = vunpack.c.h.b16 %v513
  %v2682 = vunpack.c.l.b16 %v514
  %v2683 = vunpack.c.h.b16 %v514
  %v2684 = vunpack.c.l.b16 %v515
  %v2685 = vunpack.c.h.b16 %v515
  %v2686 = vunpack.c.l.b16 %v516
  %v2687 = vunpack.c.h.b16 %v516
  %v2688 = vunpack.c.l.b16 %v517
  %v2689 = vunpack.c.h.b16 %v517
  %v2690 = vunpack.c.l.b16 %v518
  %v2691 = vunpack.c.h.b16 %v518
  %v2692 = vunpack.c.l.b16 %v519
  %v2693 = vunpack.c.h.b16 %v519
  %v2694 = vunpack.c.l.b16 %v520
  %v2695 = vunpack.c.h.b16 %v520
  %v2696 = vunpack.c.l.b16 %v521
  %v2697 = vunpack.c.h.b16 %v521
  %v2698 = vunpack.c.l.b16 %v522
  %v2699 = vunpack.c.h.b16 %v522
  %v2700 = vunpack.c.l.b16 %v523
  %v2701 = vunpack.c.h.b16 %v523
  %v2702 = vunpack.c.l.b16 %v524
  %v2703 = vunpack.c.h.b16 %v524
  %v2704 = vunpack.c.l.b16 %v525
  %v2705 = vunpack.c.h.b16 %v525
  %v2706 = vunpack.c.l.b16 %v526
  %v2707 = vunpack.c.h.b16 %v526
  %v2708 = vunpack.c.l.b16 %v527
  %v2709 = vunpack.c.h.b16 %v527
  %v2710 = vunpack.c.l.b16 %v528
  %v2711 = vunpack.c.h.b16 %v528
  %v2712 = vunpack.c.l.b16 %v529
  %v2713 = vunpack.c.h.b16 %v529
  %v2714 = vunpack.c.l.b16 %v530
  %v2715 = vunpack.c.h.b16 %v530
  %v2716 = vunpack.c.l.b16 %v531
  %v2717 = vunpack.c.h.b16 %v531
  %v2718 = vunpack.c.l.b16 %v532
  %v2719 = vunpack.c.h.b16 %v532
  %v2720 = vunpack.c.l.b16 %v533
  %v2721 = vunpack.c.h.b16 %v533
  %v2722 = vunpack.c.l.b16 %v534
  %v2723 = vunpack.c.h.b16 %v534
  %v2724 = vunpack.c.l.b16 %v535
  %v2725 = vunpack.c.h.b16 %v535
  %v2726 = vunpack.c.l.b16 %v536
  %v2727 = vunpack.c.h.b16 %v536
  %v2728 = vunpack.c.l.b16 %v537
  %v2729 = vunpack.c.h.b16 %v537
  %v2730 = vunpack.c.l.b16 %v538
  %v2731 = vunpack.c.h.b16 %v538
  %v2732 = vunpack.c.l.b16 %v539
  %v2733 = vunpack.c.h.b16 %v539
  %v2734 = vunpack.c.l.b16 %v540
  %v2735 = vunpack.c.h.b16 %v540
  %v2736 = vunpack.c.l.b16 %v541
  %v2737 = vunpack.c.h.b16 %v541
  %v2738 = vunpack.c.l.b16 %v542
  %v2739 = vunpack.c.h.b16 %v542
  %v2740 = vunpack.c.l.b16 %v543
  %v2741 = vunpack.c.h.b16 %v543
  %v2742 = vunpack.c.l.b16 %v544
  %v2743 = vunpack.c.h.b16 %v544
  %v2744 = vunpack.c.l.b16 %v545
  %v2745 = vunpack.c.h.b16 %v545
  %v2746 = vunpack.c.l.b16 %v546
  %v2747 = vunpack.c.h.b16 %v546
  %v2748 = vunpack.c.l.b16 %v547
  %v2749 = vunpack.c.h.b16 %v547
  %v2750 = vunpack.c.l.b16 %v548
  %v2751 = vunpack.c.h.b16 %v548
  %v2752 = vunpack.c.l.b16 %v549
  %v2753 = vunpack.c.h.b16 %v549
  %v2754 = vunpack.c.l.b16 %v550
  %v2755 = vunpack.c.h.b16 %v550
  %v2756 = vunpack.c.l.b16 %v551
  %v2757 = vunpack.c.h.b16 %v551
  %v2758 = vunpack.c.l.b16 %v552
  %v2759 = vunpack.c.h.b16 %v552
  %v2760 = vunpack.c.l.b16 %v553
  %v2761 = vunpack.c.h.b16 %v553
  %v2762 = vunpack.c.l.b16 %v554
  %v2763 = vunpack.c.h.b16 %v554
  %v2764 = vunpack.c.l.b16 %v555
  %v2765 = vunpack.c.h.b16 %v555
  %v2766 = vunpack.c.l.b16 %v556
  %v2767 = vunpack.c.h.b16 %v556
  %v2768 = vunpack.c.l.b16 %v557
  %v2769 = vunpack.c.h.b16 %v557
  %v2770 = vunpack.c.l.b16 %v558
  %v2771 = vunpack.c.h.b16 %v558
  %v2772 = vunpack.c.l.b16 %v559
  %v2773 = vunpack.c.h.b16 %v559
  %v2774 = vunpack.c.l.b16 %v560
  %v2775 = vunpack.c.h.b16 %v560
  %v2776 = vunpack.c.l.b16 %v561
  %v2777 = vunpack.c.h.b16 %v561
  %v2778 = vunpack.c.l.b16 %v562
  %v2779 = vunpack.c.h.b16 %v562
  %v2780 = vunpack.c.l.b16 %v563
  %v2781 = vunpack.c.h.b16 %v563
  %v2782 = vunpack.c.l.b16 %v564
  %v2783 = vunpack.c.h.b16 %v564
  %v2784 = vunpack.c.l.b16 %v565
  %v2785 = vunpack.c.h.b16 %v565
  %v2786 = vunpack.c.l.b16 %v566
  %v2787 = vunpack.c.h.b16 %v566
  %v2788 = vunpack.c.l.b16 %v567
  %v2789 = vunpack.c.h.b16 %v567
  %v2790 = vunpack.c.l.b16 %v568
  %v2791 = vunpack.c.h.b16 %v568
  %v2792 = vunpack.c.l.b16 %v569
  %v2793 = vunpack.c.h.b16 %v569
  %v2794 = vunpack.c.l.b16 %v570
  %v2795 = vunpack.c.h.b16 %v570
  %v2796 = vunpack.c.l.b16 %v571
  %v2797 = vunpack.c.h.b16 %v571
  %v2798 = vunpack.c.l.b16 %v572
  %v2799 = vunpack.c.h.b16 %v572
  %v2800 = vunpack.c.l.b16 %v573
  %v2801 = vunpack.c.h.b16 %v573
  %v2802 = vunpack.c.l.b16 %v574
  %v2803 = vunpack.c.h.b16 %v574
  %v2804 = vunpack.c.l.b16 %v575
  %v2805 = vunpack.c.h.b16 %v575
  %v2806 = vunpack.c.l.b16 %v576
  %v2807 = vunpack.c.h.b16 %v576
  %v2808 = vunpack.c.l.b16 %v577
  %v2809 = vunpack.c.h.b16 %v577
  %v2810 = vunpack.c.l.b16 %v578
  %v2811 = vunpack.c.h.b16 %v578
  %v2812 = vunpack.c.l.b16 %v579
  %v2813 = vunpack.c.h.b16 %v579
  %v2814 = vunpack.c.l.b16 %v580
  %v2815 = vunpack.c.h.b16 %v580
  %v2816 = vunpack.c.l.b16 %v581
  %v2817 = vunpack.c.h.b16 %v581
  %v2818 = vunpack.c.l.b16 %v582
  %v2819 = vunpack.c.h.b16 %v582
  %v2820 = vunpack.c.l.b16 %v583
  %v2821 = vunpack.c.h.b16 %v583
  %v2822 = vunpack.c.l.b16 %v584
  %v2823 = vunpack.c.h.b16 %v584
  %v2824 = vunpack.c.l.b16 %v585
  %v2825 = vunpack.c.h.b16 %v585
  %v2826 = vunpack.c.l.b16 %v586
  %v2827 = vunpack.c.h.b16 %v586
  %v2828 = vunpack.c.l.b16 %v587
  %v2829 = vunpack.c.h.b16 %v587
  %v2830 = vunpack.c.l.b16 %v588
  %v2831 = vunpack.c.h.b16 %v588
  %v2832 = vunpack.c.l.b16 %v589
  %v2833 = vunpack.c.h.b16 %v589
  %v2834 = vunpack.c.l.b16 %v590
  %v2835 = vunpack.c.h.b16 %v590
  %v2836 = vunpack.c.l.b16 %v591
  %v2837 = vunpack.c.h.b16 %v591
  %v2838 = vunpack.c.l.b16 %v592
  %v2839 = vunpack.c.h.b16 %v592
  %v2840 = vunpack.c.l.b16 %v593
  %v2841 = vunpack.c.h.b16 %v593
  %v2842 = vunpack.c.l.b16 %v594
  %v2843 = vunpack.c.h.b16 %v594
  %v2844 = vunpack.c.l.b16 %v595
  %v2845 = vunpack.c.h.b16 %v595
  %v2846 = vunpack.c.l.b16 %v596
  %v2847 = vunpack.c.h.b16 %v596
  %v2848 = vunpack.c.l.b16 %v597
  %v2849 = vunpack.c.h.b16 %v597
  %v2850 = vunpack.c.l.b16 %v598
  %v2851 = vunpack.c.h.b16 %v598
  %v2852 = vunpack.c.l.b16 %v599
  %v2853 = vunpack.c.h.b16 %v599
  %v2854 = vunpack.c.l.b16 %v600
  %v2855 = vunpack.c.h.b16 %v600
  %v2856 = vunpack.c.l.b16 %v601
  %v2857 = vunpack.c.h.b16 %v601
  %v2858 = vunpack.c.l.b16 %v602
  %v2859 = vunpack.c.h.b16 %v602
  %v2860 = vunpack.c.l.b16 %v603
  %v2861 = vunpack.c.h.b16 %v603
  %v2862 = vunpack.c.l.b16 %v604
  %v2863 = vunpack.c.h.b16 %v604
  %v2864 = vunpack.c.l.b16 %v605
  %v2865 = vunpack.c.h.b16 %v605
  %v2866 = vunpack.c.l.b16 %v606
  %v2867 = vunpack.c.h.b16 %v606
  %v2868 = vunpack.c.l.b16 %v607
  %v2869 = vunpack.c.h.b16 %v607
  %v2870 = vunpack.c.l.b16 %v608
  %v2871 = vunpack.c.h.b16 %v608
  %v2872 = vunpack.c.l.b16 %v609
  %v2873 = vunpack.c.h.b16 %v609
  %v2874 = vunpack.c.l.b16 %v610
  %v2875 = vunpack.c.h.b16 %v610
  %v2876 = vunpack.c.l.b16 %v611
  %v2877 = vunpack.c.h.b16 %v611
  %v2878 = vunpack.c.l.b16 %v612
  %v2879 = vunpack.c.h.b16 %v612
  %v2880 = vunpack.c.l.b16 %v613
  %v2881 = vunpack.c.h.b16 %v613
  %v2882 = vunpack.c.l.b16 %v614
  %v2883 = vunpack.c.h.b16 %v614
  %v2884 = vunpack.c.l.b16 %v615
  %v2885 = vunpack.c.h.b16 %v615
  %v2886 = vunpack.c.l.b16 %v616
  %v2887 = vunpack.c.h.b16 %v616
  %v2888 = vunpack.c.l.b16 %v617
  %v2889 = vunpack.c.h.b16 %v617
  %v2890 = vunpack.c.l.b16 %v618
  %v2891 = vunpack.c.h.b16 %v618
  %v2892 = vunpack.c.l.b16 %v619
  %v2893 = vunpack.c.h.b16 %v619
  %v2894 = vunpack.c.l.b16 %v620
  %v2895 = vunpack.c.h.b16 %v620
  %v2896 = vunpack.c.l.b16 %v621
  %v2897 = vunpack.c.h.b16 %v621
  %v2898 = vunpack.c.l.b16 %v622
  %v2899 = vunpack.c.h.b16 %v622
  %v2900 = vunpack.c.l.b16 %v623
  %v2901 = vunpack.c.h.b16 %v623
  %v2902 = vunpack.c.l.b16 %v624
  %v2903 = vunpack.c.h.b16 %v624
  %v2904 = vunpack.c.l.b16 %v625
  %v2905 = vunpack.c.h.b16 %v625
  %v2906 = vunpack.c.l.b16 %v626
  %v2907 = vunpack.c.h.b16 %v626
  %v2908 = vunpack.c.l.b16 %v627
  %v2909 = vunpack.c.h.b16 %v627
  %v2910 = vunpack.c.l.b16 %v628
  %v2911 = vunpack.c.h.b16 %v628
  %v2912 = vunpack.c.l.b16 %v629
  %v2913 = vunpack.c.h.b16 %v629
  %v2914 = vunpack.c.l.b16 %v630
  %v2915 = vunpack.c.h.b16 %v630
  %v2916 = vunpack.c.l.b16 %v631
  %v2917 = vunpack.c.h.b16 %v631
  %v2918 = vunpack.c.l.b16 %v632
  %v2919 = vunpack.c.h.b16 %v632
  %v2920 = vunpack.c.l.b16 %v633
  %v2921 = vunpack.c.h.b16 %v633
  %v2922 = vunpack.c.l.b16 %v634
  %v2923 = vunpack.c.h.b16 %v634
  %v2924 = vunpack.c.l.b16 %v635
  %v2925 = vunpack.c.h.b16 %v635
  %v2926 = vunpack.c.l.b16 %v636
  %v2927 = vunpack.c.h.b16 %v636
  %v2928 = vunpack.c.l.b16 %v637
  %v2929 = vunpack.c.h.b16 %v637
  %v2930 = vunpack.c.l.b16 %v638
  %v2931 = vunpack.c.h.b16 %v638
  %v2932 = vunpack.c.l.b16 %v639
  %v2933 = vunpack.c.h.b16 %v639
  %v2934 = vunpack.c.l.b16 %v640
  %v2935 = vunpack.c.h.b16 %v640
  %v2936 = vunpack.c.l.b16 %v641
  %v2937 = vunpack.c.h.b16 %v641
  %v2938 = vunpack.c.l.b16 %v642
  %v2939 = vunpack.c.h.b16 %v642
  %v2940 = vunpack.c.l.b16 %v643
  %v2941 = vunpack.c.h.b16 %v643
  %v2942 = vunpack.c.l.b16 %v644
  %v2943 = vunpack.c.h.b16 %v644
  %v2944 = vunpack.c.l.b16 %v645
  %v2945 = vunpack.c.h.b16 %v645
  %v2946 = vunpack.c.l.b16 %v646
  %v2947 = vunpack.c.h.b16 %v646
  %v2948 = vunpack.c.l.b16 %v647
  %v2949 = vunpack.c.h.b16 %v647
  %v2950 = vunpack.c.l.b16 %v648
  %v2951 = vunpack.c.h.b16 %v648
  %v2952 = vunpack.c.l.b16 %v649
  %v2953 = vunpack.c.h.b16 %v649
  %v2954 = vunpack.c.l.b16 %v650
  %v2955 = vunpack.c.h.b16 %v650
  %v2956 = vunpack.c.l.b16 %v651
  %v2957 = vunpack.c.h.b16 %v651
  %v2958 = vunpack.c.l.b16 %v652
  %v2959 = vunpack.c.h.b16 %v652
  %v2960 = vunpack.c.l.b16 %v653
  %v2961 = vunpack.c.h.b16 %v653
  %v2962 = vunpack.c.l.b16 %v654
  %v2963 = vunpack.c.h.b16 %v654
  %v2964 = vunpack.c.l.b16 %v655
  %v2965 = vunpack.c.h.b16 %v655
  %v2966 = vunpack.c.l.b16 %v656
  %v2967 = vunpack.c.h.b16 %v656
  %v2968 = vunpack.c.l.b16 %v657
  %v2969 = vunpack.c.h.b16 %v657
  %v2970 = vunpack.c.l.b16 %v658
  %v2971 = vunpack.c.h.b16 %v658
  %v2972 = vunpack.c.l.b16 %v659
  %v2973 = vunpack.c.h.b16 %v659
  %v2974 = vunpack.c.l.b16 %v660
  %v2975 = vunpack.c.h.b16 %v660
  %v2976 = vunpack.c.l.b16 %v661
  %v2977 = vunpack.c.h.b16 %v661
  %v2978 = vunpack.c.l.b16 %v662
  %v2979 = vunpack.c.h.b16 %v662
  %v2980 = vunpack.c.l.b16 %v663
  %v2981 = vunpack.c.h.b16 %v663
  %v2982 = vunpack.c.l.b16 %v664
  %v2983 = vunpack.c.h.b16 %v664
  %v2984 = vunpack.c.l.b16 %v665
  %v2985 = vunpack.c.h.b16 %v665
  %v2986 = vunpack.c.l.b16 %v666
  %v2987 = vunpack.c.h.b16 %v666
  %v2988 = vunpack.c.l.b16 %v667
  %v2989 = vunpack.c.h.b16 %v667
  %v2990 = vunpack.c.l.b16 %v668
  %v2991 = vunpack.c.h.b16 %v668
  %v2992 = vunpack.c.l.b16 %v669
  %v2993 = vunpack.c.h.b16 %v669
  %v2994 = vunpack.c.l.b16 %v670
  %v2995 = vunpack.c.h.b16 %v670
  %v2996 = vunpack.c.l.b16 %v671
  %v2997 = vunpack.c.h.b16 %v671
  %v2998 = vunpack.c.l.b16 %v672
  %v2999 = vunpack.c.h.b16 %v672
  %v3000 = vunpack.c.l.b16 %v673
  %v3001 = vunpack.c.h.b16 %v673
  %v3002 = vunpack.c.l.b16 %v674
  %v3003 = vunpack.c.h.b16 %v674
  %v3004 = vunpack.c.l.b16 %v675
  %v3005 = vunpack.c.h.b16 %v675
  %v3006 = vunpack.c.l.b16 %v676
  %v3007 = vunpack.c.h.b16 %v676
  %v3008 = vunpack.c.l.b16 %v677
  %v3009 = vunpack.c.h.b16 %v677
  %v3010 = vunpack.c.l.b16 %v678
  %v3011 = vunpack.c.h.b16 %v678
  %v3012 = vunpack.c.l.b16 %v679
  %v3013 = vunpack.c.h.b16 %v679
  %v3014 = vunpack.c.l.b16 %v680
  %v3015 = vunpack.c.h.b16 %v680
  %v3016 = vunpack.c.l.b16 %v681
  %v3017 = vunpack.c.h.b16 %v681
  %v3018 = vunpack.c.l.b16 %v682
  %v3019 = vunpack.c.h.b16 %v682
  %v3020 = vunpack.c.l.b16 %v683
  %v3021 = vunpack.c.h.b16 %v683
  %v3022 = vunpack.c.l.b16 %v684
  %v3023 = vunpack.c.h.b16 %v684
  %v3024 = vunpack.c.l.b16 %v685
  %v3025 = vunpack.c.h.b16 %v685
  %v3026 = vunpack.c.l.b16 %v686
  %v3027 = vunpack.c.h.b16 %v686
  %v3028 = vunpack.c.l.b16 %v687
  %v3029 = vunpack.c.h.b16 %v687
  %v3030 = vunpack.c.l.b16 %v688
  %v3031 = vunpack.c.h.b16 %v688
  %v3032 = vunpack.c.l.b16 %v689
  %v3033 = vunpack.c.h.b16 %v689
  %v3034 = vunpack.c.l.b16 %v690
  %v3035 = vunpack.c.h.b16 %v690
  %v3036 = vunpack.c.l.b16 %v691
  %v3037 = vunpack.c.h.b16 %v691
  %v3038 = vunpack.c.l.b16 %v692
  %v3039 = vunpack.c.h.b16 %v692
  %v3040 = vunpack.c.l.b16 %v693
  %v3041 = vunpack.c.h.b16 %v693
  %v3042 = vunpack.c.l.b16 %v694
  %v3043 = vunpack.c.h.b16 %v694
  %v3044 = vunpack.c.l.b16 %v695
  %v3045 = vunpack.c.h.b16 %v695
  %v3046 = vunpack.c.l.b16 %v696
  %v3047 = vunpack.c.h.b16 %v696
  %v3048 = vunpack.c.l.b16 %v697
  %v3049 = vunpack.c.h.b16 %v697
  %v3050 = vunpack.c.l.b16 %v698
  %v3051 = vunpack.c.h.b16 %v698
  %v3052 = vunpack.c.l.b16 %v699
  %v3053 = vunpack.c.h.b16 %v699
  %v3054 = vunpack.c.l.b16 %v700
  %v3055 = vunpack.c.h.b16 %v700
  %v3056 = vunpack.c.l.b16 %v701
  %v3057 = vunpack.c.h.b16 %v701
  %v3058 = vunpack.c.l.b16 %v702
  %v3059 = vunpack.c.h.b16 %v702
  %v3060 = vunpack.c.l.b16 %v703
  %v3061 = vunpack.c.h.b16 %v703
  %v3062 = vunpack.c.l.b16 %v704
  %v3063 = vunpack.c.h.b16 %v704
  %v3064 = vunpack.c.l.b16 %v705
  %v3065 = vunpack.c.h.b16 %v705
  %v3066 = vunpack.c.l.b16 %v706
  %v3067 = vunpack.c.h.b16 %v706
  %v3068 = vunpack.c.l.b16 %v707
  %v3069 = vunpack.c.h.b16 %v707
  %v3070 = vunpack.c.l.b16 %v708
  %v3071 = vunpack.c.h.b16 %v708
  %v3072 = vunpack.c.l.b16 %v709
  %v3073 = vunpack.c.h.b16 %v709
  %v3074 = vunpack.c.l.b16 %v710
  %v3075 = vunpack.c.h.b16 %v710
  %v3076 = vunpack.c.l.b16 %v711
  %v3077 = vunpack.c.h.b16 %v711
  %v3078 = vunpack.c.l.b16 %v712
  %v3079 = vunpack.c.h.b16 %v712
  %v3080 = vunpack.c.l.b16 %v713
  %v3081 = vunpack.c.h.b16 %v713
  %v3082 = vunpack.c.l.b16 %v714
  %v3083 = vunpack.c.h.b16 %v714
  %v3084 = vunpack.c.l.b16 %v715
  %v3085 = vunpack.c.h.b16 %v715
  %v3086 = vunpack.c.l.b16 %v716
  %v3087 = vunpack.c.h.b16 %v716
  %v3088 = vunpack.c.l.b16 %v717
  %v3089 = vunpack.c.h.b16 %v717
  %v3090 = vunpack.c.l.b16 %v718
  %v3091 = vunpack.c.h.b16 %v718
  %v3092 = vunpack.c.l.b16 %v719
  %v3093 = vunpack.c.h.b16 %v719
  %v3094 = vunpack.c.l.b16 %v720
  %v3095 = vunpack.c.h.b16 %v720
  %v3096 = vunpack.c.l.b16 %v721
  %v3097 = vunpack.c.h.b16 %v721
  %v3098 = vunpack.c.l.b16 %v722
  %v3099 = vunpack.c.h.b16 %v722
  %v3100 = vunpack.c.l.b16 %v723
  %v3101 = vunpack.c.h.b16 %v723
  %v3102 = vunpack.c.l.b16 %v724
  %v3103 = vunpack.c.h.b16 %v724
  %v3104 = vunpack.c.l.b16 %v725
  %v3105 = vunpack.c.h.b16 %v725
  %v3106 = vunpack.c.l.b16 %v726
  %v3107 = vunpack.c.h.b16 %v726
  %v3108 = vunpack.c.l.b16 %v727
  %v3109 = vunpack.c.h.b16 %v727
  %v3110 = vunpack.c.l.b16 %v728
  %v3111 = vunpack.c.h.b16 %v728
  %v3112 = vunpack.c.l.b16 %v729
  %v3113 = vunpack.c.h.b16 %v729
  %v3114 = vunpack.c.l.b16 %v730
  %v3115 = vunpack.c.h.b16 %v730
  %v3116 = vunpack.c.l.b16 %v731
  %v3117 = vunpack.c.h.b16 %v731
  %v3118 = vunpack.c.l.b16 %v732
  %v3119 = vunpack.c.h.b16 %v732
  %v3120 = vunpack.c.l.b16 %v733
  %v3121 = vunpack.c.h.b16 %v733
  %v3122 = vunpack.c.l.b16 %v734
  %v3123 = vunpack.c.h.b16 %v734
  %v3124 = vunpack.c.l.b16 %v735
  %v3125 = vunpack.c.h.b16 %v735
  %v3126 = vunpack.c.l.b16 %v736
  %v3127 = vunpack.c.h.b16 %v736
  %v3128 = vunpack.c.l.b16 %v737
  %v3129 = vunpack.c.h.b16 %v737
  %v3130 = vunpack.c.l.b16 %v738
  %v3131 = vunpack.c.h.b16 %v738
  %v3132 = vunpack.c.l.b16 %v739
  %v3133 = vunpack.c.h.b16 %v739
  %v3134 = vunpack.c.l.b16 %v740
  %v3135 = vunpack.c.h.b16 %v740
  %v3136 = vunpack.c.l.b16 %v741
  %v3137 = vunpack.c.h.b16 %v741
  %v3138 = vunpack.c.l.b16 %v742
  %v3139 = vunpack.c.h.b16 %v742
  %v3140 = vunpack.c.l.b16 %v743
  %v3141 = vunpack.c.h.b16 %v743
  %v3142 = vunpack.c.l.b16 %v744
  %v3143 = vunpack.c.h.b16 %v744
  %v3144 = vunpack.c.l.b16 %v745
  %v3145 = vunpack.c.h.b16 %v745
  %v3146 = vunpack.c.l.b16 %v746
  %v3147 = vunpack.c.h.b16 %v746
  %v3148 = vunpack.c.l.b16 %v747
  %v3149 = vunpack.c.h.b16 %v747
  %v3150 = vunpack.c.l.b16 %v748
  %v3151 = vunpack.c.h.b16 %v748
  %v3152 = vunpack.c.l.b16 %v749
  %v3153 = vunpack.c.h.b16 %v749
  %v3154 = vunpack.c.l.b16 %v750
  %v3155 = vunpack.c.h.b16 %v750
  %v3156 = vunpack.c.l.b16 %v751
  %v3157 = vunpack.c.h.b16 %v751
  %v3158 = vunpack.c.l.b16 %v752
  %v3159 = vunpack.c.h.b16 %v752
  %v3160 = vunpack.c.l.b16 %v753
  %v3161 = vunpack.c.h.b16 %v753
  %v3162 = vunpack.c.l.b16 %v754
  %v3163 = vunpack.c.h.b16 %v754
  %v3164 = vunpack.c.l.b16 %v755
  %v3165 = vunpack.c.h.b16 %v755
  %v3166 = vunpack.c.l.b16 %v756
  %v3167 = vunpack.c.h.b16 %v756
  %v3168 = vunpack.c.l.b16 %v757
  %v3169 = vunpack.c.h.b16 %v757
  %v3170 = vunpack.c.l.b16 %v758
  %v3171 = vunpack.c.h.b16 %v758
  %v3172 = vunpack.c.l.b16 %v759
  %v3173 = vunpack.c.h.b16 %v759
  %v3174 = vunpack.c.l.b16 %v760
  %v3175 = vunpack.c.h.b16 %v760
  %v3176 = vunpack.c.l.b16 %v761
  %v3177 = vunpack.c.h.b16 %v761
  %v3178 = vunpack.c.l.b16 %v762
  %v3179 = vunpack.c.h.b16 %v762
  %v3180 = vunpack.c.l.b16 %v763
  %v3181 = vunpack.c.h.b16 %v763
  %v3182 = vunpack.c.l.b16 %v764
  %v3183 = vunpack.c.h.b16 %v764
  %v3184 = vunpack.c.l.b16 %v765
  %v3185 = vunpack.c.h.b16 %v765
  %v3186 = vunpack.c.l.b16 %v766
  %v3187 = vunpack.c.h.b16 %v766
  %v3188 = vunpack.c.l.b16 %v767
  %v3189 = vunpack.c.h.b16 %v767
  %v3190 = vunpack.c.l.b16 %v768
  %v3191 = vunpack.c.h.b16 %v768
  %v3192 = vunpack.c.l.b16 %v769
  %v3193 = vunpack.c.h.b16 %v769
  %v3194 = vunpack.c.l.b16 %v770
  %v3195 = vunpack.c.h.b16 %v770
  %v3196 = vunpack.c.l.b16 %v771
  %v3197 = vunpack.c.h.b16 %v771
  %v3198 = vunpack.c.l.b16 %v772
  %v3199 = vunpack.c.h.b16 %v772
  %v3200 = vunpack.c.l.b16 %v773
  %v3201 = vunpack.c.h.b16 %v773
  %v3202 = vunpack.c.l.b16 %v774
  %v3203 = vunpack.c.h.b16 %v774
  %v3204 = vunpack.c.l.b16 %v775
  %v3205 = vunpack.c.h.b16 %v775
  %v3206 = vunpack.c.l.b16 %v776
  %v3207 = vunpack.c.h.b16 %v776
  %v3208 = vunpack.c.l.b16 %v777
  %v3209 = vunpack.c.h.b16 %v777
  %v3210 = vunpack.c.l.b16 %v778
  %v3211 = vunpack.c.h.b16 %v778
  %v3212 = vunpack.c.l.b16 %v779
  %v3213 = vunpack.c.h.b16 %v779
  %v3214 = vunpack.c.l.b16 %v780
  %v3215 = vunpack.c.h.b16 %v780
  %v3216 = vunpack.c.l.b16 %v781
  %v3217 = vunpack.c.h.b16 %v781
  %v3218 = vunpack.c.l.b16 %v782
  %v3219 = vunpack.c.h.b16 %v782
  %v3220 = vunpack.c.l.b16 %v783
  %v3221 = vunpack.c.h.b16 %v783
  %v3222 = vunpack.c.l.b16 %v784
  %v3223 = vunpack.c.h.b16 %v784
  %v3224 = vunpack.c.l.b16 %v785
  %v3225 = vunpack.c.h.b16 %v785
  %v3226 = vunpack.c.l.b16 %v786
  %v3227 = vunpack.c.h.b16 %v786
  %v3228 = vunpack.c.l.b16 %v787
  %v3229 = vunpack.c.h.b16 %v787
  %v3230 = vunpack.c.l.b16 %v788
  %v3231 = vunpack.c.h.b16 %v788
  %v3232 = vunpack.c.l.b16 %v789
  %v3233 = vunpack.c.h.b16 %v789
  %v3234 = vunpack.c.l.b16 %v790
  %v3235 = vunpack.c.h.b16 %v790
  %v3236 = vunpack.c.l.b16 %v791
  %v3237 = vunpack.c.h.b16 %v791
  %v3238 = vunpack.c.l.b16 %v792
  %v3239 = vunpack.c.h.b16 %v792
  %v3240 = vunpack.c.l.b16 %v793
  %v3241 = vunpack.c.h.b16 %v793
  %v3242 = vunpack.c.l.b16 %v794
  %v3243 = vunpack.c.h.b16 %v794
  %v3244 = vunpack.c.l.b16 %v795
  %v3245 = vunpack.c.h.b16 %v795
  %v3246 = vunpack.c.l.b16 %v796
  %v3247 = vunpack.c.h.b16 %v796
  %v3248 = vunpack.c.l.b16 %v797
  %v3249 = vunpack.c.h.b16 %v797
  %v3250 = vunpack.c.l.b16 %v798
  %v3251 = vunpack.c.h.b16 %v798
  %v3252 = vunpack.c.l.b16 %v799
  %v3253 = vunpack.c.h.b16 %v799
  %v3254 = vunpack.c.l.b16 %v800
  %v3255 = vunpack.c.h.b16 %v800
  %v3256 = vunpack.c.l.b16 %v801
  %v3257 = vunpack.c.h.b16 %v801
  %v3258 = vunpack.c.l.b16 %v802
  %v3259 = vunpack.c.h.b16 %v802
  %v3260 = vunpack.c.l.b16 %v803
  %v3261 = vunpack.c.h.b16 %v803
  %v3262 = vunpack.c.l.b16 %v804
  %v3263 = vunpack.c.h.b16 %v804
  %v3264 = vunpack.c.l.b16 %v805
  %v3265 = vunpack.c.h.b16 %v805
  %v3266 = vunpack.c.l.b16 %v806
  %v3267 = vunpack.c.h.b16 %v806
  %v3268 = vunpack.c.l.b16 %v807
  %v3269 = vunpack.c.h.b16 %v807
  %v3270 = vunpack.c.l.b16 %v808
  %v3271 = vunpack.c.h.b16 %v808
  %v3272 = vunpack.c.l.b16 %v809
  %v3273 = vunpack.c.h.b16 %v809
  %v3274 = vunpack.c.l.b16 %v810
  %v3275 = vunpack.c.h.b16 %v810
  %v3276 = vunpack.c.l.b16 %v811
  %v3277 = vunpack.c.h.b16 %v811
  %v3278 = vunpack.c.l.b16 %v812
  %v3279 = vunpack.c.h.b16 %v812
  %v3280 = vunpack.c.l.b16 %v813
  %v3281 = vunpack.c.h.b16 %v813
  %v3282 = vunpack.c.l.b16 %v814
  %v3283 = vunpack.c.h.b16 %v814
  %v3284 = vunpack.c.l.b16 %v815
  %v3285 = vunpack.c.h.b16 %v815
  %v3286 = vunpack.c.l.b16 %v816
  %v3287 = vunpack.c.h.b16 %v816
  %v3288 = vunpack.c.l.b16 %v817
  %v3289 = vunpack.c.h.b16 %v817
  %v3290 = vunpack.c.l.b16 %v818
  %v3291 = vunpack.c.h.b16 %v818
  %v3292 = vunpack.c.l.b16 %v819
  %v3293 = vunpack.c.h.b16 %v819
  %v3294 = vunpack.c.l.b16 %v820
  %v3295 = vunpack.c.h.b16 %v820
  %v3296 = vunpack.c.l.b16 %v821
  %v3297 = vunpack.c.h.b16 %v821
  %v3298 = vunpack.c.l.b16 %v822
  %v3299 = vunpack.c.h.b16 %v822
  %v3300 = vunpack.c.l.b16 %v823
  %v3301 = vunpack.c.h.b16 %v823
  %v3302 = vunpack.c.l.b16 %v824
  %v3303 = vunpack.c.h.b16 %v824
  %v3304 = vunpack.c.l.b16 %v825
  %v3305 = vunpack.c.h.b16 %v825
  %v3306 = vunpack.c.l.b16 %v826
  %v3307 = vunpack.c.h.b16 %v826
  %v3308 = vunpack.c.l.b16 %v827
  %v3309 = vunpack.c.h.b16 %v827
  %v3310 = vunpack.c.l.b16 %v828
  %v3311 = vunpack.c.h.b16 %v828
  %v3312 = vunpack.c.l.b16 %v829
  %v3313 = vunpack.c.h.b16 %v829
  %v3314 = vunpack.c.l.b16 %v830
  %v3315 = vunpack.c.h.b16 %v830
  %v3316 = vunpack.c.l.b16 %v831
  %v3317 = vunpack.c.h.b16 %v831
  %v3318 = vunpack.c.l.b16 %v832
  %v3319 = vunpack.c.h.b16 %v832
  %v3320 = vpack.c.b16 %v1756, %v1752
  %v3321 = vpack.c.b16 %v1757, %v1753
  %v3322 = vpack.c.b16 %v1758, %v1754
  %v3323 = vpack.c.b16 %v1759, %v1755
  %v3324 = vpack.c.b16 %v1764, %v1760
  %v3325 = vpack.c.b16 %v1765, %v1761
  %v3326 = vpack.c.b16 %v1766, %v1762
  %v3327 = vpack.c.b16 %v1767, %v1763
  %v3328 = vpack.c.b16 %v1772, %v1768
  %v3329 = vpack.c.b16 %v1773, %v1769
  %v3330 = vpack.c.b16 %v1774, %v1770
  %v3331 = vpack.c.b16 %v1775, %v1771
  %v3332 = vpack.c.b16 %v1780, %v1776
  %v3333 = vpack.c.b16 %v1781, %v1777
  %v3334 = vpack.c.b16 %v1782, %v1778
  %v3335 = vpack.c.b16 %v1783, %v1779
  %v3336 = vpack.c.b16 %v1788, %v1784
  %v3337 = vpack.c.b16 %v1789, %v1785
  %v3338 = vpack.c.b16 %v1790, %v1786
  %v3339 = vpack.c.b16 %v1791, %v1787
  %v3340 = vpack.c.b16 %v1796, %v1792
  %v3341 = vpack.c.b16 %v1797, %v1793
  %v3342 = vpack.c.b16 %v1798, %v1794
  %v3343 = vpack.c.b16 %v1799, %v1795
  %v3344 = vpack.c.b16 %v1804, %v1800
  %v3345 = vpack.c.b16 %v1805, %v1801
  %v3346 = vpack.c.b16 %v1806, %v1802
  %v3347 = vpack.c.b16 %v1807, %v1803
  %v3348 = vpack.c.b16 %v1812, %v1808
  %v3349 = vpack.c.b16 %v1813, %v1809
  %v3350 = vpack.c.b16 %v1814, %v1810
  %v3351 = vpack.c.b16 %v1815, %v1811
  %v3352 = vpack.c.b16 %v1820, %v1816
  %v3353 = vpack.c.b16 %v1821, %v1817
  %v3354 = vpack.c.b16 %v1822, %v1818
  %v3355 = vpack.c.b16 %v1823, %v1819
  %v3356 = vpack.c.b16 %v1828, %v1824
  %v3357 = vpack.c.b16 %v1829, %v1825
  %v3358 = vpack.c.b16 %v1830, %v1826
  %v3359 = vpack.c.b16 %v1831, %v1827
  %v3360 = vpack.c.b16 %v1836, %v1832
  %v3361 = vpack.c.b16 %v1837, %v1833
  %v3362 = vpack.c.b16 %v1838, %v1834
  %v3363 = vpack.c.b16 %v1839, %v1835
  %v3364 = vpack.c.b16 %v1844, %v1840
  %v3365 = vpack.c.b16 %v1845, %v1841
  %v3366 = vpack.c.b16 %v1846, %v1842
  %v3367 = vpack.c.b16 %v1847, %v1843
  %v3368 = vpack.c.b16 %v1852, %v1848
  %v3369 = vpack.c.b16 %v1853, %v1849
  %v3370 = vpack.c.b16 %v1854, %v1850
  %v3371 = vpack.c.b16 %v1855, %v1851
  %v3372 = vpack.c.b16 %v1860, %v1856
  %v3373 = vpack.c.b16 %v1861, %v1857
  %v3374 = vpack.c.b16 %v1862, %v1858
  %v3375 = vpack.c.b16 %v1863, %v1859
  %v3376 = vpack.c.b16 %v1868, %v1864
  %v3377 = vpack.c.b16 %v1869, %v1865
  %v3378 = vpack.c.b16 %v1870, %v1866
  %v3379 = vpack.c.b16 %v1871, %v1867
  %v3380 = vpack.c.b16 %v1876, %v1872
  %v3381 = vpack.c.b16 %v1877, %v1873
  %v3382 = vpack.c.b16 %v1878, %v1874
  %v3383 = vpack.c.b16 %v1879, %v1875
  %v3384 = vpack.c.b16 %v1884, %v1880
  %v3385 = vpack.c.b16 %v1885, %v1881
  %v3386 = vpack.c.b16 %v1886, %v1882
  %v3387 = vpack.c.b16 %v1887, %v1883
  %v3388 = vpack.c.b16 %v1892, %v1888
  %v3389 = vpack.c.b16 %v1893, %v1889
  %v3390 = vpack.c.b16 %v1894, %v1890
  %v3391 = vpack.c.b16 %v1895, %v1891
  %v3392 = vpack.c.b16 %v1900, %v1896
  %v3393 = vpack.c.b16 %v1901, %v1897
  %v3394 = vpack.c.b16 %v1902, %v1898
  %v3395 = vpack.c.b16 %v1903, %v1899
  %v3396 = vpack.c.b16 %v1908, %v1904
  %v3397 = vpack.c.b16 %v1909, %v1905
  %v3398 = vpack.c.b16 %v1910, %v1906
  %v3399 = vpack.c.b16 %v1911, %v1907
  %v3400 = vpack.c.b16 %v1916, %v1912
  %v3401 = vpack.c.b16 %v1917, %v1913
  %v3402 = vpack.c.b16 %v1918, %v1914
  %v3403 = vpack.c.b16 %v1919, %v1915
  %v3404 = vpack.c.b16 %v1924, %v1920
  %v3405 = vpack.c.b16 %v1925, %v1921
  %v3406 = vpack.c.b16 %v1926, %v1922
  %v3407 = vpack.c.b16 %v1927, %v1923
  %v3408 = vpack.c.b16 %v1932, %v1928
  %v3409 = vpack.c.b16 %v1933, %v1929
  %v3410 = vpack.c.b16 %v1934, %v1930
  %v3411 = vpack.c.b16 %v1935, %v1931
  %v3412 = vpack.c.b16 %v1940, %v1936
  %v3413 = vpack.c.b16 %v1941, %v1937
  %v3414 = vpack.c.b16 %v1942, %v1938
  %v3415 = vpack.c.b16 %v1943, %v1939
  %v3416 = vpack.c.b16 %v1948, %v1944
  %v3417 = vpack.c.b16 %v1949, %v1945
  %v3418 = vpack.c.b16 %v1950, %v1946
  %v3419 = vpack.c.b16 %v1951, %v1947
  %v3420 = vpack.c.b16 %v1956, %v1952
  %v3421 = vpack.c.b16 %v1957, %v1953
  %v3422 = vpack.c.b16 %v1958, %v1954
  %v3423 = vpack.c.b16 %v1959, %v1955
  %v3424 = vpack.c.b16 %v1964, %v1960
  %v3425 = vpack.c.b16 %v1965, %v1961
  %v3426 = vpack.c.b16 %v1966, %v1962
  %v3427 = vpack.c.b16 %v1967, %v1963
  %v3428 = vpack.c.b16 %v1972, %v1968
  %v3429 = vpack.c.b16 %v1973, %v1969
  %v3430 = vpack.c.b16 %v1974, %v1970
  %v3431 = vpack.c.b16 %v1975, %v1971
  %v3432 = vpack.c.b16 %v1980, %v1976
  %v3433 = vpack.c.b16 %v1981, %v1977
  %v3434 = vpack.c.b16 %v1982, %v1978
  %v3435 = vpack.c.b16 %v1983, %v1979
  %v3436 = vpack.c.b16 %v1988, %v1984
  %v3437 = vpack.c.b16 %v1989, %v1985
  %v3438 = vpack.c.b16 %v1990, %v1986
  %v3439 = vpack.c.b16 %v1991, %v1987
  %v3440 = vpack.c.b16 %v1996, %v1992
  %v3441 = vpack.c.b16 %v1997, %v1993
  %v3442 = vpack.c.b16 %v1998, %v1994
  %v3443 = vpack.c.b16 %v1999, %v1995
  %v3444 = vpack.c.b16 %v2004, %v2000
  %v3445 = vpack.c.b16 %v2005, %v2001
  %v3446 = vpack.c.b16 %v2006, %v2002
  %v3447 = vpack.c.b16 %v2007, %v2003
  %v3448 = vpack.c.b16 %v2012, %v2008
  %v3449 = vpack.c.b16 %v2013, %v2009
  %v3450 = vpack.c.b16 %v2014, %v2010
  %v3451 = vpack.c.b16 %v2015, %v2011
  %v3452 = vpack.c.b16 %v2020, %v2016
  %v3453 = vpack.c.b16 %v2021, %v2017
  %v3454 = vpack.c.b16 %v2022, %v2018
  %v3455 = vpack.c.b16 %v2023, %v2019
  %v3456 = vpack.c.b16 %v2028, %v2024
  %v3457 = vpack.c.b16 %v2029, %v2025
  %v3458 = vpack.c.b16 %v2030, %v2026
  %v3459 = vpack.c.b16 %v2031, %v2027
  %v3460 = vpack.c.b16 %v2036, %v2032
  %v3461 = vpack.c.b16 %v2037, %v2033
  %v3462 = vpack.c.b16 %v2038, %v2034
  %v3463 = vpack.c.b16 %v2039, %v2035
  %v3464 = vpack.c.b16 %v2044, %v2040
  %v3465 = vpack.c.b16 %v2045, %v2041
  %v3466 = vpack.c.b16 %v2046, %v2042
  %v3467 = vpack.c.b16 %v2047, %v2043
  %v3468 = vpack.c.b16 %v2052, %v2048
  %v3469 = vpack.c.b16 %v2053, %v2049
  %v3470 = vpack.c.b16 %v2054, %v2050
  %v3471 = vpack.c.b16 %v2055, %v2051
  %v3472 = vpack.c.b16 %v2060, %v2056
  %v3473 = vpack.c.b16 %v2061, %v2057
  %v3474 = vpack.c.b16 %v2062, %v2058
  %v3475 = vpack.c.b16 %v2063, %v2059
  %v3476 = vpack.c.b16 %v2068, %v2064
  %v3477 = vpack.c.b16 %v2069, %v2065
  %v3478 = vpack.c.b16 %v2070, %v2066
  %v3479 = vpack.c.b16 %v2071, %v2067
  %v3480 = vpack.c.b16 %v2076, %v2072
  %v3481 = vpack.c.b16 %v2077, %v2073
  %v3482 = vpack.c.b16 %v2078, %v2074
  %v3483 = vpack.c.b16 %v2079, %v2075
  %v3484 = vpack.c.b16 %v2084, %v2080
  %v3485 = vpack.c.b16 %v2085, %v2081
  %v3486 = vpack.c.b16 %v2086, %v2082
  %v3487 = vpack.c.b16 %v2087, %v2083
  %v3488 = vpack.c.b16 %v2092, %v2088
  %v3489 = vpack.c.b16 %v2093, %v2089
  %v3490 = vpack.c.b16 %v2094, %v2090
  %v3491 = vpack.c.b16 %v2095, %v2091
  %v3492 = vpack.c.b16 %v2100, %v2096
  %v3493 = vpack.c.b16 %v2101, %v2097
  %v3494 = vpack.c.b16 %v2102, %v2098
  %v3495 = vpack.c.b16 %v2103, %v2099
  %v3496 = vpack.c.b16 %v2108, %v2104
  %v3497 = vpack.c.b16 %v2109, %v2105
  %v3498 = vpack.c.b16 %v2110, %v2106
  %v3499 = vpack.c.b16 %v2111, %v2107
  %v3500 = vpack.c.b16 %v2116, %v2112
  %v3501 = vpack.c.b16 %v2117, %v2113
  %v3502 = vpack.c.b16 %v2118, %v2114
  %v3503 = vpack.c.b16 %v2119, %v2115
  %v3504 = vpack.c.b16 %v2124, %v2120
  %v3505 = vpack.c.b16 %v2125, %v2121
  %v3506 = vpack.c.b16 %v2126, %v2122
  %v3507 = vpack.c.b16 %v2127, %v2123
  %v3508 = vpack.c.b16 %v2132, %v2128
  %v3509 = vpack.c.b16 %v2133, %v2129
  %v3510 = vpack.c.b16 %v2134, %v2130
  %v3511 = vpack.c.b16 %v2135, %v2131
  %v3512 = vpack.c.b16 %v2140, %v2136
  %v3513 = vpack.c.b16 %v2141, %v2137
  %v3514 = vpack.c.b16 %v2142, %v2138
  %v3515 = vpack.c.b16 %v2143, %v2139
  %v3516 = vpack.c.b16 %v2148, %v2144
  %v3517 = vpack.c.b16 %v2149, %v2145
  %v3518 = vpack.c.b16 %v2150, %v2146
  %v3519 = vpack.c.b16 %v2151, %v2147
  %v3520 = vpack.c.b16 %v2156, %v2152
  %v3521 = vpack.c.b16 %v2157, %v2153
  %v3522 = vpack.c.b16 %v2158, %v2154
  %v3523 = vpack.c.b16 %v2159, %v2155
  %v3524 = vpack.c.b16 %v2164, %v2160
  %v3525 = vpack.c.b16 %v2165, %v2161
  %v3526 = vpack.c.b16 %v2166, %v2162
  %v3527 = vpack.c.b16 %v2167, %v2163
  %v3528 = vpack.c.b16 %v2172, %v2168
  %v3529 = vpack.c.b16 %v2173, %v2169
  %v3530 = vpack.c.b16 %v2174, %v2170
  %v3531 = vpack.c.b16 %v2175, %v2171
  %v3532 = vpack.c.b16 %v2180, %v2176
  %v3533 = vpack.c.b16 %v2181, %v2177
  %v3534 = vpack.c.b16 %v2182, %v2178
  %v3535 = vpack.c.b16 %v2183, %v2179
  %v3536 = vpack.c.b16 %v2188, %v2184
  %v3537 = vpack.c.b16 %v2189, %v2185
  %v3538 = vpack.c.b16 %v2190, %v2186
  %v3539 = vpack.c.b16 %v2191, %v2187
  %v3540 = vpack.c.b16 %v2196, %v2192
  %v3541 = vpack.c.b16 %v2197, %v2193
  %v3542 = vpack.c.b16 %v2198, %v2194
  %v3543 = vpack.c.b16 %v2199, %v2195
  %v3544 = vpack.c.b16 %v2204, %v2200
  %v3545 = vpack.c.b16 %v2205, %v2201
  %v3546 = vpack.c.b16 %v2206, %v2202
  %v3547 = vpack.c.b16 %v2207, %v2203
  %v3548 = vpack.c.b16 %v2212, %v2208
  %v3549 = vpack.c.b16 %v2213, %v2209
  %v3550 = vpack.c.b16 %v2214, %v2210
  %v3551 = vpack.c.b16 %v2215, %v2211
  %v3552 = vpack.c.b16 %v2220, %v2216
  %v3553 = vpack.c.b16 %v2221, %v2217
  %v3554 = vpack.c.b16 %v2222, %v2218
  %v3555 = vpack.c.b16 %v2223, %v2219
  %v3556 = vpack.c.b16 %v2228, %v2224
  %v3557 = vpack.c.b16 %v2229, %v2225
  %v3558 = vpack.c.b16 %v2230, %v2226
  %v3559 = vpack.c.b16 %v2231, %v2227
  %v3560 = vpack.c.b16 %v2236, %v2232
  %v3561 = vpack.c.b16 %v2237, %v2233
  %v3562 = vpack.c.b16 %v2238, %v2234
  %v3563 = vpack.c.b16 %v2239, %v2235
  %v3564 = vpack.c.b16 %v2244, %v2240
  %v3565 = vpack.c.b16 %v2245, %v2241
  %v3566 = vpack.c.b16 %v2246, %v2242
  %v3567 = vpack.c.b16 %v2247, %v2243
  %v3568 = vpack.c.b16 %v2252, %v2248
  %v3569 = vpack.c.b16 %v2253, %v2249
  %v3570 = vpack.c.b16 %v2254, %v2250
  %v3571 = vpack.c.b16 %v2255, %v2251
  %v3572 = vpack.c.b16 %v2260, %v2256
  %v3573 = vpack.c.b16 %v2261, %v2257
  %v3574 = vpack.c.b16 %v2262, %v2258
  %v3575 = vpack.c.b16 %v2263, %v2259
  %v3576 = vpack.c.b16 %v2268, %v2264
  %v3577 = vpack.c.b16 %v2269, %v2265
  %v3578 = vpack.c.b16 %v2270, %v2266
  %v3579 = vpack.c.b16 %v2271, %v2267
  %v3580 = vpack.c.b16 %v2276, %v2272
  %v3581 = vpack.c.b16 %v2277, %v2273
  %v3582 = vpack.c.b16 %v2278, %v2274
  %v3583 = vpack.c.b16 %v2279, %v2275
  %v3584 = vpack.c.b16 %v2284, %v2280
  %v3585 = vpack.c.b16 %v2285, %v2281
  %v3586 = vpack.c.b16 %v2286, %v2282
  %v3587 = vpack.c.b16 %v2287, %v2283
  %v3588 = vpack.c.b16 %v2292, %v2288
  %v3589 = vpack.c.b16 %v2293, %v2289
  %v3590 = vpack.c.b16 %v2294, %v2290
  %v3591 = vpack.c.b16 %v2295, %v2291
  %v3592 = vpack.c.b16 %v2300, %v2296
  %v3593 = vpack.c.b16 %v2301, %v2297
  %v3594 = vpack.c.b16 %v2302, %v2298
  %v3595 = vpack.c.b16 %v2303, %v2299
  %v3596 = vpack.c.b16 %v2308, %v2304
  %v3597 = vpack.c.b16 %v2309, %v2305
  %v3598 = vpack.c.b16 %v2310, %v2306
  %v3599 = vpack.c.b16 %v2311, %v2307
  %v3600 = vpack.c.b16 %v2316, %v2312
  %v3601 = vpack.c.b16 %v2317, %v2313
  %v3602 = vpack.c.b16 %v2318, %v2314
  %v3603 = vpack.c.b16 %v2319, %v2315
  %v3604 = vpack.c.b16 %v2324, %v2320
  %v3605 = vpack.c.b16 %v2325, %v2321
  %v3606 = vpack.c.b16 %v2326, %v2322
  %v3607 = vpack.c.b16 %v2327, %v2323
  %v3608 = vpack.c.b16 %v2332, %v2328
  %v3609 = vpack.c.b16 %v2333, %v2329
  %v3610 = vpack.c.b16 %v2334, %v2330
  %v3611 = vpack.c.b16 %v2335, %v2331
  %v3612 = vpack.c.b16 %v2340, %v2336
  %v3613 = vpack.c.b16 %v2341, %v2337
  %v3614 = vpack.c.b16 %v2342, %v2338
  %v3615 = vpack.c.b16 %v2343, %v2339
  %v3616 = vpack.c.b16 %v2348, %v2344
  %v3617 = vpack.c.b16 %v2349, %v2345
  %v3618 = vpack.c.b16 %v2350, %v2346
  %v3619 = vpack.c.b16 %v2351, %v2347
  %v3620 = vpack.c.b16 %v2356, %v2352
  %v3621 = vpack.c.b16 %v2357, %v2353
  %v3622 = vpack.c.b16 %v2358, %v2354
  %v3623 = vpack.c.b16 %v2359, %v2355
  %v3624 = vpack.c.b16 %v2364, %v2360
  %v3625 = vpack.c.b16 %v2365, %v2361
  %v3626 = vpack.c.b16 %v2366, %v2362
  %v3627 = vpack.c.b16 %v2367, %v2363
  %v3628 = vpack.c.b16 %v2372, %v2368
  %v3629 = vpack.c.b16 %v2373, %v2369
  %v3630 = vpack.c.b16 %v2374, %v2370
  %v3631 = vpack.c.b16 %v2375, %v2371
  %v3632 = vpack.c.b16 %v2380, %v2376
  %v3633 = vpack.c.b16 %v2381, %v2377
  %v3634 = vpack.c.b16 %v2382, %v2378
  %v3635 = vpack.c.b16 %v2383, %v2379
  %v3636 = vpack.c.b16 %v2388, %v2384
  %v3637 = vpack.c.b16 %v2389, %v2385
  %v3638 = vpack.c.b16 %v2390, %v2386
  %v3639 = vpack.c.b16 %v2391, %v2387
  %v3640 = vpack.c.b16 %v2396, %v2392
  %v3641 = vpack.c.b16 %v2397, %v2393
  %v3642 = vpack.c.b16 %v2398, %v2394
  %v3643 = vpack.c.b16 %v2399, %v2395
  %v3644 = vpack.c.b16 %v2404, %v2400
  %v3645 = vpack.c.b16 %v2405, %v2401
  %v3646 = vpack.c.b16 %v2406, %v2402
  %v3647 = vpack.c.b16 %v2407, %v2403
  %v3648 = vpack.c.b16 %v2412, %v2408
  %v3649 = vpack.c.b16 %v2413, %v2409
  %v3650 = vpack.c.b16 %v2414, %v2410
  %v3651 = vpack.c.b16 %v2415, %v2411
  %v3652 = vpack.c.b16 %v2420, %v2416
  %v3653 = vpack.c.b16 %v2421, %v2417
  %v3654 = vpack.c.b16 %v2422, %v2418
  %v3655 = vpack.c.b16 %v2423, %v2419
  %v3656 = vpack.c.b16 %v2428, %v2424
  %v3657 = vpack.c.b16 %v2429, %v2425
  %v3658 = vpack.c.b16 %v2430, %v2426
  %v3659 = vpack.c.b16 %v2431, %v2427
  %v3660 = vpack.c.b16 %v2436, %v2432
  %v3661 = vpack.c.b16 %v2437, %v2433
  %v3662 = vpack.c.b16 %v2438, %v2434
  %v3663 = vpack.c.b16 %v2439, %v2435
  %v3664 = vpack.c.b16 %v2444, %v2440
  %v3665 = vpack.c.b16 %v2445, %v2441
  %v3666 = vpack.c.b16 %v2446, %v2442
  %v3667 = vpack.c.b16 %v2447, %v2443
  %v3668 = vpack.c.b16 %v2452, %v2448
  %v3669 = vpack.c.b16 %v2453, %v2449
  %v3670 = vpack.c.b16 %v2454, %v2450
  %v3671 = vpack.c.b16 %v2455, %v2451
  %v3672 = vpack.c.b16 %v2460, %v2456
  %v3673 = vpack.c.b16 %v2461, %v2457
  %v3674 = vpack.c.b16 %v2462, %v2458
  %v3675 = vpack.c.b16 %v2463, %v2459
  %v3676 = vpack.c.b16 %v2468, %v2464
  %v3677 = vpack.c.b16 %v2469, %v2465
  %v3678 = vpack.c.b16 %v2470, %v2466
  %v3679 = vpack.c.b16 %v2471, %v2467
  %v3680 = vpack.c.b16 %v2476, %v2472
  %v3681 = vpack.c.b16 %v2477, %v2473
  %v3682 = vpack.c.b16 %v2478, %v2474
  %v3683 = vpack.c.b16 %v2479, %v2475
  %v3684 = vpack.c.b16 %v2484, %v2480
  %v3685 = vpack.c.b16 %v2485, %v2481
  %v3686 = vpack.c.b16 %v2486, %v2482
  %v3687 = vpack.c.b16 %v2487, %v2483
  %v3688 = vpack.c.b16 %v2492, %v2488
  %v3689 = vpack.c.b16 %v2493, %v2489
  %v3690 = vpack.c.b16 %v2494, %v2490
  %v3691 = vpack.c.b16 %v2495, %v2491
  %v3692 = vpack.c.b16 %v2500, %v2496
  %v3693 = vpack.c.b16 %v2501, %v2497
  %v3694 = vpack.c.b16 %v2502, %v2498
  %v3695 = vpack.c.b16 %v2503, %v2499
  %v3696 = vpack.c.b16 %v2508, %v2504
  %v3697 = vpack.c.b16 %v2509, %v2505
  %v3698 = vpack.c.b16 %v2510, %v2506
  %v3699 = vpack.c.b16 %v2511, %v2507
  %v3700 = vpack.c.b16 %v2516, %v2512
  %v3701 = vpack.c.b16 %v2517, %v2513
  %v3702 = vpack.c.b16 %v2518, %v2514
  %v3703 = vpack.c.b16 %v2519, %v2515
  %v3704 = vpack.c.b16 %v2524, %v2520
  %v3705 = vpack.c.b16 %v2525, %v2521
  %v3706 = vpack.c.b16 %v2526, %v2522
  %v3707 = vpack.c.b16 %v2527, %v2523
  %v3708 = vpack.c.b16 %v2532, %v2528
  %v3709 = vpack.c.b16 %v2533, %v2529
  %v3710 = vpack.c.b16 %v2534, %v2530
  %v3711 = vpack.c.b16 %v2535, %v2531
  %v3712 = vpack.c.b16 %v2540, %v2536
  %v3713 = vpack.c.b16 %v2541, %v2537
  %v3714 = vpack.c.b16 %v2542, %v2538
  %v3715 = vpack.c.b16 %v2543, %v2539
  %v3716 = vpack.c.b16 %v2548, %v2544
  %v3717 = vpack.c.b16 %v2549, %v2545
  %v3718 = vpack.c.b16 %v2550, %v2546
  %v3719 = vpack.c.b16 %v2551, %v2547
  %v3720 = vpack.c.b16 %v2556, %v2552
  %v3721 = vpack.c.b16 %v2557, %v2553
  %v3722 = vpack.c.b16 %v2558, %v2554
  %v3723 = vpack.c.b16 %v2559, %v2555
  %v3724 = vpack.c.b16 %v2564, %v2560
  %v3725 = vpack.c.b16 %v2565, %v2561
  %v3726 = vpack.c.b16 %v2566, %v2562
  %v3727 = vpack.c.b16 %v2567, %v2563
  %v3728 = vpack.c.b16 %v2572, %v2568
  %v3729 = vpack.c.b16 %v2573, %v2569
  %v3730 = vpack.c.b16 %v2574, %v2570
  %v3731 = vpack.c.b16 %v2575, %v2571
  %v3732 = vpack.c.b16 %v2580, %v2576
  %v3733 = vpack.c.b16 %v2581, %v2577
  %v3734 = vpack.c.b16 %v2582, %v2578
  %v3735 = vpack.c.b16 %v2583, %v2579
  %v3736 = vpack.c.b16 %v2588, %v2584
  %v3737 = vpack.c.b16 %v2589, %v2585
  %v3738 = vpack.c.b16 %v2590, %v2586
  %v3739 = vpack.c.b16 %v2591, %v2587
  %v3740 = vpack.c.b16 %v2596, %v2592
  %v3741 = vpack.c.b16 %v2597, %v2593
  %v3742 = vpack.c.b16 %v2598, %v2594
  %v3743 = vpack.c.b16 %v2599, %v2595
  %v3744 = vpack.c.b16 %v2604, %v2600
  %v3745 = vpack.c.b16 %v2605, %v2601
  %v3746 = vpack.c.b16 %v2606, %v2602
  %v3747 = vpack.c.b16 %v2607, %v2603
  %v3748 = vpack.c.b16 %v2612, %v2608
  %v3749 = vpack.c.b16 %v2613, %v2609
  %v3750 = vpack.c.b16 %v2614, %v2610
  %v3751 = vpack.c.b16 %v2615, %v2611
  %v3752 = vpack.c.b16 %v2620, %v2616
  %v3753 = vpack.c.b16 %v2621, %v2617
  %v3754 = vpack.c.b16 %v2622, %v2618
  %v3755 = vpack.c.b16 %v2623, %v2619
  %v3756 = vpack.c.b16 %v2628, %v2624
  %v3757 = vpack.c.b16 %v2629, %v2625
  %v3758 = vpack.c.b16 %v2630, %v2626
  %v3759 = vpack.c.b16 %v2631, %v2627
  %v3760 = vpack.c.b16 %v2636, %v2632
  %v3761 = vpack.c.b16 %v2637, %v2633
  %v3762 = vpack.c.b16 %v2638, %v2634
  %v3763 = vpack.c.b16 %v2639, %v2635
  %v3764 = vpack.c.b16 %v2644, %v2640
  %v3765 = vpack.c.b16 %v2645, %v2641
  %v3766 = vpack.c.b16 %v2646, %v2642
  %v3767 = vpack.c.b16 %v2647, %v2643
  %v3768 = vpack.c.b16 %v2652, %v2648
  %v3769 = vpack.c.b16 %v2653, %v2649
  %v3770 = vpack.c.b16 %v2654, %v2650
  %v3771 = vpack.c.b16 %v2655, %v2651
  %v3772 = vpack.c.b16 %v2660, %v2656
  %v3773 = vpack.c.b16 %v2661, %v2657
  %v3774 = vpack.c.b16 %v2662, %v2658
  %v3775 = vpack.c.b16 %v2663, %v2659
  %v3776 = vpack.c.b16 %v2668, %v2664
  %v3777 = vpack.c.b16 %v2669, %v2665
  %v3778 = vpack.c.b16 %v2670, %v2666
  %v3779 = vpack.c.b16 %v2671, %v2667
  %v3780 = vpack.c.b16 %v2676, %v2672
  %v3781 = vpack.c.b16 %v2677, %v2673
  %v3782 = vpack.c.b16 %v2678, %v2674
  %v3783 = vpack.c.b16 %v2679, %v2675
  %v3784 = vpack.c.b16 %v2684, %v2680
  %v3785 = vpack.c.b16 %v2685, %v2681
  %v3786 = vpack.c.b16 %v2686, %v2682
  %v3787 = vpack.c.b16 %v2687, %v2683
  %v3788 = vpack.c.b16 %v2692, %v2688
  %v3789 = vpack.c.b16 %v2693, %v2689
  %v3790 = vpack.c.b16 %v2694, %v2690
  %v3791 = vpack.c.b16 %v2695, %v2691
  %v3792 = vpack.c.b16 %v2700, %v2696
  %v3793 = vpack.c.b16 %v2701, %v2697
  %v3794 = vpack.c.b16 %v2702, %v2698
  %v3795 = vpack.c.b16 %v2703, %v2699
  %v3796 = vpack.c.b16 %v2708, %v2704
  %v3797 = vpack.c.b16 %v2709, %v2705
  %v3798 = vpack.c.b16 %v2710, %v2706
  %v3799 = vpack.c.b16 %v2711, %v2707
  %v3800 = vpack.c.b16 %v2716, %v2712
  %v3801 = vpack.c.b16 %v2717, %v2713
  %v3802 = vpack.c.b16 %v2718, %v2714
  %v3803 = vpack.c.b16 %v2719, %v2715
  %v3804 = vpack.c.b16 %v2724, %v2720
  %v3805 = vpack.c.b16 %v2725, %v2721
  %v3806 = vpack.c.b16 %v2726, %v2722
  %v3807 = vpack.c.b16 %v2727, %v2723
  %v3808 = vpack.c.b16 %v2732, %v2728
  %v3809 = vpack.c.b16 %v2733, %v2729
  %v3810 = vpack.c.b16 %v2734, %v2730
  %v3811 = vpack.c.b16 %v2735, %v2731
  %v3812 = vpack.c.b16 %v2740, %v2736
  %v3813 = vpack.c.b16 %v2741, %v2737
  %v3814 = vpack.c.b16 %v2742, %v2738
  %v3815 = vpack.c.b16 %v2743, %v2739
  %v3816 = vpack.c.b16 %v2748, %v2744
  %v3817 = vpack.c.b16 %v2749, %v2745
  %v3818 = vpack.c.b16 %v2750, %v2746
  %v3819 = vpack.c.b16 %v2751, %v2747
  %v3820 = vpack.c.b16 %v2756, %v2752
  %v3821 = vpack.c.b16 %v2757, %v2753
  %v3822 = vpack.c.b16 %v2758, %v2754
  %v3823 = vpack.c.b16 %v2759, %v2755
  %v3824 = vpack.c.b16 %v2764, %v2760
  %v3825 = vpack.c.b16 %v2765, %v2761
  %v3826 = vpack.c.b16 %v2766, %v2762
  %v3827 = vpack.c.b16 %v2767, %v2763
  %v3828 = vpack.c.b16 %v2772, %v2768
  %v3829 = vpack.c.b16 %v2773, %v2769
  %v3830 = vpack.c.b16 %v2774, %v2770
  %v3831 = vpack.c.b16 %v2775, %v2771
  %v3832 = vpack.c.b16 %v2780, %v2776
  %v3833 = vpack.c.b16 %v2781, %v2777
  %v3834 = vpack.c.b16 %v2782, %v2778
  %v3835 = vpack.c.b16 %v2783, %v2779
  %v3836 = vpack.c.b16 %v2788, %v2784
  %v3837 = vpack.c.b16 %v2789, %v2785
  %v3838 = vpack.c.b16 %v2790, %v2786
  %v3839 = vpack.c.b16 %v2791, %v2787
  %v3840 = vpack.c.b16 %v2796, %v2792
  %v3841 = vpack.c.b16 %v2797, %v2793
  %v3842 = vpack.c.b16 %v2798, %v2794
  %v3843 = vpack.c.b16 %v2799, %v2795
  %v3844 = vpack.c.b16 %v2804, %v2800
  %v3845 = vpack.c.b16 %v2805, %v2801
  %v3846 = vpack.c.b16 %v2806, %v2802
  %v3847 = vpack.c.b16 %v2807, %v2803
  %v3848 = vpack.c.b16 %v2812, %v2808
  %v3849 = vpack.c.b16 %v2813, %v2809
  %v3850 = vpack.c.b16 %v2814, %v2810
  %v3851 = vpack.c.b16 %v2815, %v2811
  %v3852 = vpack.c.b16 %v2820, %v2816
  %v3853 = vpack.c.b16 %v2821, %v2817
  %v3854 = vpack.c.b16 %v2822, %v2818
  %v3855 = vpack.c.b16 %v2823, %v2819
  %v3856 = vpack.c.b16 %v2828, %v2824
  %v3857 = vpack.c.b16 %v2829, %v2825
  %v3858 = vpack.c.b16 %v2830, %v2826
  %v3859 = vpack.c.b16 %v2831, %v2827
  %v3860 = vpack.c.b16 %v2836, %v2832
  %v3861 = vpack.c.b16 %v2837, %v2833
  %v3862 = vpack.c.b16 %v2838, %v2834
  %v3863 = vpack.c.b16 %v2839, %v2835
  %v3864 = vpack.c.b16 %v2844, %v2840
  %v3865 = vpack.c.b16 %v2845, %v2841
  %v3866 = vpack.c.b16 %v2846, %v2842
  %v3867 = vpack.c.b16 %v2847, %v2843
  %v3868 = vpack.c.b16 %v2852, %v2848
  %v3869 = vpack.c.b16 %v2853, %v2849
  %v3870 = vpack.c.b16 %v2854, %v2850
  %v3871 = vpack.c.b16 %v2855, %v2851
  %v3872 = vpack.c.b16 %v2860, %v2856
  %v3873 = vpack.c.b16 %v2861, %v2857
  %v3874 = vpack.c.b16 %v2862, %v2858
  %v3875 = vpack.c.b16 %v2863, %v2859
  %v3876 = vpack.c.b16 %v2868, %v2864
  %v3877 = vpack.c.b16 %v2869, %v2865
  %v3878 = vpack.c.b16 %v2870, %v2866
  %v3879 = vpack.c.b16 %v2871, %v2867
  %v3880 = vpack.c.b16 %v2876, %v2872
  %v3881 = vpack.c.b16 %v2877, %v2873
  %v3882 = vpack.c.b16 %v2878, %v2874
  %v3883 = vpack.c.b16 %v2879, %v2875
  %v3884 = vpack.c.b16 %v2884, %v2880
  %v3885 = vpack.c.b16 %v2885, %v2881
  %v3886 = vpack.c.b16 %v2886, %v2882
  %v3887 = vpack.c.b16 %v2887, %v2883
  %v3888 = vpack.c.b16 %v2892, %v2888
  %v3889 = vpack.c.b16 %v2893, %v2889
  %v3890 = vpack.c.b16 %v2894, %v2890
  %v3891 = vpack.c.b16 %v2895, %v2891
  %v3892 = vpack.c.b16 %v2900, %v2896
  %v3893 = vpack.c.b16 %v2901, %v2897
  %v3894 = vpack.c.b16 %v2902, %v2898
  %v3895 = vpack.c.b16 %v2903, %v2899
  %v3896 = vpack.c.b16 %v2908, %v2904
  %v3897 = vpack.c.b16 %v2909, %v2905
  %v3898 = vpack.c.b16 %v2910, %v2906
  %v3899 = vpack.c.b16 %v2911, %v2907
  %v3900 = vpack.c.b16 %v2916, %v2912
  %v3901 = vpack.c.b16 %v2917, %v2913
  %v3902 = vpack.c.b16 %v2918, %v2914
  %v3903 = vpack.c.b16 %v2919, %v2915
  %v3904 = vpack.c.b16 %v2924, %v2920
  %v3905 = vpack.c.b16 %v2925, %v2921
  %v3906 = vpack.c.b16 %v2926, %v2922
  %v3907 = vpack.c.b16 %v2927, %v2923
  %v3908 = vpack.c.b16 %v2932, %v2928
  %v3909 = vpack.c.b16 %v2933, %v2929
  %v3910 = vpack.c.b16 %v2934, %v2930
  %v3911 = vpack.c.b16 %v2935, %v2931
  %v3912 = vpack.c.b16 %v2940, %v2936
  %v3913 = vpack.c.b16 %v2941, %v2937
  %v3914 = vpack.c.b16 %v2942, %v2938
  %v3915 = vpack.c.b16 %v2943, %v2939
  %v3916 = vpack.c.b16 %v2948, %v2944
  %v3917 = vpack.c.b16 %v2949, %v2945
  %v3918 = vpack.c.b16 %v2950, %v2946
  %v3919 = vpack.c.b16 %v2951, %v2947
  %v3920 = vpack.c.b16 %v2956, %v2952
  %v3921 = vpack.c.b16 %v2957, %v2953
  %v3922 = vpack.c.b16 %v2958, %v2954
  %v3923 = vpack.c.b16 %v2959, %v2955
  %v3924 = vpack.c.b16 %v2964, %v2960
  %v3925 = vpack.c.b16 %v2965, %v2961
  %v3926 = vpack.c.b16 %v2966, %v2962
  %v3927 = vpack.c.b16 %v2967, %v2963
  %v3928 = vpack.c.b16 %v2972, %v2968
  %v3929 = vpack.c.b16 %v2973, %v2969
  %v3930 = vpack.c.b16 %v2974, %v2970
  %v3931 = vpack.c.b16 %v2975, %v2971
  %v3932 = vpack.c.b16 %v2980, %v2976
  %v3933 = vpack.c.b16 %v2981, %v2977
  %v3934 = vpack.c.b16 %v2982, %v2978
  %v3935 = vpack.c.b16 %v2983, %v2979
  %v3936 = vpack.c.b16 %v2988, %v2984
  %v3937 = vpack.c.b16 %v2989, %v2985
  %v3938 = vpack.c.b16 %v2990, %v2986
  %v3939 = vpack.c.b16 %v2991, %v2987
  %v3940 = vpack.c.b16 %v2996, %v2992
  %v3941 = vpack.c.b16 %v2997, %v2993
  %v3942 = vpack.c.b16 %v2998, %v2994
  %v3943 = vpack.c.b16 %v2999, %v2995
  %v3944 = vpack.c.b16 %v3004, %v3000
  %v3945 = vpack.c.b16 %v3005, %v3001
  %v3946 = vpack.c.b16 %v3006, %v3002
  %v3947 = vpack.c.b16 %v3007, %v3003
  %v3948 = vpack.c.b16 %v3012, %v3008
  %v3949 = vpack.c.b16 %v3013, %v3009
  %v3950 = vpack.c.b16 %v3014, %v3010
  %v3951 = vpack.c.b16 %v3015, %v3011
  %v3952 = vpack.c.b16 %v3020, %v3016
  %v3953 = vpack.c.b16 %v3021, %v3017
  %v3954 = vpack.c.b16 %v3022, %v3018
  %v3955 = vpack.c.b16 %v3023, %v3019
  %v3956 = vpack.c.b16 %v3028, %v3024
  %v3957 = vpack.c.b16 %v3029, %v3025
  %v3958 = vpack.c.b16 %v3030, %v3026
  %v3959 = vpack.c.b16 %v3031, %v3027
  %v3960 = vpack.c.b16 %v3036, %v3032
  %v3961 = vpack.c.b16 %v3037, %v3033
  %v3962 = vpack.c.b16 %v3038, %v3034
  %v3963 = vpack.c.b16 %v3039, %v3035
  %v3964 = vpack.c.b16 %v3044, %v3040
  %v3965 = vpack.c.b16 %v3045, %v3041
  %v3966 = vpack.c.b16 %v3046, %v3042
  %v3967 = vpack.c.b16 %v3047, %v3043
  %v3968 = vpack.c.b16 %v3052, %v3048
  %v3969 = vpack.c.b16 %v3053, %v3049
  %v3970 = vpack.c.b16 %v3054, %v3050
  %v3971 = vpack.c.b16 %v3055, %v3051
  %v3972 = vpack.c.b16 %v3060, %v3056
  %v3973 = vpack.c.b16 %v3061, %v3057
  %v3974 = vpack.c.b16 %v3062, %v3058
  %v3975 = vpack.c.b16 %v3063, %v3059
  %v3976 = vpack.c.b16 %v3068, %v3064
  %v3977 = vpack.c.b16 %v3069, %v3065
  %v3978 = vpack.c.b16 %v3070, %v3066
  %v3979 = vpack.c.b16 %v3071, %v3067
  %v3980 = vpack.c.b16 %v3076, %v3072
  %v3981 = vpack.c.b16 %v3077, %v3073
  %v3982 = vpack.c.b16 %v3078, %v3074
  %v3983 = vpack.c.b16 %v3079, %v3075
  %v3984 = vpack.c.b16 %v3084, %v3080
  %v3985 = vpack.c.b16 %v3085, %v3081
  %v3986 = vpack.c.b16 %v3086, %v3082
  %v3987 = vpack.c.b16 %v3087, %v3083
  %v3988 = vpack.c.b16 %v3092, %v3088
  %v3989 = vpack.c.b16 %v3093, %v3089
  %v3990 = vpack.c.b16 %v3094, %v3090
  %v3991 = vpack.c.b16 %v3095, %v3091
  %v3992 = vpack.c.b16 %v3100, %v3096
  %v3993 = vpack.c.b16 %v3101, %v3097
  %v3994 = vpack.c.b16 %v3102, %v3098
  %v3995 = vpack.c.b16 %v3103, %v3099
  %v3996 = vpack.c.b16 %v3108, %v3104
  %v3997 = vpack.c.b16 %v3109, %v3105
  %v3998 = vpack.c.b16 %v3110, %v3106
  %v3999 = vpack.c.b16 %v3111, %v3107
  %v4000 = vpack.c.b16 %v3116, %v3112
  %v4001 = vpack.c.b16 %v3117, %v3113
  %v4002 = vpack.c.b16 %v3118, %v3114
  %v4003 = vpack.c.b16 %v3119, %v3115
  %v4004 = vpack.c.b16 %v3124, %v3120
  %v4005 = vpack.c.b16 %v3125, %v3121
  %v4006 = vpack.c.b16 %v3126, %v3122
  %v4007 = vpack.c.b16 %v3127, %v3123
  %v4008 = vpack.c.b16 %v3132, %v3128
  %v4009 = vpack.c.b16 %v3133, %v3129
  %v4010 = vpack.c.b16 %v3134, %v3130
  %v4011 = vpack.c.b16 %v3135, %v3131
  %v4012 = vpack.c.b16 %v3140, %v3136
  %v4013 = vpack.c.b16 %v3141, %v3137
  %v4014 = vpack.c.b16 %v3142, %v3138
  %v4015 = vpack.c.b16 %v3143, %v3139
  %v4016 = vpack.c.b16 %v3148, %v3144
  %v4017 = vpack.c.b16 %v3149, %v3145
  %v4018 = vpack.c.b16 %v3150, %v3146
  %v4019 = vpack.c.b16 %v3151, %v3147
  %v4020 = vpack.c.b16 %v3156, %v3152
  %v4021 = vpack.c.b16 %v3157, %v3153
  %v4022 = vpack.c.b16 %v3158, %v3154
  %v4023 = vpack.c.b16 %v3159, %v3155
  %v4024 = vpack.c.b16 %v3164, %v3160
  %v4025 = vpack.c.b16 %v3165, %v3161
  %v4026 = vpack.c.b16 %v3166, %v3162
  %v4027 = vpack.c.b16 %v3167, %v3163
  %v4028 = vpack.c.b16 %v3172, %v3168
  %v4029 = vpack.c.b16 %v3173, %v3169
  %v4030 = vpack.c.b16 %v3174, %v3170
  %v4031 = vpack.c.b16 %v3175, %v3171
  %v4032 = vpack.c.b16 %v3180, %v3176
  %v4033 = vpack.c.b16 %v3181, %v3177
  %v4034 = vpack.c.b16 %v3182, %v3178
  %v4035 = vpack.c.b16 %v3183, %v3179
  %v4036 = vpack.c.b16 %v3188, %v3184
  %v4037 = vpack.c.b16 %v3189, %v3185
  %v4038 = vpack.c.b16 %v3190, %v3186
  %v4039 = vpack.c.b16 %v3191, %v3187
  %v4040 = vpack.c.b16 %v3196, %v3192
  %v4041 = vpack.c.b16 %v3197, %v3193
  %v4042 = vpack.c.b16 %v3198, %v3194
  %v4043 = vpack.c.b16 %v3199, %v3195
  %v4044 = vpack.c.b16 %v3204, %v3200
  %v4045 = vpack.c.b16 %v3205, %v3201
  %v4046 = vpack.c.b16 %v3206, %v3202
  %v4047 = vpack.c.b16 %v3207, %v3203
  %v4048 = vpack.c.b16 %v3212, %v3208
  %v4049 = vpack.c.b16 %v3213, %v3209
  %v4050 = vpack.c.b16 %v3214, %v3210
  %v4051 = vpack.c.b16 %v3215, %v3211
  %v4052 = vpack.c.b16 %v3220, %v3216
  %v4053 = vpack.c.b16 %v3221, %v3217
  %v4054 = vpack.c.b16 %v3222, %v3218
  %v4055 = vpack.c.b16 %v3223, %v3219
  %v4056 = vpack.c.b16 %v3228, %v3224
  %v4057 = vpack.c.b16 %v3229, %v3225
  %v4058 = vpack.c.b16 %v3230, %v3226
  %v4059 = vpack.c.b16 %v3231, %v3227
  %v4060 = vpack.c.b16 %v3236, %v3232
  %v4061 = vpack.c.b16 %v3237, %v3233
  %v4062 = vpack.c.b16 %v3238, %v3234
  %v4063 = vpack.c.b16 %v3239, %v3235
  %v4064 = vpack.c.b16 %v3244, %v3240
  %v4065 = vpack.c.b16 %v3245, %v3241
  %v4066 = vpack.c.b16 %v3246, %v3242
  %v4067 = vpack.c.b16 %v3247, %v3243
  %v4068 = vpack.c.b16 %v3252, %v3248
  %v4069 = vpack.c.b16 %v3253, %v3249
  %v4070 = vpack.c.b16 %v3254, %v3250
  %v4071 = vpack.c.b16 %v3255, %v3251
  %v4072 = vpack.c.b16 %v3260, %v3256
  %v4073 = vpack.c.b16 %v3261, %v3257
  %v4074 = vpack.c.b16 %v3262, %v3258
  %v4075 = vpack.c.b16 %v3263, %v3259
  %v4076 = vpack.c.b16 %v3268, %v3264
  %v4077 = vpack.c.b16 %v3269, %v3265
  %v4078 = vpack.c.b16 %v3270, %v3266
  %v4079 = vpack.c.b16 %v3271, %v3267
  %v4080 = vpack.c.b16 %v3276, %v3272
  %v4081 = vpack.c.b16 %v3277, %v3273
  %v4082 = vpack.c.b16 %v3278, %v3274
  %v4083 = vpack.c.b16 %v3279, %v3275
  %v4084 = vpack.c.b16 %v3284, %v3280
  %v4085 = vpack.c.b16 %v3285, %v3281
  %v4086 = vpack.c.b16 %v3286, %v3282
  %v4087 = vpack.c.b16 %v3287, %v3283
  %v4088 = vpack.c.b16 %v3292, %v3288
  %v4089 = vpack.c.b16 %v3293, %v3289
  %v4090 = vpack.c.b16 %v3294, %v3290
  %v4091 = vpack.c.b16 %v3295, %v3291
  %v4092 = vpack.c.b16 %v3300, %v3296
  %v4093 = vpack.c.b16 %v3301, %v3297
  %v4094 = vpack.c.b16 %v3302, %v3298
  %v4095 = vpack.c.b16 %v3303, %v3299
  %v4096 = vpack.c.b16 %v3308, %v3304
  %v4097 = vpack.c.b16 %v3309, %v3305
  %v4098 = vpack.c.b16 %v3310, %v3306
  %v4099 = vpack.c.b16 %v3311, %v3307
  %v4100 = vpack.c.b16 %v3316, %v3312
  %v4101 = vpack.c.b16 %v3317, %v3313
  %v4102 = vpack.c.b16 %v3318, %v3314
  %v4103 = vpack.c.b16 %v3319, %v3315
  %vm4888 = vcmask 523264
  %v4890 = vsel %vm4888, %v943, 0
  %4892 = vmatpush.bf16.msra.mxu0 %v3348
  %4893 = vmatpush.bf16.msra.mxu0 %v3344
  %4894 = vmatpush.bf16.msra.mxu0 %v3340
  %4895 = vmatpush.bf16.msra.mxu0 %v3336
  %4896 = vmatpush.bf16.msra.mxu0 %v3332
  %4897 = vmatpush.bf16.msra.mxu0 %v3328
  %4898 = vmatpush.bf16.msra.mxu0 %v3324
  %4899 = vmatpush.bf16.msra.mxu0 %v3320
  %4900 = vmatmul.bf16.gmra.mxu0 %v919
  %v4901 = vpop.f32.mrf.mxu0
  %v4902 = vadd.f32 %v835, %v4901
  %v4903 = vpop.f32.mrf.mxu0
  %v4904 = vadd.f32 %v835, %v4903
  %4905 = vdwg.mxu0
  %4906 = vmatpush.bf16.msra.mxu0 %v3380
  %4907 = vmatpush.bf16.msra.mxu0 %v3376
  %4908 = vmatpush.bf16.msra.mxu0 %v3372
  %4909 = vmatpush.bf16.msra.mxu0 %v3368
  %4910 = vmatpush.bf16.msra.mxu0 %v3364
  %4911 = vmatpush.bf16.msra.mxu0 %v3360
  %4912 = vmatpush.bf16.msra.mxu0 %v3356
  %4913 = vmatpush.bf16.msra.mxu0 %v3352
  %4914 = vmatmul.bf16.gmra.mxu0 %v920
  %v4915 = vpop.f32.mrf.mxu0
  %v4916 = vadd.f32 %v4902, %v4915
  %v4917 = vpop.f32.mrf.mxu0
  %v4918 = vadd.f32 %v4904, %v4917
  %4919 = vdwg.mxu0
  %4920 = vmatpush.bf16.msra.mxu0 %v3412
  %4921 = vmatpush.bf16.msra.mxu0 %v3408
  %4922 = vmatpush.bf16.msra.mxu0 %v3404
  %4923 = vmatpush.bf16.msra.mxu0 %v3400
  %4924 = vmatpush.bf16.msra.mxu0 %v3396
  %4925 = vmatpush.bf16.msra.mxu0 %v3392
  %4926 = vmatpush.bf16.msra.mxu0 %v3388
  %4927 = vmatpush.bf16.msra.mxu0 %v3384
  %4928 = vmatmul.bf16.gmra.mxu0 %v921
  %v4929 = vpop.f32.mrf.mxu0
  %v4930 = vadd.f32 %v4916, %v4929
  %v4931 = vpop.f32.mrf.mxu0
  %v4932 = vadd.f32 %v4918, %v4931
  %4933 = vdwg.mxu0
  %4934 = vmatpush.bf16.msra.mxu0 %v3444
  %4935 = vmatpush.bf16.msra.mxu0 %v3440
  %4936 = vmatpush.bf16.msra.mxu0 %v3436
  %4937 = vmatpush.bf16.msra.mxu0 %v3432
  %4938 = vmatpush.bf16.msra.mxu0 %v3428
  %4939 = vmatpush.bf16.msra.mxu0 %v3424
  %4940 = vmatpush.bf16.msra.mxu0 %v3420
  %4941 = vmatpush.bf16.msra.mxu0 %v3416
  %4942 = vmatmul.bf16.gmra.mxu0 %v922
  %v4943 = vpop.f32.mrf.mxu0
  %v4944 = vadd.f32 %v4930, %v4943
  %v4945 = vpop.f32.mrf.mxu0
  %v4946 = vadd.f32 %v4932, %v4945
  %4947 = vdwg.mxu0
  %4948 = vmatpush.bf16.msra.mxu0 %v3476
  %4949 = vmatpush.bf16.msra.mxu0 %v3472
  %4950 = vmatpush.bf16.msra.mxu0 %v3468
  %4951 = vmatpush.bf16.msra.mxu0 %v3464
  %4952 = vmatpush.bf16.msra.mxu0 %v3460
  %4953 = vmatpush.bf16.msra.mxu0 %v3456
  %4954 = vmatpush.bf16.msra.mxu0 %v3452
  %4955 = vmatpush.bf16.msra.mxu0 %v3448
  %4956 = vmatmul.bf16.gmra.mxu0 %v923
  %v4957 = vpop.f32.mrf.mxu0
  %v4958 = vadd.f32 %v4944, %v4957
  %v4959 = vpop.f32.mrf.mxu0
  %v4960 = vadd.f32 %v4946, %v4959
  %4961 = vdwg.mxu0
  %4962 = vmatpush.bf16.msra.mxu0 %v3508
  %4963 = vmatpush.bf16.msra.mxu0 %v3504
  %4964 = vmatpush.bf16.msra.mxu0 %v3500
  %4965 = vmatpush.bf16.msra.mxu0 %v3496
  %4966 = vmatpush.bf16.msra.mxu0 %v3492
  %4967 = vmatpush.bf16.msra.mxu0 %v3488
  %4968 = vmatpush.bf16.msra.mxu0 %v3484
  %4969 = vmatpush.bf16.msra.mxu0 %v3480
  %4970 = vmatmul.bf16.gmra.mxu0 %v924
  %v4971 = vpop.f32.mrf.mxu0
  %v4972 = vadd.f32 %v4958, %v4971
  %v4973 = vpop.f32.mrf.mxu0
  %v4974 = vadd.f32 %v4960, %v4973
  %4975 = vdwg.mxu0
  %4976 = vmatpush.bf16.msra.mxu0 %v3540
  %4977 = vmatpush.bf16.msra.mxu0 %v3536
  %4978 = vmatpush.bf16.msra.mxu0 %v3532
  %4979 = vmatpush.bf16.msra.mxu0 %v3528
  %4980 = vmatpush.bf16.msra.mxu0 %v3524
  %4981 = vmatpush.bf16.msra.mxu0 %v3520
  %4982 = vmatpush.bf16.msra.mxu0 %v3516
  %4983 = vmatpush.bf16.msra.mxu0 %v3512
  %4984 = vmatmul.bf16.gmra.mxu0 %v925
  %v4985 = vpop.f32.mrf.mxu0
  %v4986 = vadd.f32 %v4972, %v4985
  %v4987 = vpop.f32.mrf.mxu0
  %v4988 = vadd.f32 %v4974, %v4987
  %4989 = vdwg.mxu0
  %4990 = vmatpush.bf16.msra.mxu0 %v3572
  %4991 = vmatpush.bf16.msra.mxu0 %v3568
  %4992 = vmatpush.bf16.msra.mxu0 %v3564
  %4993 = vmatpush.bf16.msra.mxu0 %v3560
  %4994 = vmatpush.bf16.msra.mxu0 %v3556
  %4995 = vmatpush.bf16.msra.mxu0 %v3552
  %4996 = vmatpush.bf16.msra.mxu0 %v3548
  %4997 = vmatpush.bf16.msra.mxu0 %v3544
  %4998 = vmatmul.bf16.gmra.mxu0 %v926
  %v4999 = vpop.f32.mrf.mxu0
  %v5000 = vadd.f32 %v4986, %v4999
  %v5001 = vpop.f32.mrf.mxu0
  %v5002 = vadd.f32 %v4988, %v5001
  %5003 = vdwg.mxu0
  %5004 = vmatpush.bf16.msra.mxu0 %v3604
  %5005 = vmatpush.bf16.msra.mxu0 %v3600
  %5006 = vmatpush.bf16.msra.mxu0 %v3596
  %5007 = vmatpush.bf16.msra.mxu0 %v3592
  %5008 = vmatpush.bf16.msra.mxu0 %v3588
  %5009 = vmatpush.bf16.msra.mxu0 %v3584
  %5010 = vmatpush.bf16.msra.mxu0 %v3580
  %5011 = vmatpush.bf16.msra.mxu0 %v3576
  %5012 = vmatmul.bf16.gmra.mxu0 %v927
  %v5013 = vpop.f32.mrf.mxu0
  %v5014 = vadd.f32 %v5000, %v5013
  %v5015 = vpop.f32.mrf.mxu0
  %v5016 = vadd.f32 %v5002, %v5015
  %5017 = vdwg.mxu0
  %5018 = vmatpush.bf16.msra.mxu0 %v3636
  %5019 = vmatpush.bf16.msra.mxu0 %v3632
  %5020 = vmatpush.bf16.msra.mxu0 %v3628
  %5021 = vmatpush.bf16.msra.mxu0 %v3624
  %5022 = vmatpush.bf16.msra.mxu0 %v3620
  %5023 = vmatpush.bf16.msra.mxu0 %v3616
  %5024 = vmatpush.bf16.msra.mxu0 %v3612
  %5025 = vmatpush.bf16.msra.mxu0 %v3608
  %5026 = vmatmul.bf16.gmra.mxu0 %v928
  %v5027 = vpop.f32.mrf.mxu0
  %v5028 = vadd.f32 %v5014, %v5027
  %v5029 = vpop.f32.mrf.mxu0
  %v5030 = vadd.f32 %v5016, %v5029
  %5031 = vdwg.mxu0
  %5032 = vmatpush.bf16.msra.mxu0 %v3668
  %5033 = vmatpush.bf16.msra.mxu0 %v3664
  %5034 = vmatpush.bf16.msra.mxu0 %v3660
  %5035 = vmatpush.bf16.msra.mxu0 %v3656
  %5036 = vmatpush.bf16.msra.mxu0 %v3652
  %5037 = vmatpush.bf16.msra.mxu0 %v3648
  %5038 = vmatpush.bf16.msra.mxu0 %v3644
  %5039 = vmatpush.bf16.msra.mxu0 %v3640
  %5040 = vmatmul.bf16.gmra.mxu0 %v929
  %v5041 = vpop.f32.mrf.mxu0
  %v5042 = vadd.f32 %v5028, %v5041
  %v5043 = vpop.f32.mrf.mxu0
  %v5044 = vadd.f32 %v5030, %v5043
  %5045 = vdwg.mxu0
  %5046 = vmatpush.bf16.msra.mxu0 %v3700
  %5047 = vmatpush.bf16.msra.mxu0 %v3696
  %5048 = vmatpush.bf16.msra.mxu0 %v3692
  %5049 = vmatpush.bf16.msra.mxu0 %v3688
  %5050 = vmatpush.bf16.msra.mxu0 %v3684
  %5051 = vmatpush.bf16.msra.mxu0 %v3680
  %5052 = vmatpush.bf16.msra.mxu0 %v3676
  %5053 = vmatpush.bf16.msra.mxu0 %v3672
  %5054 = vmatmul.bf16.gmra.mxu0 %v930
  %v5055 = vpop.f32.mrf.mxu0
  %v5056 = vadd.f32 %v5042, %v5055
  %v5057 = vpop.f32.mrf.mxu0
  %v5058 = vadd.f32 %v5044, %v5057
  %5059 = vdwg.mxu0
  %5060 = vmatpush.bf16.msra.mxu0 %v3732
  %5061 = vmatpush.bf16.msra.mxu0 %v3728
  %5062 = vmatpush.bf16.msra.mxu0 %v3724
  %5063 = vmatpush.bf16.msra.mxu0 %v3720
  %5064 = vmatpush.bf16.msra.mxu0 %v3716
  %5065 = vmatpush.bf16.msra.mxu0 %v3712
  %5066 = vmatpush.bf16.msra.mxu0 %v3708
  %5067 = vmatpush.bf16.msra.mxu0 %v3704
  %5068 = vmatmul.bf16.gmra.mxu0 %v931
  %v5069 = vpop.f32.mrf.mxu0
  %v5070 = vadd.f32 %v5056, %v5069
  %v5071 = vpop.f32.mrf.mxu0
  %v5072 = vadd.f32 %v5058, %v5071
  %5073 = vdwg.mxu0
  %5074 = vmatpush.bf16.msra.mxu0 %v3764
  %5075 = vmatpush.bf16.msra.mxu0 %v3760
  %5076 = vmatpush.bf16.msra.mxu0 %v3756
  %5077 = vmatpush.bf16.msra.mxu0 %v3752
  %5078 = vmatpush.bf16.msra.mxu0 %v3748
  %5079 = vmatpush.bf16.msra.mxu0 %v3744
  %5080 = vmatpush.bf16.msra.mxu0 %v3740
  %5081 = vmatpush.bf16.msra.mxu0 %v3736
  %5082 = vmatmul.bf16.gmra.mxu0 %v932
  %v5083 = vpop.f32.mrf.mxu0
  %v5084 = vadd.f32 %v5070, %v5083
  %v5085 = vpop.f32.mrf.mxu0
  %v5086 = vadd.f32 %v5072, %v5085
  %5087 = vdwg.mxu0
  %5088 = vmatpush.bf16.msra.mxu0 %v3796
  %5089 = vmatpush.bf16.msra.mxu0 %v3792
  %5090 = vmatpush.bf16.msra.mxu0 %v3788
  %5091 = vmatpush.bf16.msra.mxu0 %v3784
  %5092 = vmatpush.bf16.msra.mxu0 %v3780
  %5093 = vmatpush.bf16.msra.mxu0 %v3776
  %5094 = vmatpush.bf16.msra.mxu0 %v3772
  %5095 = vmatpush.bf16.msra.mxu0 %v3768
  %5096 = vmatmul.bf16.gmra.mxu0 %v933
  %v5097 = vpop.f32.mrf.mxu0
  %v5098 = vadd.f32 %v5084, %v5097
  %v5099 = vpop.f32.mrf.mxu0
  %v5100 = vadd.f32 %v5086, %v5099
  %5101 = vdwg.mxu0
  %5102 = vmatpush.bf16.msra.mxu0 %v3828
  %5103 = vmatpush.bf16.msra.mxu0 %v3824
  %5104 = vmatpush.bf16.msra.mxu0 %v3820
  %5105 = vmatpush.bf16.msra.mxu0 %v3816
  %5106 = vmatpush.bf16.msra.mxu0 %v3812
  %5107 = vmatpush.bf16.msra.mxu0 %v3808
  %5108 = vmatpush.bf16.msra.mxu0 %v3804
  %5109 = vmatpush.bf16.msra.mxu0 %v3800
  %5110 = vmatmul.bf16.gmra.mxu0 %v934
  %v5111 = vpop.f32.mrf.mxu0
  %v5112 = vadd.f32 %v5098, %v5111
  %v5113 = vpop.f32.mrf.mxu0
  %v5114 = vadd.f32 %v5100, %v5113
  %5115 = vdwg.mxu0
  %5116 = vmatpush.bf16.msra.mxu0 %v3860
  %5117 = vmatpush.bf16.msra.mxu0 %v3856
  %5118 = vmatpush.bf16.msra.mxu0 %v3852
  %5119 = vmatpush.bf16.msra.mxu0 %v3848
  %5120 = vmatpush.bf16.msra.mxu0 %v3844
  %5121 = vmatpush.bf16.msra.mxu0 %v3840
  %5122 = vmatpush.bf16.msra.mxu0 %v3836
  %5123 = vmatpush.bf16.msra.mxu0 %v3832
  %5124 = vmatmul.bf16.gmra.mxu0 %v935
  %v5125 = vpop.f32.mrf.mxu0
  %v5126 = vadd.f32 %v5112, %v5125
  %v5127 = vpop.f32.mrf.mxu0
  %v5128 = vadd.f32 %v5114, %v5127
  %5129 = vdwg.mxu0
  %5130 = vmatpush.bf16.msra.mxu0 %v3892
  %5131 = vmatpush.bf16.msra.mxu0 %v3888
  %5132 = vmatpush.bf16.msra.mxu0 %v3884
  %5133 = vmatpush.bf16.msra.mxu0 %v3880
  %5134 = vmatpush.bf16.msra.mxu0 %v3876
  %5135 = vmatpush.bf16.msra.mxu0 %v3872
  %5136 = vmatpush.bf16.msra.mxu0 %v3868
  %5137 = vmatpush.bf16.msra.mxu0 %v3864
  %5138 = vmatmul.bf16.gmra.mxu0 %v936
  %v5139 = vpop.f32.mrf.mxu0
  %v5140 = vadd.f32 %v5126, %v5139
  %v5141 = vpop.f32.mrf.mxu0
  %v5142 = vadd.f32 %v5128, %v5141
  %5143 = vdwg.mxu0
  %5144 = vmatpush.bf16.msra.mxu0 %v3924
  %5145 = vmatpush.bf16.msra.mxu0 %v3920
  %5146 = vmatpush.bf16.msra.mxu0 %v3916
  %5147 = vmatpush.bf16.msra.mxu0 %v3912
  %5148 = vmatpush.bf16.msra.mxu0 %v3908
  %5149 = vmatpush.bf16.msra.mxu0 %v3904
  %5150 = vmatpush.bf16.msra.mxu0 %v3900
  %5151 = vmatpush.bf16.msra.mxu0 %v3896
  %5152 = vmatmul.bf16.gmra.mxu0 %v937
  %v5153 = vpop.f32.mrf.mxu0
  %v5154 = vadd.f32 %v5140, %v5153
  %v5155 = vpop.f32.mrf.mxu0
  %v5156 = vadd.f32 %v5142, %v5155
  %5157 = vdwg.mxu0
  %5158 = vmatpush.bf16.msra.mxu0 %v3956
  %5159 = vmatpush.bf16.msra.mxu0 %v3952
  %5160 = vmatpush.bf16.msra.mxu0 %v3948
  %5161 = vmatpush.bf16.msra.mxu0 %v3944
  %5162 = vmatpush.bf16.msra.mxu0 %v3940
  %5163 = vmatpush.bf16.msra.mxu0 %v3936
  %5164 = vmatpush.bf16.msra.mxu0 %v3932
  %5165 = vmatpush.bf16.msra.mxu0 %v3928
  %5166 = vmatmul.bf16.gmra.mxu0 %v938
  %v5167 = vpop.f32.mrf.mxu0
  %v5168 = vadd.f32 %v5154, %v5167
  %v5169 = vpop.f32.mrf.mxu0
  %v5170 = vadd.f32 %v5156, %v5169
  %5171 = vdwg.mxu0
  %5172 = vmatpush.bf16.msra.mxu0 %v3988
  %5173 = vmatpush.bf16.msra.mxu0 %v3984
  %5174 = vmatpush.bf16.msra.mxu0 %v3980
  %5175 = vmatpush.bf16.msra.mxu0 %v3976
  %5176 = vmatpush.bf16.msra.mxu0 %v3972
  %5177 = vmatpush.bf16.msra.mxu0 %v3968
  %5178 = vmatpush.bf16.msra.mxu0 %v3964
  %5179 = vmatpush.bf16.msra.mxu0 %v3960
  %5180 = vmatmul.bf16.gmra.mxu0 %v939
  %v5181 = vpop.f32.mrf.mxu0
  %v5182 = vadd.f32 %v5168, %v5181
  %v5183 = vpop.f32.mrf.mxu0
  %v5184 = vadd.f32 %v5170, %v5183
  %5185 = vdwg.mxu0
  %5186 = vmatpush.bf16.msra.mxu0 %v4020
  %5187 = vmatpush.bf16.msra.mxu0 %v4016
  %5188 = vmatpush.bf16.msra.mxu0 %v4012
  %5189 = vmatpush.bf16.msra.mxu0 %v4008
  %5190 = vmatpush.bf16.msra.mxu0 %v4004
  %5191 = vmatpush.bf16.msra.mxu0 %v4000
  %5192 = vmatpush.bf16.msra.mxu0 %v3996
  %5193 = vmatpush.bf16.msra.mxu0 %v3992
  %5194 = vmatmul.bf16.gmra.mxu0 %v940
  %v5195 = vpop.f32.mrf.mxu0
  %v5196 = vadd.f32 %v5182, %v5195
  %v5197 = vpop.f32.mrf.mxu0
  %v5198 = vadd.f32 %v5184, %v5197
  %5199 = vdwg.mxu0
  %5200 = vmatpush.bf16.msra.mxu0 %v4052
  %5201 = vmatpush.bf16.msra.mxu0 %v4048
  %5202 = vmatpush.bf16.msra.mxu0 %v4044
  %5203 = vmatpush.bf16.msra.mxu0 %v4040
  %5204 = vmatpush.bf16.msra.mxu0 %v4036
  %5205 = vmatpush.bf16.msra.mxu0 %v4032
  %5206 = vmatpush.bf16.msra.mxu0 %v4028
  %5207 = vmatpush.bf16.msra.mxu0 %v4024
  %5208 = vmatmul.bf16.gmra.mxu0 %v941
  %v5209 = vpop.f32.mrf.mxu0
  %v5210 = vadd.f32 %v5196, %v5209
  %v5211 = vpop.f32.mrf.mxu0
  %v5212 = vadd.f32 %v5198, %v5211
  %5213 = vdwg.mxu0
  %5214 = vmatpush.bf16.msra.mxu0 %v4084
  %5215 = vmatpush.bf16.msra.mxu0 %v4080
  %5216 = vmatpush.bf16.msra.mxu0 %v4076
  %5217 = vmatpush.bf16.msra.mxu0 %v4072
  %5218 = vmatpush.bf16.msra.mxu0 %v4068
  %5219 = vmatpush.bf16.msra.mxu0 %v4064
  %5220 = vmatpush.bf16.msra.mxu0 %v4060
  %5221 = vmatpush.bf16.msra.mxu0 %v4056
  %5222 = vmatmul.bf16.gmra.mxu0 %v942
  %v5223 = vpop.f32.mrf.mxu0
  %v5224 = vadd.f32 %v5210, %v5223
  %v5225 = vpop.f32.mrf.mxu0
  %v5226 = vadd.f32 %v5212, %v5225
  %5227 = vdwg.mxu0
  %5228 = vmatpush.bf16.msra.mxu0 0
  %5229 = vmatpush.bf16.msra.mxu0 0
  %5230 = vmatpush.bf16.msra.mxu0 0
  %5231 = vmatpush.bf16.msra.mxu0 0
  %5232 = vmatpush.bf16.msra.mxu0 %v4100
  %5233 = vmatpush.bf16.msra.mxu0 %v4096
  %5234 = vmatpush.bf16.msra.mxu0 %v4092
  %5235 = vmatpush.bf16.msra.mxu0 %v4088
  %5236 = vmatmul.bf16.gmra.mxu0 %v4890
  %v5237 = vpop.f32.mrf.mxu0
  %v5238 = vadd.f32 %v5224, %v5237
  %v5239 = vpop.f32.mrf.mxu0
  %v5240 = vadd.f32 %v5226, %v5239
  %5241 = vdwg.mxu0
  %5242 = vmatpush.bf16.msra.mxu0 %v3349
  %5243 = vmatpush.bf16.msra.mxu0 %v3345
  %5244 = vmatpush.bf16.msra.mxu0 %v3341
  %5245 = vmatpush.bf16.msra.mxu0 %v3337
  %5246 = vmatpush.bf16.msra.mxu0 %v3333
  %5247 = vmatpush.bf16.msra.mxu0 %v3329
  %5248 = vmatpush.bf16.msra.mxu0 %v3325
  %5249 = vmatpush.bf16.msra.mxu0 %v3321
  %5250 = vmatmul.bf16.gmra.mxu0 %v919
  %v5251 = vpop.f32.mrf.mxu0
  %v5252 = vadd.f32 %v836, %v5251
  %v5253 = vpop.f32.mrf.mxu0
  %v5254 = vadd.f32 %v836, %v5253
  %5255 = vdwg.mxu0
  %5256 = vmatpush.bf16.msra.mxu0 %v3381
  %5257 = vmatpush.bf16.msra.mxu0 %v3377
  %5258 = vmatpush.bf16.msra.mxu0 %v3373
  %5259 = vmatpush.bf16.msra.mxu0 %v3369
  %5260 = vmatpush.bf16.msra.mxu0 %v3365
  %5261 = vmatpush.bf16.msra.mxu0 %v3361
  %5262 = vmatpush.bf16.msra.mxu0 %v3357
  %5263 = vmatpush.bf16.msra.mxu0 %v3353
  %5264 = vmatmul.bf16.gmra.mxu0 %v920
  %v5265 = vpop.f32.mrf.mxu0
  %v5266 = vadd.f32 %v5252, %v5265
  %v5267 = vpop.f32.mrf.mxu0
  %v5268 = vadd.f32 %v5254, %v5267
  %5269 = vdwg.mxu0
  %5270 = vmatpush.bf16.msra.mxu0 %v3413
  %5271 = vmatpush.bf16.msra.mxu0 %v3409
  %5272 = vmatpush.bf16.msra.mxu0 %v3405
  %5273 = vmatpush.bf16.msra.mxu0 %v3401
  %5274 = vmatpush.bf16.msra.mxu0 %v3397
  %5275 = vmatpush.bf16.msra.mxu0 %v3393
  %5276 = vmatpush.bf16.msra.mxu0 %v3389
  %5277 = vmatpush.bf16.msra.mxu0 %v3385
  %5278 = vmatmul.bf16.gmra.mxu0 %v921
  %v5279 = vpop.f32.mrf.mxu0
  %v5280 = vadd.f32 %v5266, %v5279
  %v5281 = vpop.f32.mrf.mxu0
  %v5282 = vadd.f32 %v5268, %v5281
  %5283 = vdwg.mxu0
  %5284 = vmatpush.bf16.msra.mxu0 %v3445
  %5285 = vmatpush.bf16.msra.mxu0 %v3441
  %5286 = vmatpush.bf16.msra.mxu0 %v3437
  %5287 = vmatpush.bf16.msra.mxu0 %v3433
  %5288 = vmatpush.bf16.msra.mxu0 %v3429
  %5289 = vmatpush.bf16.msra.mxu0 %v3425
  %5290 = vmatpush.bf16.msra.mxu0 %v3421
  %5291 = vmatpush.bf16.msra.mxu0 %v3417
  %5292 = vmatmul.bf16.gmra.mxu0 %v922
  %v5293 = vpop.f32.mrf.mxu0
  %v5294 = vadd.f32 %v5280, %v5293
  %v5295 = vpop.f32.mrf.mxu0
  %v5296 = vadd.f32 %v5282, %v5295
  %5297 = vdwg.mxu0
  %5298 = vmatpush.bf16.msra.mxu0 %v3477
  %5299 = vmatpush.bf16.msra.mxu0 %v3473
  %5300 = vmatpush.bf16.msra.mxu0 %v3469
  %5301 = vmatpush.bf16.msra.mxu0 %v3465
  %5302 = vmatpush.bf16.msra.mxu0 %v3461
  %5303 = vmatpush.bf16.msra.mxu0 %v3457
  %5304 = vmatpush.bf16.msra.mxu0 %v3453
  %5305 = vmatpush.bf16.msra.mxu0 %v3449
  %5306 = vmatmul.bf16.gmra.mxu0 %v923
  %v5307 = vpop.f32.mrf.mxu0
  %v5308 = vadd.f32 %v5294, %v5307
  %v5309 = vpop.f32.mrf.mxu0
  %v5310 = vadd.f32 %v5296, %v5309
  %5311 = vdwg.mxu0
  %5312 = vmatpush.bf16.msra.mxu0 %v3509
  %5313 = vmatpush.bf16.msra.mxu0 %v3505
  %5314 = vmatpush.bf16.msra.mxu0 %v3501
  %5315 = vmatpush.bf16.msra.mxu0 %v3497
  %5316 = vmatpush.bf16.msra.mxu0 %v3493
  %5317 = vmatpush.bf16.msra.mxu0 %v3489
  %5318 = vmatpush.bf16.msra.mxu0 %v3485
  %5319 = vmatpush.bf16.msra.mxu0 %v3481
  %5320 = vmatmul.bf16.gmra.mxu0 %v924
  %v5321 = vpop.f32.mrf.mxu0
  %v5322 = vadd.f32 %v5308, %v5321
  %v5323 = vpop.f32.mrf.mxu0
  %v5324 = vadd.f32 %v5310, %v5323
  %5325 = vdwg.mxu0
  %5326 = vmatpush.bf16.msra.mxu0 %v3541
  %5327 = vmatpush.bf16.msra.mxu0 %v3537
  %5328 = vmatpush.bf16.msra.mxu0 %v3533
  %5329 = vmatpush.bf16.msra.mxu0 %v3529
  %5330 = vmatpush.bf16.msra.mxu0 %v3525
  %5331 = vmatpush.bf16.msra.mxu0 %v3521
  %5332 = vmatpush.bf16.msra.mxu0 %v3517
  %5333 = vmatpush.bf16.msra.mxu0 %v3513
  %5334 = vmatmul.bf16.gmra.mxu0 %v925
  %v5335 = vpop.f32.mrf.mxu0
  %v5336 = vadd.f32 %v5322, %v5335
  %v5337 = vpop.f32.mrf.mxu0
  %v5338 = vadd.f32 %v5324, %v5337
  %5339 = vdwg.mxu0
  %5340 = vmatpush.bf16.msra.mxu0 %v3573
  %5341 = vmatpush.bf16.msra.mxu0 %v3569
  %5342 = vmatpush.bf16.msra.mxu0 %v3565
  %5343 = vmatpush.bf16.msra.mxu0 %v3561
  %5344 = vmatpush.bf16.msra.mxu0 %v3557
  %5345 = vmatpush.bf16.msra.mxu0 %v3553
  %5346 = vmatpush.bf16.msra.mxu0 %v3549
  %5347 = vmatpush.bf16.msra.mxu0 %v3545
  %5348 = vmatmul.bf16.gmra.mxu0 %v926
  %v5349 = vpop.f32.mrf.mxu0
  %v5350 = vadd.f32 %v5336, %v5349
  %v5351 = vpop.f32.mrf.mxu0
  %v5352 = vadd.f32 %v5338, %v5351
  %5353 = vdwg.mxu0
  %5354 = vmatpush.bf16.msra.mxu0 %v3605
  %5355 = vmatpush.bf16.msra.mxu0 %v3601
  %5356 = vmatpush.bf16.msra.mxu0 %v3597
  %5357 = vmatpush.bf16.msra.mxu0 %v3593
  %5358 = vmatpush.bf16.msra.mxu0 %v3589
  %5359 = vmatpush.bf16.msra.mxu0 %v3585
  %5360 = vmatpush.bf16.msra.mxu0 %v3581
  %5361 = vmatpush.bf16.msra.mxu0 %v3577
  %5362 = vmatmul.bf16.gmra.mxu0 %v927
  %v5363 = vpop.f32.mrf.mxu0
  %v5364 = vadd.f32 %v5350, %v5363
  %v5365 = vpop.f32.mrf.mxu0
  %v5366 = vadd.f32 %v5352, %v5365
  %5367 = vdwg.mxu0
  %5368 = vmatpush.bf16.msra.mxu0 %v3637
  %5369 = vmatpush.bf16.msra.mxu0 %v3633
  %5370 = vmatpush.bf16.msra.mxu0 %v3629
  %5371 = vmatpush.bf16.msra.mxu0 %v3625
  %5372 = vmatpush.bf16.msra.mxu0 %v3621
  %5373 = vmatpush.bf16.msra.mxu0 %v3617
  %5374 = vmatpush.bf16.msra.mxu0 %v3613
  %5375 = vmatpush.bf16.msra.mxu0 %v3609
  %5376 = vmatmul.bf16.gmra.mxu0 %v928
  %v5377 = vpop.f32.mrf.mxu0
  %v5378 = vadd.f32 %v5364, %v5377
  %v5379 = vpop.f32.mrf.mxu0
  %v5380 = vadd.f32 %v5366, %v5379
  %5381 = vdwg.mxu0
  %5382 = vmatpush.bf16.msra.mxu0 %v3669
  %5383 = vmatpush.bf16.msra.mxu0 %v3665
  %5384 = vmatpush.bf16.msra.mxu0 %v3661
  %5385 = vmatpush.bf16.msra.mxu0 %v3657
  %5386 = vmatpush.bf16.msra.mxu0 %v3653
  %5387 = vmatpush.bf16.msra.mxu0 %v3649
  %5388 = vmatpush.bf16.msra.mxu0 %v3645
  %5389 = vmatpush.bf16.msra.mxu0 %v3641
  %5390 = vmatmul.bf16.gmra.mxu0 %v929
  %v5391 = vpop.f32.mrf.mxu0
  %v5392 = vadd.f32 %v5378, %v5391
  %v5393 = vpop.f32.mrf.mxu0
  %v5394 = vadd.f32 %v5380, %v5393
  %5395 = vdwg.mxu0
  %5396 = vmatpush.bf16.msra.mxu0 %v3701
  %5397 = vmatpush.bf16.msra.mxu0 %v3697
  %5398 = vmatpush.bf16.msra.mxu0 %v3693
  %5399 = vmatpush.bf16.msra.mxu0 %v3689
  %5400 = vmatpush.bf16.msra.mxu0 %v3685
  %5401 = vmatpush.bf16.msra.mxu0 %v3681
  %5402 = vmatpush.bf16.msra.mxu0 %v3677
  %5403 = vmatpush.bf16.msra.mxu0 %v3673
  %5404 = vmatmul.bf16.gmra.mxu0 %v930
  %v5405 = vpop.f32.mrf.mxu0
  %v5406 = vadd.f32 %v5392, %v5405
  %v5407 = vpop.f32.mrf.mxu0
  %v5408 = vadd.f32 %v5394, %v5407
  %5409 = vdwg.mxu0
  %5410 = vmatpush.bf16.msra.mxu0 %v3733
  %5411 = vmatpush.bf16.msra.mxu0 %v3729
  %5412 = vmatpush.bf16.msra.mxu0 %v3725
  %5413 = vmatpush.bf16.msra.mxu0 %v3721
  %5414 = vmatpush.bf16.msra.mxu0 %v3717
  %5415 = vmatpush.bf16.msra.mxu0 %v3713
  %5416 = vmatpush.bf16.msra.mxu0 %v3709
  %5417 = vmatpush.bf16.msra.mxu0 %v3705
  %5418 = vmatmul.bf16.gmra.mxu0 %v931
  %v5419 = vpop.f32.mrf.mxu0
  %v5420 = vadd.f32 %v5406, %v5419
  %v5421 = vpop.f32.mrf.mxu0
  %v5422 = vadd.f32 %v5408, %v5421
  %5423 = vdwg.mxu0
  %5424 = vmatpush.bf16.msra.mxu0 %v3765
  %5425 = vmatpush.bf16.msra.mxu0 %v3761
  %5426 = vmatpush.bf16.msra.mxu0 %v3757
  %5427 = vmatpush.bf16.msra.mxu0 %v3753
  %5428 = vmatpush.bf16.msra.mxu0 %v3749
  %5429 = vmatpush.bf16.msra.mxu0 %v3745
  %5430 = vmatpush.bf16.msra.mxu0 %v3741
  %5431 = vmatpush.bf16.msra.mxu0 %v3737
  %5432 = vmatmul.bf16.gmra.mxu0 %v932
  %v5433 = vpop.f32.mrf.mxu0
  %v5434 = vadd.f32 %v5420, %v5433
  %v5435 = vpop.f32.mrf.mxu0
  %v5436 = vadd.f32 %v5422, %v5435
  %5437 = vdwg.mxu0
  %5438 = vmatpush.bf16.msra.mxu0 %v3797
  %5439 = vmatpush.bf16.msra.mxu0 %v3793
  %5440 = vmatpush.bf16.msra.mxu0 %v3789
  %5441 = vmatpush.bf16.msra.mxu0 %v3785
  %5442 = vmatpush.bf16.msra.mxu0 %v3781
  %5443 = vmatpush.bf16.msra.mxu0 %v3777
  %5444 = vmatpush.bf16.msra.mxu0 %v3773
  %5445 = vmatpush.bf16.msra.mxu0 %v3769
  %5446 = vmatmul.bf16.gmra.mxu0 %v933
  %v5447 = vpop.f32.mrf.mxu0
  %v5448 = vadd.f32 %v5434, %v5447
  %v5449 = vpop.f32.mrf.mxu0
  %v5450 = vadd.f32 %v5436, %v5449
  %5451 = vdwg.mxu0
  %5452 = vmatpush.bf16.msra.mxu0 %v3829
  %5453 = vmatpush.bf16.msra.mxu0 %v3825
  %5454 = vmatpush.bf16.msra.mxu0 %v3821
  %5455 = vmatpush.bf16.msra.mxu0 %v3817
  %5456 = vmatpush.bf16.msra.mxu0 %v3813
  %5457 = vmatpush.bf16.msra.mxu0 %v3809
  %5458 = vmatpush.bf16.msra.mxu0 %v3805
  %5459 = vmatpush.bf16.msra.mxu0 %v3801
  %5460 = vmatmul.bf16.gmra.mxu0 %v934
  %v5461 = vpop.f32.mrf.mxu0
  %v5462 = vadd.f32 %v5448, %v5461
  %v5463 = vpop.f32.mrf.mxu0
  %v5464 = vadd.f32 %v5450, %v5463
  %5465 = vdwg.mxu0
  %5466 = vmatpush.bf16.msra.mxu0 %v3861
  %5467 = vmatpush.bf16.msra.mxu0 %v3857
  %5468 = vmatpush.bf16.msra.mxu0 %v3853
  %5469 = vmatpush.bf16.msra.mxu0 %v3849
  %5470 = vmatpush.bf16.msra.mxu0 %v3845
  %5471 = vmatpush.bf16.msra.mxu0 %v3841
  %5472 = vmatpush.bf16.msra.mxu0 %v3837
  %5473 = vmatpush.bf16.msra.mxu0 %v3833
  %5474 = vmatmul.bf16.gmra.mxu0 %v935
  %v5475 = vpop.f32.mrf.mxu0
  %v5476 = vadd.f32 %v5462, %v5475
  %v5477 = vpop.f32.mrf.mxu0
  %v5478 = vadd.f32 %v5464, %v5477
  %5479 = vdwg.mxu0
  %5480 = vmatpush.bf16.msra.mxu0 %v3893
  %5481 = vmatpush.bf16.msra.mxu0 %v3889
  %5482 = vmatpush.bf16.msra.mxu0 %v3885
  %5483 = vmatpush.bf16.msra.mxu0 %v3881
  %5484 = vmatpush.bf16.msra.mxu0 %v3877
  %5485 = vmatpush.bf16.msra.mxu0 %v3873
  %5486 = vmatpush.bf16.msra.mxu0 %v3869
  %5487 = vmatpush.bf16.msra.mxu0 %v3865
  %5488 = vmatmul.bf16.gmra.mxu0 %v936
  %v5489 = vpop.f32.mrf.mxu0
  %v5490 = vadd.f32 %v5476, %v5489
  %v5491 = vpop.f32.mrf.mxu0
  %v5492 = vadd.f32 %v5478, %v5491
  %5493 = vdwg.mxu0
  %5494 = vmatpush.bf16.msra.mxu0 %v3925
  %5495 = vmatpush.bf16.msra.mxu0 %v3921
  %5496 = vmatpush.bf16.msra.mxu0 %v3917
  %5497 = vmatpush.bf16.msra.mxu0 %v3913
  %5498 = vmatpush.bf16.msra.mxu0 %v3909
  %5499 = vmatpush.bf16.msra.mxu0 %v3905
  %5500 = vmatpush.bf16.msra.mxu0 %v3901
  %5501 = vmatpush.bf16.msra.mxu0 %v3897
  %5502 = vmatmul.bf16.gmra.mxu0 %v937
  %v5503 = vpop.f32.mrf.mxu0
  %v5504 = vadd.f32 %v5490, %v5503
  %v5505 = vpop.f32.mrf.mxu0
  %v5506 = vadd.f32 %v5492, %v5505
  %5507 = vdwg.mxu0
  %5508 = vmatpush.bf16.msra.mxu0 %v3957
  %5509 = vmatpush.bf16.msra.mxu0 %v3953
  %5510 = vmatpush.bf16.msra.mxu0 %v3949
  %5511 = vmatpush.bf16.msra.mxu0 %v3945
  %5512 = vmatpush.bf16.msra.mxu0 %v3941
  %5513 = vmatpush.bf16.msra.mxu0 %v3937
  %5514 = vmatpush.bf16.msra.mxu0 %v3933
  %5515 = vmatpush.bf16.msra.mxu0 %v3929
  %5516 = vmatmul.bf16.gmra.mxu0 %v938
  %v5517 = vpop.f32.mrf.mxu0
  %v5518 = vadd.f32 %v5504, %v5517
  %v5519 = vpop.f32.mrf.mxu0
  %v5520 = vadd.f32 %v5506, %v5519
  %5521 = vdwg.mxu0
  %5522 = vmatpush.bf16.msra.mxu0 %v3989
  %5523 = vmatpush.bf16.msra.mxu0 %v3985
  %5524 = vmatpush.bf16.msra.mxu0 %v3981
  %5525 = vmatpush.bf16.msra.mxu0 %v3977
  %5526 = vmatpush.bf16.msra.mxu0 %v3973
  %5527 = vmatpush.bf16.msra.mxu0 %v3969
  %5528 = vmatpush.bf16.msra.mxu0 %v3965
  %5529 = vmatpush.bf16.msra.mxu0 %v3961
  %5530 = vmatmul.bf16.gmra.mxu0 %v939
  %v5531 = vpop.f32.mrf.mxu0
  %v5532 = vadd.f32 %v5518, %v5531
  %v5533 = vpop.f32.mrf.mxu0
  %v5534 = vadd.f32 %v5520, %v5533
  %5535 = vdwg.mxu0
  %5536 = vmatpush.bf16.msra.mxu0 %v4021
  %5537 = vmatpush.bf16.msra.mxu0 %v4017
  %5538 = vmatpush.bf16.msra.mxu0 %v4013
  %5539 = vmatpush.bf16.msra.mxu0 %v4009
  %5540 = vmatpush.bf16.msra.mxu0 %v4005
  %5541 = vmatpush.bf16.msra.mxu0 %v4001
  %5542 = vmatpush.bf16.msra.mxu0 %v3997
  %5543 = vmatpush.bf16.msra.mxu0 %v3993
  %5544 = vmatmul.bf16.gmra.mxu0 %v940
  %v5545 = vpop.f32.mrf.mxu0
  %v5546 = vadd.f32 %v5532, %v5545
  %v5547 = vpop.f32.mrf.mxu0
  %v5548 = vadd.f32 %v5534, %v5547
  %5549 = vdwg.mxu0
  %5550 = vmatpush.bf16.msra.mxu0 %v4053
  %5551 = vmatpush.bf16.msra.mxu0 %v4049
  %5552 = vmatpush.bf16.msra.mxu0 %v4045
  %5553 = vmatpush.bf16.msra.mxu0 %v4041
  %5554 = vmatpush.bf16.msra.mxu0 %v4037
  %5555 = vmatpush.bf16.msra.mxu0 %v4033
  %5556 = vmatpush.bf16.msra.mxu0 %v4029
  %5557 = vmatpush.bf16.msra.mxu0 %v4025
  %5558 = vmatmul.bf16.gmra.mxu0 %v941
  %v5559 = vpop.f32.mrf.mxu0
  %v5560 = vadd.f32 %v5546, %v5559
  %v5561 = vpop.f32.mrf.mxu0
  %v5562 = vadd.f32 %v5548, %v5561
  %5563 = vdwg.mxu0
  %5564 = vmatpush.bf16.msra.mxu0 %v4085
  %5565 = vmatpush.bf16.msra.mxu0 %v4081
  %5566 = vmatpush.bf16.msra.mxu0 %v4077
  %5567 = vmatpush.bf16.msra.mxu0 %v4073
  %5568 = vmatpush.bf16.msra.mxu0 %v4069
  %5569 = vmatpush.bf16.msra.mxu0 %v4065
  %5570 = vmatpush.bf16.msra.mxu0 %v4061
  %5571 = vmatpush.bf16.msra.mxu0 %v4057
  %5572 = vmatmul.bf16.gmra.mxu0 %v942
  %v5573 = vpop.f32.mrf.mxu0
  %v5574 = vadd.f32 %v5560, %v5573
  %v5575 = vpop.f32.mrf.mxu0
  %v5576 = vadd.f32 %v5562, %v5575
  %5577 = vdwg.mxu0
  %5578 = vmatpush.bf16.msra.mxu0 0
  %5579 = vmatpush.bf16.msra.mxu0 0
  %5580 = vmatpush.bf16.msra.mxu0 0
  %5581 = vmatpush.bf16.msra.mxu0 0
  %5582 = vmatpush.bf16.msra.mxu0 %v4101
  %5583 = vmatpush.bf16.msra.mxu0 %v4097
  %5584 = vmatpush.bf16.msra.mxu0 %v4093
  %5585 = vmatpush.bf16.msra.mxu0 %v4089
  %5586 = vmatmul.bf16.gmra.mxu0 %v4890
  %v5587 = vpop.f32.mrf.mxu0
  %v5588 = vadd.f32 %v5574, %v5587
  %v5589 = vpop.f32.mrf.mxu0
  %v5590 = vadd.f32 %v5576, %v5589
  %5591 = vdwg.mxu0
  %5592 = vmatpush.bf16.msra.mxu0 %v3350
  %5593 = vmatpush.bf16.msra.mxu0 %v3346
  %5594 = vmatpush.bf16.msra.mxu0 %v3342
  %5595 = vmatpush.bf16.msra.mxu0 %v3338
  %5596 = vmatpush.bf16.msra.mxu0 %v3334
  %5597 = vmatpush.bf16.msra.mxu0 %v3330
  %5598 = vmatpush.bf16.msra.mxu0 %v3326
  %5599 = vmatpush.bf16.msra.mxu0 %v3322
  %5600 = vmatmul.bf16.gmra.mxu0 %v919
  %v5601 = vpop.f32.mrf.mxu0
  %v5602 = vadd.f32 %v837, %v5601
  %v5603 = vpop.f32.mrf.mxu0
  %v5604 = vadd.f32 %v837, %v5603
  %5605 = vdwg.mxu0
  %5606 = vmatpush.bf16.msra.mxu0 %v3382
  %5607 = vmatpush.bf16.msra.mxu0 %v3378
  %5608 = vmatpush.bf16.msra.mxu0 %v3374
  %5609 = vmatpush.bf16.msra.mxu0 %v3370
  %5610 = vmatpush.bf16.msra.mxu0 %v3366
  %5611 = vmatpush.bf16.msra.mxu0 %v3362
  %5612 = vmatpush.bf16.msra.mxu0 %v3358
  %5613 = vmatpush.bf16.msra.mxu0 %v3354
  %5614 = vmatmul.bf16.gmra.mxu0 %v920
  %v5615 = vpop.f32.mrf.mxu0
  %v5616 = vadd.f32 %v5602, %v5615
  %v5617 = vpop.f32.mrf.mxu0
  %v5618 = vadd.f32 %v5604, %v5617
  %5619 = vdwg.mxu0
  %5620 = vmatpush.bf16.msra.mxu0 %v3414
  %5621 = vmatpush.bf16.msra.mxu0 %v3410
  %5622 = vmatpush.bf16.msra.mxu0 %v3406
  %5623 = vmatpush.bf16.msra.mxu0 %v3402
  %5624 = vmatpush.bf16.msra.mxu0 %v3398
  %5625 = vmatpush.bf16.msra.mxu0 %v3394
  %5626 = vmatpush.bf16.msra.mxu0 %v3390
  %5627 = vmatpush.bf16.msra.mxu0 %v3386
  %5628 = vmatmul.bf16.gmra.mxu0 %v921
  %v5629 = vpop.f32.mrf.mxu0
  %v5630 = vadd.f32 %v5616, %v5629
  %v5631 = vpop.f32.mrf.mxu0
  %v5632 = vadd.f32 %v5618, %v5631
  %5633 = vdwg.mxu0
  %5634 = vmatpush.bf16.msra.mxu0 %v3446
  %5635 = vmatpush.bf16.msra.mxu0 %v3442
  %5636 = vmatpush.bf16.msra.mxu0 %v3438
  %5637 = vmatpush.bf16.msra.mxu0 %v3434
  %5638 = vmatpush.bf16.msra.mxu0 %v3430
  %5639 = vmatpush.bf16.msra.mxu0 %v3426
  %5640 = vmatpush.bf16.msra.mxu0 %v3422
  %5641 = vmatpush.bf16.msra.mxu0 %v3418
  %5642 = vmatmul.bf16.gmra.mxu0 %v922
  %v5643 = vpop.f32.mrf.mxu0
  %v5644 = vadd.f32 %v5630, %v5643
  %v5645 = vpop.f32.mrf.mxu0
  %v5646 = vadd.f32 %v5632, %v5645
  %5647 = vdwg.mxu0
  %5648 = vmatpush.bf16.msra.mxu0 %v3478
  %5649 = vmatpush.bf16.msra.mxu0 %v3474
  %5650 = vmatpush.bf16.msra.mxu0 %v3470
  %5651 = vmatpush.bf16.msra.mxu0 %v3466
  %5652 = vmatpush.bf16.msra.mxu0 %v3462
  %5653 = vmatpush.bf16.msra.mxu0 %v3458
  %5654 = vmatpush.bf16.msra.mxu0 %v3454
  %5655 = vmatpush.bf16.msra.mxu0 %v3450
  %5656 = vmatmul.bf16.gmra.mxu0 %v923
  %v5657 = vpop.f32.mrf.mxu0
  %v5658 = vadd.f32 %v5644, %v5657
  %v5659 = vpop.f32.mrf.mxu0
  %v5660 = vadd.f32 %v5646, %v5659
  %5661 = vdwg.mxu0
  %5662 = vmatpush.bf16.msra.mxu0 %v3510
  %5663 = vmatpush.bf16.msra.mxu0 %v3506
  %5664 = vmatpush.bf16.msra.mxu0 %v3502
  %5665 = vmatpush.bf16.msra.mxu0 %v3498
  %5666 = vmatpush.bf16.msra.mxu0 %v3494
  %5667 = vmatpush.bf16.msra.mxu0 %v3490
  %5668 = vmatpush.bf16.msra.mxu0 %v3486
  %5669 = vmatpush.bf16.msra.mxu0 %v3482
  %5670 = vmatmul.bf16.gmra.mxu0 %v924
  %v5671 = vpop.f32.mrf.mxu0
  %v5672 = vadd.f32 %v5658, %v5671
  %v5673 = vpop.f32.mrf.mxu0
  %v5674 = vadd.f32 %v5660, %v5673
  %5675 = vdwg.mxu0
  %5676 = vmatpush.bf16.msra.mxu0 %v3542
  %5677 = vmatpush.bf16.msra.mxu0 %v3538
  %5678 = vmatpush.bf16.msra.mxu0 %v3534
  %5679 = vmatpush.bf16.msra.mxu0 %v3530
  %5680 = vmatpush.bf16.msra.mxu0 %v3526
  %5681 = vmatpush.bf16.msra.mxu0 %v3522
  %5682 = vmatpush.bf16.msra.mxu0 %v3518
  %5683 = vmatpush.bf16.msra.mxu0 %v3514
  %5684 = vmatmul.bf16.gmra.mxu0 %v925
  %v5685 = vpop.f32.mrf.mxu0
  %v5686 = vadd.f32 %v5672, %v5685
  %v5687 = vpop.f32.mrf.mxu0
  %v5688 = vadd.f32 %v5674, %v5687
  %5689 = vdwg.mxu0
  %5690 = vmatpush.bf16.msra.mxu0 %v3574
  %5691 = vmatpush.bf16.msra.mxu0 %v3570
  %5692 = vmatpush.bf16.msra.mxu0 %v3566
  %5693 = vmatpush.bf16.msra.mxu0 %v3562
  %5694 = vmatpush.bf16.msra.mxu0 %v3558
  %5695 = vmatpush.bf16.msra.mxu0 %v3554
  %5696 = vmatpush.bf16.msra.mxu0 %v3550
  %5697 = vmatpush.bf16.msra.mxu0 %v3546
  %5698 = vmatmul.bf16.gmra.mxu0 %v926
  %v5699 = vpop.f32.mrf.mxu0
  %v5700 = vadd.f32 %v5686, %v5699
  %v5701 = vpop.f32.mrf.mxu0
  %v5702 = vadd.f32 %v5688, %v5701
  %5703 = vdwg.mxu0
  %5704 = vmatpush.bf16.msra.mxu0 %v3606
  %5705 = vmatpush.bf16.msra.mxu0 %v3602
  %5706 = vmatpush.bf16.msra.mxu0 %v3598
  %5707 = vmatpush.bf16.msra.mxu0 %v3594
  %5708 = vmatpush.bf16.msra.mxu0 %v3590
  %5709 = vmatpush.bf16.msra.mxu0 %v3586
  %5710 = vmatpush.bf16.msra.mxu0 %v3582
  %5711 = vmatpush.bf16.msra.mxu0 %v3578
  %5712 = vmatmul.bf16.gmra.mxu0 %v927
  %v5713 = vpop.f32.mrf.mxu0
  %v5714 = vadd.f32 %v5700, %v5713
  %v5715 = vpop.f32.mrf.mxu0
  %v5716 = vadd.f32 %v5702, %v5715
  %5717 = vdwg.mxu0
  %5718 = vmatpush.bf16.msra.mxu0 %v3638
  %5719 = vmatpush.bf16.msra.mxu0 %v3634
  %5720 = vmatpush.bf16.msra.mxu0 %v3630
  %5721 = vmatpush.bf16.msra.mxu0 %v3626
  %5722 = vmatpush.bf16.msra.mxu0 %v3622
  %5723 = vmatpush.bf16.msra.mxu0 %v3618
  %5724 = vmatpush.bf16.msra.mxu0 %v3614
  %5725 = vmatpush.bf16.msra.mxu0 %v3610
  %5726 = vmatmul.bf16.gmra.mxu0 %v928
  %v5727 = vpop.f32.mrf.mxu0
  %v5728 = vadd.f32 %v5714, %v5727
  %v5729 = vpop.f32.mrf.mxu0
  %v5730 = vadd.f32 %v5716, %v5729
  %5731 = vdwg.mxu0
  %5732 = vmatpush.bf16.msra.mxu0 %v3670
  %5733 = vmatpush.bf16.msra.mxu0 %v3666
  %5734 = vmatpush.bf16.msra.mxu0 %v3662
  %5735 = vmatpush.bf16.msra.mxu0 %v3658
  %5736 = vmatpush.bf16.msra.mxu0 %v3654
  %5737 = vmatpush.bf16.msra.mxu0 %v3650
  %5738 = vmatpush.bf16.msra.mxu0 %v3646
  %5739 = vmatpush.bf16.msra.mxu0 %v3642
  %5740 = vmatmul.bf16.gmra.mxu0 %v929
  %v5741 = vpop.f32.mrf.mxu0
  %v5742 = vadd.f32 %v5728, %v5741
  %v5743 = vpop.f32.mrf.mxu0
  %v5744 = vadd.f32 %v5730, %v5743
  %5745 = vdwg.mxu0
  %5746 = vmatpush.bf16.msra.mxu0 %v3702
  %5747 = vmatpush.bf16.msra.mxu0 %v3698
  %5748 = vmatpush.bf16.msra.mxu0 %v3694
  %5749 = vmatpush.bf16.msra.mxu0 %v3690
  %5750 = vmatpush.bf16.msra.mxu0 %v3686
  %5751 = vmatpush.bf16.msra.mxu0 %v3682
  %5752 = vmatpush.bf16.msra.mxu0 %v3678
  %5753 = vmatpush.bf16.msra.mxu0 %v3674
  %5754 = vmatmul.bf16.gmra.mxu0 %v930
  %v5755 = vpop.f32.mrf.mxu0
  %v5756 = vadd.f32 %v5742, %v5755
  %v5757 = vpop.f32.mrf.mxu0
  %v5758 = vadd.f32 %v5744, %v5757
  %5759 = vdwg.mxu0
  %5760 = vmatpush.bf16.msra.mxu0 %v3734
  %5761 = vmatpush.bf16.msra.mxu0 %v3730
  %5762 = vmatpush.bf16.msra.mxu0 %v3726
  %5763 = vmatpush.bf16.msra.mxu0 %v3722
  %5764 = vmatpush.bf16.msra.mxu0 %v3718
  %5765 = vmatpush.bf16.msra.mxu0 %v3714
  %5766 = vmatpush.bf16.msra.mxu0 %v3710
  %5767 = vmatpush.bf16.msra.mxu0 %v3706
  %5768 = vmatmul.bf16.gmra.mxu0 %v931
  %v5769 = vpop.f32.mrf.mxu0
  %v5770 = vadd.f32 %v5756, %v5769
  %v5771 = vpop.f32.mrf.mxu0
  %v5772 = vadd.f32 %v5758, %v5771
  %5773 = vdwg.mxu0
  %5774 = vmatpush.bf16.msra.mxu0 %v3766
  %5775 = vmatpush.bf16.msra.mxu0 %v3762
  %5776 = vmatpush.bf16.msra.mxu0 %v3758
  %5777 = vmatpush.bf16.msra.mxu0 %v3754
  %5778 = vmatpush.bf16.msra.mxu0 %v3750
  %5779 = vmatpush.bf16.msra.mxu0 %v3746
  %5780 = vmatpush.bf16.msra.mxu0 %v3742
  %5781 = vmatpush.bf16.msra.mxu0 %v3738
  %5782 = vmatmul.bf16.gmra.mxu0 %v932
  %v5783 = vpop.f32.mrf.mxu0
  %v5784 = vadd.f32 %v5770, %v5783
  %v5785 = vpop.f32.mrf.mxu0
  %v5786 = vadd.f32 %v5772, %v5785
  %5787 = vdwg.mxu0
  %5788 = vmatpush.bf16.msra.mxu0 %v3798
  %5789 = vmatpush.bf16.msra.mxu0 %v3794
  %5790 = vmatpush.bf16.msra.mxu0 %v3790
  %5791 = vmatpush.bf16.msra.mxu0 %v3786
  %5792 = vmatpush.bf16.msra.mxu0 %v3782
  %5793 = vmatpush.bf16.msra.mxu0 %v3778
  %5794 = vmatpush.bf16.msra.mxu0 %v3774
  %5795 = vmatpush.bf16.msra.mxu0 %v3770
  %5796 = vmatmul.bf16.gmra.mxu0 %v933
  %v5797 = vpop.f32.mrf.mxu0
  %v5798 = vadd.f32 %v5784, %v5797
  %v5799 = vpop.f32.mrf.mxu0
  %v5800 = vadd.f32 %v5786, %v5799
  %5801 = vdwg.mxu0
  %5802 = vmatpush.bf16.msra.mxu0 %v3830
  %5803 = vmatpush.bf16.msra.mxu0 %v3826
  %5804 = vmatpush.bf16.msra.mxu0 %v3822
  %5805 = vmatpush.bf16.msra.mxu0 %v3818
  %5806 = vmatpush.bf16.msra.mxu0 %v3814
  %5807 = vmatpush.bf16.msra.mxu0 %v3810
  %5808 = vmatpush.bf16.msra.mxu0 %v3806
  %5809 = vmatpush.bf16.msra.mxu0 %v3802
  %5810 = vmatmul.bf16.gmra.mxu0 %v934
  %v5811 = vpop.f32.mrf.mxu0
  %v5812 = vadd.f32 %v5798, %v5811
  %v5813 = vpop.f32.mrf.mxu0
  %v5814 = vadd.f32 %v5800, %v5813
  %5815 = vdwg.mxu0
  %5816 = vmatpush.bf16.msra.mxu0 %v3862
  %5817 = vmatpush.bf16.msra.mxu0 %v3858
  %5818 = vmatpush.bf16.msra.mxu0 %v3854
  %5819 = vmatpush.bf16.msra.mxu0 %v3850
  %5820 = vmatpush.bf16.msra.mxu0 %v3846
  %5821 = vmatpush.bf16.msra.mxu0 %v3842
  %5822 = vmatpush.bf16.msra.mxu0 %v3838
  %5823 = vmatpush.bf16.msra.mxu0 %v3834
  %5824 = vmatmul.bf16.gmra.mxu0 %v935
  %v5825 = vpop.f32.mrf.mxu0
  %v5826 = vadd.f32 %v5812, %v5825
  %v5827 = vpop.f32.mrf.mxu0
  %v5828 = vadd.f32 %v5814, %v5827
  %5829 = vdwg.mxu0
  %5830 = vmatpush.bf16.msra.mxu0 %v3894
  %5831 = vmatpush.bf16.msra.mxu0 %v3890
  %5832 = vmatpush.bf16.msra.mxu0 %v3886
  %5833 = vmatpush.bf16.msra.mxu0 %v3882
  %5834 = vmatpush.bf16.msra.mxu0 %v3878
  %5835 = vmatpush.bf16.msra.mxu0 %v3874
  %5836 = vmatpush.bf16.msra.mxu0 %v3870
  %5837 = vmatpush.bf16.msra.mxu0 %v3866
  %5838 = vmatmul.bf16.gmra.mxu0 %v936
  %v5839 = vpop.f32.mrf.mxu0
  %v5840 = vadd.f32 %v5826, %v5839
  %v5841 = vpop.f32.mrf.mxu0
  %v5842 = vadd.f32 %v5828, %v5841
  %5843 = vdwg.mxu0
  %5844 = vmatpush.bf16.msra.mxu0 %v3926
  %5845 = vmatpush.bf16.msra.mxu0 %v3922
  %5846 = vmatpush.bf16.msra.mxu0 %v3918
  %5847 = vmatpush.bf16.msra.mxu0 %v3914
  %5848 = vmatpush.bf16.msra.mxu0 %v3910
  %5849 = vmatpush.bf16.msra.mxu0 %v3906
  %5850 = vmatpush.bf16.msra.mxu0 %v3902
  %5851 = vmatpush.bf16.msra.mxu0 %v3898
  %5852 = vmatmul.bf16.gmra.mxu0 %v937
  %v5853 = vpop.f32.mrf.mxu0
  %v5854 = vadd.f32 %v5840, %v5853
  %v5855 = vpop.f32.mrf.mxu0
  %v5856 = vadd.f32 %v5842, %v5855
  %5857 = vdwg.mxu0
  %5858 = vmatpush.bf16.msra.mxu0 %v3958
  %5859 = vmatpush.bf16.msra.mxu0 %v3954
  %5860 = vmatpush.bf16.msra.mxu0 %v3950
  %5861 = vmatpush.bf16.msra.mxu0 %v3946
  %5862 = vmatpush.bf16.msra.mxu0 %v3942
  %5863 = vmatpush.bf16.msra.mxu0 %v3938
  %5864 = vmatpush.bf16.msra.mxu0 %v3934
  %5865 = vmatpush.bf16.msra.mxu0 %v3930
  %5866 = vmatmul.bf16.gmra.mxu0 %v938
  %v5867 = vpop.f32.mrf.mxu0
  %v5868 = vadd.f32 %v5854, %v5867
  %v5869 = vpop.f32.mrf.mxu0
  %v5870 = vadd.f32 %v5856, %v5869
  %5871 = vdwg.mxu0
  %5872 = vmatpush.bf16.msra.mxu0 %v3990
  %5873 = vmatpush.bf16.msra.mxu0 %v3986
  %5874 = vmatpush.bf16.msra.mxu0 %v3982
  %5875 = vmatpush.bf16.msra.mxu0 %v3978
  %5876 = vmatpush.bf16.msra.mxu0 %v3974
  %5877 = vmatpush.bf16.msra.mxu0 %v3970
  %5878 = vmatpush.bf16.msra.mxu0 %v3966
  %5879 = vmatpush.bf16.msra.mxu0 %v3962
  %5880 = vmatmul.bf16.gmra.mxu0 %v939
  %v5881 = vpop.f32.mrf.mxu0
  %v5882 = vadd.f32 %v5868, %v5881
  %v5883 = vpop.f32.mrf.mxu0
  %v5884 = vadd.f32 %v5870, %v5883
  %5885 = vdwg.mxu0
  %5886 = vmatpush.bf16.msra.mxu0 %v4022
  %5887 = vmatpush.bf16.msra.mxu0 %v4018
  %5888 = vmatpush.bf16.msra.mxu0 %v4014
  %5889 = vmatpush.bf16.msra.mxu0 %v4010
  %5890 = vmatpush.bf16.msra.mxu0 %v4006
  %5891 = vmatpush.bf16.msra.mxu0 %v4002
  %5892 = vmatpush.bf16.msra.mxu0 %v3998
  %5893 = vmatpush.bf16.msra.mxu0 %v3994
  %5894 = vmatmul.bf16.gmra.mxu0 %v940
  %v5895 = vpop.f32.mrf.mxu0
  %v5896 = vadd.f32 %v5882, %v5895
  %v5897 = vpop.f32.mrf.mxu0
  %v5898 = vadd.f32 %v5884, %v5897
  %5899 = vdwg.mxu0
  %5900 = vmatpush.bf16.msra.mxu0 %v4054
  %5901 = vmatpush.bf16.msra.mxu0 %v4050
  %5902 = vmatpush.bf16.msra.mxu0 %v4046
  %5903 = vmatpush.bf16.msra.mxu0 %v4042
  %5904 = vmatpush.bf16.msra.mxu0 %v4038
  %5905 = vmatpush.bf16.msra.mxu0 %v4034
  %5906 = vmatpush.bf16.msra.mxu0 %v4030
  %5907 = vmatpush.bf16.msra.mxu0 %v4026
  %5908 = vmatmul.bf16.gmra.mxu0 %v941
  %v5909 = vpop.f32.mrf.mxu0
  %v5910 = vadd.f32 %v5896, %v5909
  %v5911 = vpop.f32.mrf.mxu0
  %v5912 = vadd.f32 %v5898, %v5911
  %5913 = vdwg.mxu0
  %5914 = vmatpush.bf16.msra.mxu0 %v4086
  %5915 = vmatpush.bf16.msra.mxu0 %v4082
  %5916 = vmatpush.bf16.msra.mxu0 %v4078
  %5917 = vmatpush.bf16.msra.mxu0 %v4074
  %5918 = vmatpush.bf16.msra.mxu0 %v4070
  %5919 = vmatpush.bf16.msra.mxu0 %v4066
  %5920 = vmatpush.bf16.msra.mxu0 %v4062
  %5921 = vmatpush.bf16.msra.mxu0 %v4058
  %5922 = vmatmul.bf16.gmra.mxu0 %v942
  %v5923 = vpop.f32.mrf.mxu0
  %v5924 = vadd.f32 %v5910, %v5923
  %v5925 = vpop.f32.mrf.mxu0
  %v5926 = vadd.f32 %v5912, %v5925
  %5927 = vdwg.mxu0
  %5928 = vmatpush.bf16.msra.mxu0 0
  %5929 = vmatpush.bf16.msra.mxu0 0
  %5930 = vmatpush.bf16.msra.mxu0 0
  %5931 = vmatpush.bf16.msra.mxu0 0
  %5932 = vmatpush.bf16.msra.mxu0 %v4102
  %5933 = vmatpush.bf16.msra.mxu0 %v4098
  %5934 = vmatpush.bf16.msra.mxu0 %v4094
  %5935 = vmatpush.bf16.msra.mxu0 %v4090
  %5936 = vmatmul.bf16.gmra.mxu0 %v4890
  %v5937 = vpop.f32.mrf.mxu0
  %v5938 = vadd.f32 %v5924, %v5937
  %v5939 = vpop.f32.mrf.mxu0
  %v5940 = vadd.f32 %v5926, %v5939
  %5941 = vdwg.mxu0
  %5942 = vmatpush.bf16.msra.mxu0 %v3351
  %5943 = vmatpush.bf16.msra.mxu0 %v3347
  %5944 = vmatpush.bf16.msra.mxu0 %v3343
  %5945 = vmatpush.bf16.msra.mxu0 %v3339
  %5946 = vmatpush.bf16.msra.mxu0 %v3335
  %5947 = vmatpush.bf16.msra.mxu0 %v3331
  %5948 = vmatpush.bf16.msra.mxu0 %v3327
  %5949 = vmatpush.bf16.msra.mxu0 %v3323
  %5950 = vmatmul.bf16.gmra.mxu0 %v919
  %v5951 = vpop.f32.mrf.mxu0
  %v5952 = vadd.f32 %v838, %v5951
  %v5953 = vpop.f32.mrf.mxu0
  %v5954 = vadd.f32 %v838, %v5953
  %5955 = vdwg.mxu0
  %5956 = vmatpush.bf16.msra.mxu0 %v3383
  %5957 = vmatpush.bf16.msra.mxu0 %v3379
  %5958 = vmatpush.bf16.msra.mxu0 %v3375
  %5959 = vmatpush.bf16.msra.mxu0 %v3371
  %5960 = vmatpush.bf16.msra.mxu0 %v3367
  %5961 = vmatpush.bf16.msra.mxu0 %v3363
  %5962 = vmatpush.bf16.msra.mxu0 %v3359
  %5963 = vmatpush.bf16.msra.mxu0 %v3355
  %5964 = vmatmul.bf16.gmra.mxu0 %v920
  %v5965 = vpop.f32.mrf.mxu0
  %v5966 = vadd.f32 %v5952, %v5965
  %v5967 = vpop.f32.mrf.mxu0
  %v5968 = vadd.f32 %v5954, %v5967
  %5969 = vdwg.mxu0
  %5970 = vmatpush.bf16.msra.mxu0 %v3415
  %5971 = vmatpush.bf16.msra.mxu0 %v3411
  %5972 = vmatpush.bf16.msra.mxu0 %v3407
  %5973 = vmatpush.bf16.msra.mxu0 %v3403
  %5974 = vmatpush.bf16.msra.mxu0 %v3399
  %5975 = vmatpush.bf16.msra.mxu0 %v3395
  %5976 = vmatpush.bf16.msra.mxu0 %v3391
  %5977 = vmatpush.bf16.msra.mxu0 %v3387
  %5978 = vmatmul.bf16.gmra.mxu0 %v921
  %v5979 = vpop.f32.mrf.mxu0
  %v5980 = vadd.f32 %v5966, %v5979
  %v5981 = vpop.f32.mrf.mxu0
  %v5982 = vadd.f32 %v5968, %v5981
  %5983 = vdwg.mxu0
  %5984 = vmatpush.bf16.msra.mxu0 %v3447
  %5985 = vmatpush.bf16.msra.mxu0 %v3443
  %5986 = vmatpush.bf16.msra.mxu0 %v3439
  %5987 = vmatpush.bf16.msra.mxu0 %v3435
  %5988 = vmatpush.bf16.msra.mxu0 %v3431
  %5989 = vmatpush.bf16.msra.mxu0 %v3427
  %5990 = vmatpush.bf16.msra.mxu0 %v3423
  %5991 = vmatpush.bf16.msra.mxu0 %v3419
  %5992 = vmatmul.bf16.gmra.mxu0 %v922
  %v5993 = vpop.f32.mrf.mxu0
  %v5994 = vadd.f32 %v5980, %v5993
  %v5995 = vpop.f32.mrf.mxu0
  %v5996 = vadd.f32 %v5982, %v5995
  %5997 = vdwg.mxu0
  %5998 = vmatpush.bf16.msra.mxu0 %v3479
  %5999 = vmatpush.bf16.msra.mxu0 %v3475
  %6000 = vmatpush.bf16.msra.mxu0 %v3471
  %6001 = vmatpush.bf16.msra.mxu0 %v3467
  %6002 = vmatpush.bf16.msra.mxu0 %v3463
  %6003 = vmatpush.bf16.msra.mxu0 %v3459
  %6004 = vmatpush.bf16.msra.mxu0 %v3455
  %6005 = vmatpush.bf16.msra.mxu0 %v3451
  %6006 = vmatmul.bf16.gmra.mxu0 %v923
  %v6007 = vpop.f32.mrf.mxu0
  %v6008 = vadd.f32 %v5994, %v6007
  %v6009 = vpop.f32.mrf.mxu0
  %v6010 = vadd.f32 %v5996, %v6009
  %6011 = vdwg.mxu0
  %6012 = vmatpush.bf16.msra.mxu0 %v3511
  %6013 = vmatpush.bf16.msra.mxu0 %v3507
  %6014 = vmatpush.bf16.msra.mxu0 %v3503
  %6015 = vmatpush.bf16.msra.mxu0 %v3499
  %6016 = vmatpush.bf16.msra.mxu0 %v3495
  %6017 = vmatpush.bf16.msra.mxu0 %v3491
  %6018 = vmatpush.bf16.msra.mxu0 %v3487
  %6019 = vmatpush.bf16.msra.mxu0 %v3483
  %6020 = vmatmul.bf16.gmra.mxu0 %v924
  %v6021 = vpop.f32.mrf.mxu0
  %v6022 = vadd.f32 %v6008, %v6021
  %v6023 = vpop.f32.mrf.mxu0
  %v6024 = vadd.f32 %v6010, %v6023
  %6025 = vdwg.mxu0
  %6026 = vmatpush.bf16.msra.mxu0 %v3543
  %6027 = vmatpush.bf16.msra.mxu0 %v3539
  %6028 = vmatpush.bf16.msra.mxu0 %v3535
  %6029 = vmatpush.bf16.msra.mxu0 %v3531
  %6030 = vmatpush.bf16.msra.mxu0 %v3527
  %6031 = vmatpush.bf16.msra.mxu0 %v3523
  %6032 = vmatpush.bf16.msra.mxu0 %v3519
  %6033 = vmatpush.bf16.msra.mxu0 %v3515
  %6034 = vmatmul.bf16.gmra.mxu0 %v925
  %v6035 = vpop.f32.mrf.mxu0
  %v6036 = vadd.f32 %v6022, %v6035
  %v6037 = vpop.f32.mrf.mxu0
  %v6038 = vadd.f32 %v6024, %v6037
  %6039 = vdwg.mxu0
  %6040 = vmatpush.bf16.msra.mxu0 %v3575
  %6041 = vmatpush.bf16.msra.mxu0 %v3571
  %6042 = vmatpush.bf16.msra.mxu0 %v3567
  %6043 = vmatpush.bf16.msra.mxu0 %v3563
  %6044 = vmatpush.bf16.msra.mxu0 %v3559
  %6045 = vmatpush.bf16.msra.mxu0 %v3555
  %6046 = vmatpush.bf16.msra.mxu0 %v3551
  %6047 = vmatpush.bf16.msra.mxu0 %v3547
  %6048 = vmatmul.bf16.gmra.mxu0 %v926
  %v6049 = vpop.f32.mrf.mxu0
  %v6050 = vadd.f32 %v6036, %v6049
  %v6051 = vpop.f32.mrf.mxu0
  %v6052 = vadd.f32 %v6038, %v6051
  %6053 = vdwg.mxu0
  %6054 = vmatpush.bf16.msra.mxu0 %v3607
  %6055 = vmatpush.bf16.msra.mxu0 %v3603
  %6056 = vmatpush.bf16.msra.mxu0 %v3599
  %6057 = vmatpush.bf16.msra.mxu0 %v3595
  %6058 = vmatpush.bf16.msra.mxu0 %v3591
  %6059 = vmatpush.bf16.msra.mxu0 %v3587
  %6060 = vmatpush.bf16.msra.mxu0 %v3583
  %6061 = vmatpush.bf16.msra.mxu0 %v3579
  %6062 = vmatmul.bf16.gmra.mxu0 %v927
  %v6063 = vpop.f32.mrf.mxu0
  %v6064 = vadd.f32 %v6050, %v6063
  %v6065 = vpop.f32.mrf.mxu0
  %v6066 = vadd.f32 %v6052, %v6065
  %6067 = vdwg.mxu0
  %6068 = vmatpush.bf16.msra.mxu0 %v3639
  %6069 = vmatpush.bf16.msra.mxu0 %v3635
  %6070 = vmatpush.bf16.msra.mxu0 %v3631
  %6071 = vmatpush.bf16.msra.mxu0 %v3627
  %6072 = vmatpush.bf16.msra.mxu0 %v3623
  %6073 = vmatpush.bf16.msra.mxu0 %v3619
  %6074 = vmatpush.bf16.msra.mxu0 %v3615
  %6075 = vmatpush.bf16.msra.mxu0 %v3611
  %6076 = vmatmul.bf16.gmra.mxu0 %v928
  %v6077 = vpop.f32.mrf.mxu0
  %v6078 = vadd.f32 %v6064, %v6077
  %v6079 = vpop.f32.mrf.mxu0
  %v6080 = vadd.f32 %v6066, %v6079
  %6081 = vdwg.mxu0
  %6082 = vmatpush.bf16.msra.mxu0 %v3671
  %6083 = vmatpush.bf16.msra.mxu0 %v3667
  %6084 = vmatpush.bf16.msra.mxu0 %v3663
  %6085 = vmatpush.bf16.msra.mxu0 %v3659
  %6086 = vmatpush.bf16.msra.mxu0 %v3655
  %6087 = vmatpush.bf16.msra.mxu0 %v3651
  %6088 = vmatpush.bf16.msra.mxu0 %v3647
  %6089 = vmatpush.bf16.msra.mxu0 %v3643
  %6090 = vmatmul.bf16.gmra.mxu0 %v929
  %v6091 = vpop.f32.mrf.mxu0
  %v6092 = vadd.f32 %v6078, %v6091
  %v6093 = vpop.f32.mrf.mxu0
  %v6094 = vadd.f32 %v6080, %v6093
  %6095 = vdwg.mxu0
  %6096 = vmatpush.bf16.msra.mxu0 %v3703
  %6097 = vmatpush.bf16.msra.mxu0 %v3699
  %6098 = vmatpush.bf16.msra.mxu0 %v3695
  %6099 = vmatpush.bf16.msra.mxu0 %v3691
  %6100 = vmatpush.bf16.msra.mxu0 %v3687
  %6101 = vmatpush.bf16.msra.mxu0 %v3683
  %6102 = vmatpush.bf16.msra.mxu0 %v3679
  %6103 = vmatpush.bf16.msra.mxu0 %v3675
  %6104 = vmatmul.bf16.gmra.mxu0 %v930
  %v6105 = vpop.f32.mrf.mxu0
  %v6106 = vadd.f32 %v6092, %v6105
  %v6107 = vpop.f32.mrf.mxu0
  %v6108 = vadd.f32 %v6094, %v6107
  %6109 = vdwg.mxu0
  %6110 = vmatpush.bf16.msra.mxu0 %v3735
  %6111 = vmatpush.bf16.msra.mxu0 %v3731
  %6112 = vmatpush.bf16.msra.mxu0 %v3727
  %6113 = vmatpush.bf16.msra.mxu0 %v3723
  %6114 = vmatpush.bf16.msra.mxu0 %v3719
  %6115 = vmatpush.bf16.msra.mxu0 %v3715
  %6116 = vmatpush.bf16.msra.mxu0 %v3711
  %6117 = vmatpush.bf16.msra.mxu0 %v3707
  %6118 = vmatmul.bf16.gmra.mxu0 %v931
  %v6119 = vpop.f32.mrf.mxu0
  %v6120 = vadd.f32 %v6106, %v6119
  %v6121 = vpop.f32.mrf.mxu0
  %v6122 = vadd.f32 %v6108, %v6121
  %6123 = vdwg.mxu0
  %6124 = vmatpush.bf16.msra.mxu0 %v3767
  %6125 = vmatpush.bf16.msra.mxu0 %v3763
  %6126 = vmatpush.bf16.msra.mxu0 %v3759
  %6127 = vmatpush.bf16.msra.mxu0 %v3755
  %6128 = vmatpush.bf16.msra.mxu0 %v3751
  %6129 = vmatpush.bf16.msra.mxu0 %v3747
  %6130 = vmatpush.bf16.msra.mxu0 %v3743
  %6131 = vmatpush.bf16.msra.mxu0 %v3739
  %6132 = vmatmul.bf16.gmra.mxu0 %v932
  %v6133 = vpop.f32.mrf.mxu0
  %v6134 = vadd.f32 %v6120, %v6133
  %v6135 = vpop.f32.mrf.mxu0
  %v6136 = vadd.f32 %v6122, %v6135
  %6137 = vdwg.mxu0
  %6138 = vmatpush.bf16.msra.mxu0 %v3799
  %6139 = vmatpush.bf16.msra.mxu0 %v3795
  %6140 = vmatpush.bf16.msra.mxu0 %v3791
  %6141 = vmatpush.bf16.msra.mxu0 %v3787
  %6142 = vmatpush.bf16.msra.mxu0 %v3783
  %6143 = vmatpush.bf16.msra.mxu0 %v3779
  %6144 = vmatpush.bf16.msra.mxu0 %v3775
  %6145 = vmatpush.bf16.msra.mxu0 %v3771
  %6146 = vmatmul.bf16.gmra.mxu0 %v933
  %v6147 = vpop.f32.mrf.mxu0
  %v6148 = vadd.f32 %v6134, %v6147
  %v6149 = vpop.f32.mrf.mxu0
  %v6150 = vadd.f32 %v6136, %v6149
  %6151 = vdwg.mxu0
  %6152 = vmatpush.bf16.msra.mxu0 %v3831
  %6153 = vmatpush.bf16.msra.mxu0 %v3827
  %6154 = vmatpush.bf16.msra.mxu0 %v3823
  %6155 = vmatpush.bf16.msra.mxu0 %v3819
  %6156 = vmatpush.bf16.msra.mxu0 %v3815
  %6157 = vmatpush.bf16.msra.mxu0 %v3811
  %6158 = vmatpush.bf16.msra.mxu0 %v3807
  %6159 = vmatpush.bf16.msra.mxu0 %v3803
  %6160 = vmatmul.bf16.gmra.mxu0 %v934
  %v6161 = vpop.f32.mrf.mxu0
  %v6162 = vadd.f32 %v6148, %v6161
  %v6163 = vpop.f32.mrf.mxu0
  %v6164 = vadd.f32 %v6150, %v6163
  %6165 = vdwg.mxu0
  %6166 = vmatpush.bf16.msra.mxu0 %v3863
  %6167 = vmatpush.bf16.msra.mxu0 %v3859
  %6168 = vmatpush.bf16.msra.mxu0 %v3855
  %6169 = vmatpush.bf16.msra.mxu0 %v3851
  %6170 = vmatpush.bf16.msra.mxu0 %v3847
  %6171 = vmatpush.bf16.msra.mxu0 %v3843
  %6172 = vmatpush.bf16.msra.mxu0 %v3839
  %6173 = vmatpush.bf16.msra.mxu0 %v3835
  %6174 = vmatmul.bf16.gmra.mxu0 %v935
  %v6175 = vpop.f32.mrf.mxu0
  %v6176 = vadd.f32 %v6162, %v6175
  %v6177 = vpop.f32.mrf.mxu0
  %v6178 = vadd.f32 %v6164, %v6177
  %6179 = vdwg.mxu0
  %6180 = vmatpush.bf16.msra.mxu0 %v3895
  %6181 = vmatpush.bf16.msra.mxu0 %v3891
  %6182 = vmatpush.bf16.msra.mxu0 %v3887
  %6183 = vmatpush.bf16.msra.mxu0 %v3883
  %6184 = vmatpush.bf16.msra.mxu0 %v3879
  %6185 = vmatpush.bf16.msra.mxu0 %v3875
  %6186 = vmatpush.bf16.msra.mxu0 %v3871
  %6187 = vmatpush.bf16.msra.mxu0 %v3867
  %6188 = vmatmul.bf16.gmra.mxu0 %v936
  %v6189 = vpop.f32.mrf.mxu0
  %v6190 = vadd.f32 %v6176, %v6189
  %v6191 = vpop.f32.mrf.mxu0
  %v6192 = vadd.f32 %v6178, %v6191
  %6193 = vdwg.mxu0
  %6194 = vmatpush.bf16.msra.mxu0 %v3927
  %6195 = vmatpush.bf16.msra.mxu0 %v3923
  %6196 = vmatpush.bf16.msra.mxu0 %v3919
  %6197 = vmatpush.bf16.msra.mxu0 %v3915
  %6198 = vmatpush.bf16.msra.mxu0 %v3911
  %6199 = vmatpush.bf16.msra.mxu0 %v3907
  %6200 = vmatpush.bf16.msra.mxu0 %v3903
  %6201 = vmatpush.bf16.msra.mxu0 %v3899
  %6202 = vmatmul.bf16.gmra.mxu0 %v937
  %v6203 = vpop.f32.mrf.mxu0
  %v6204 = vadd.f32 %v6190, %v6203
  %v6205 = vpop.f32.mrf.mxu0
  %v6206 = vadd.f32 %v6192, %v6205
  %6207 = vdwg.mxu0
  %6208 = vmatpush.bf16.msra.mxu0 %v3959
  %6209 = vmatpush.bf16.msra.mxu0 %v3955
  %6210 = vmatpush.bf16.msra.mxu0 %v3951
  %6211 = vmatpush.bf16.msra.mxu0 %v3947
  %6212 = vmatpush.bf16.msra.mxu0 %v3943
  %6213 = vmatpush.bf16.msra.mxu0 %v3939
  %6214 = vmatpush.bf16.msra.mxu0 %v3935
  %6215 = vmatpush.bf16.msra.mxu0 %v3931
  %6216 = vmatmul.bf16.gmra.mxu0 %v938
  %v6217 = vpop.f32.mrf.mxu0
  %v6218 = vadd.f32 %v6204, %v6217
  %v6219 = vpop.f32.mrf.mxu0
  %v6220 = vadd.f32 %v6206, %v6219
  %6221 = vdwg.mxu0
  %6222 = vmatpush.bf16.msra.mxu0 %v3991
  %6223 = vmatpush.bf16.msra.mxu0 %v3987
  %6224 = vmatpush.bf16.msra.mxu0 %v3983
  %6225 = vmatpush.bf16.msra.mxu0 %v3979
  %6226 = vmatpush.bf16.msra.mxu0 %v3975
  %6227 = vmatpush.bf16.msra.mxu0 %v3971
  %6228 = vmatpush.bf16.msra.mxu0 %v3967
  %6229 = vmatpush.bf16.msra.mxu0 %v3963
  %6230 = vmatmul.bf16.gmra.mxu0 %v939
  %v6231 = vpop.f32.mrf.mxu0
  %v6232 = vadd.f32 %v6218, %v6231
  %v6233 = vpop.f32.mrf.mxu0
  %v6234 = vadd.f32 %v6220, %v6233
  %6235 = vdwg.mxu0
  %6236 = vmatpush.bf16.msra.mxu0 %v4023
  %6237 = vmatpush.bf16.msra.mxu0 %v4019
  %6238 = vmatpush.bf16.msra.mxu0 %v4015
  %6239 = vmatpush.bf16.msra.mxu0 %v4011
  %6240 = vmatpush.bf16.msra.mxu0 %v4007
  %6241 = vmatpush.bf16.msra.mxu0 %v4003
  %6242 = vmatpush.bf16.msra.mxu0 %v3999
  %6243 = vmatpush.bf16.msra.mxu0 %v3995
  %6244 = vmatmul.bf16.gmra.mxu0 %v940
  %v6245 = vpop.f32.mrf.mxu0
  %v6246 = vadd.f32 %v6232, %v6245
  %v6247 = vpop.f32.mrf.mxu0
  %v6248 = vadd.f32 %v6234, %v6247
  %6249 = vdwg.mxu0
  %6250 = vmatpush.bf16.msra.mxu0 %v4055
  %6251 = vmatpush.bf16.msra.mxu0 %v4051
  %6252 = vmatpush.bf16.msra.mxu0 %v4047
  %6253 = vmatpush.bf16.msra.mxu0 %v4043
  %6254 = vmatpush.bf16.msra.mxu0 %v4039
  %6255 = vmatpush.bf16.msra.mxu0 %v4035
  %6256 = vmatpush.bf16.msra.mxu0 %v4031
  %6257 = vmatpush.bf16.msra.mxu0 %v4027
  %6258 = vmatmul.bf16.gmra.mxu0 %v941
  %v6259 = vpop.f32.mrf.mxu0
  %v6260 = vadd.f32 %v6246, %v6259
  %v6261 = vpop.f32.mrf.mxu0
  %v6262 = vadd.f32 %v6248, %v6261
  %6263 = vdwg.mxu0
  %6264 = vmatpush.bf16.msra.mxu0 %v4087
  %6265 = vmatpush.bf16.msra.mxu0 %v4083
  %6266 = vmatpush.bf16.msra.mxu0 %v4079
  %6267 = vmatpush.bf16.msra.mxu0 %v4075
  %6268 = vmatpush.bf16.msra.mxu0 %v4071
  %6269 = vmatpush.bf16.msra.mxu0 %v4067
  %6270 = vmatpush.bf16.msra.mxu0 %v4063
  %6271 = vmatpush.bf16.msra.mxu0 %v4059
  %6272 = vmatmul.bf16.gmra.mxu0 %v942
  %v6273 = vpop.f32.mrf.mxu0
  %v6274 = vadd.f32 %v6260, %v6273
  %v6275 = vpop.f32.mrf.mxu0
  %v6276 = vadd.f32 %v6262, %v6275
  %6277 = vdwg.mxu0
  %6278 = vmatpush.bf16.msra.mxu0 0
  %6279 = vmatpush.bf16.msra.mxu0 0
  %6280 = vmatpush.bf16.msra.mxu0 0
  %6281 = vmatpush.bf16.msra.mxu0 0
  %6282 = vmatpush.bf16.msra.mxu0 %v4103
  %6283 = vmatpush.bf16.msra.mxu0 %v4099
  %6284 = vmatpush.bf16.msra.mxu0 %v4095
  %6285 = vmatpush.bf16.msra.mxu0 %v4091
  %6286 = vmatmul.bf16.gmra.mxu0 %v4890
  %v6287 = vpop.f32.mrf.mxu0
  %v6288 = vadd.f32 %v6274, %v6287
  %v6289 = vpop.f32.mrf.mxu0
  %v6290 = vadd.f32 %v6276, %v6289
  %6291 = vdwg.mxu0
  %v6292 = vmul.f32 %v5238, 0.1
  %v6293 = vmul.f32 %v5588, 0.1
  %v6294 = vmul.f32 %v5938, 0.1
  %v6295 = vmul.f32 %v6288, 0.1
  %v6296 = vmul.f32 %v5240, 0.1
  %v6297 = vmul.f32 %v5590, 0.1
  %v6298 = vmul.f32 %v5940, 0.1
  %v6299 = vmul.f32 %v6290, 0.1
  %v6300 = vmax.f32 %v5238, %v6292
  %v6301 = vmax.f32 %v5588, %v6293
  %v6302 = vmax.f32 %v5938, %v6294
  %v6303 = vmax.f32 %v6288, %v6295
  %v6304 = vmax.f32 %v5240, %v6296
  %v6305 = vmax.f32 %v5590, %v6297
  %v6306 = vmax.f32 %v5940, %v6298
  %v6307 = vmax.f32 %v6290, %v6299
  %v6308 = vld [vmem:[%s3] sm:$0xf]
  %v6310 = vperm.slane %v6308, 0
  %v6311 = vperm.slane %v6308, 1
  %v6312 = vperm.slane %v6308, 2
  %v6313 = vperm.slane %v6308, 3
  %v6318 = vmul.f32 %v6300, %v6310
  %v6319 = vmul.f32 %v6301, %v6311
  %v6320 = vmul.f32 %v6302, %v6312
  %v6321 = vmul.f32 %v6303, %v6313
  %v6322 = vmul.f32 %v6304, %v6310
  %v6323 = vmul.f32 %v6305, %v6311
  %v6324 = vmul.f32 %v6306, %v6312
  %v6325 = vmul.f32 %v6307, %v6313
  %v6326 = vadd.f32 %v6318, %v6319
  %v6327 = vadd.f32 %v6326, %v6320
  %v6328 = vadd.f32 %v6327, %v6321
  %6329 = vadd.xlane.f32.xlu0 %v6328
  %v6330 = vpop.xlane.xlu0 %6329
  %v6331 = vadd.f32 %v6322, %v6323
  %v6332 = vadd.f32 %v6331, %v6324
  %v6333 = vadd.f32 %v6332, %v6325
  %6334 = vadd.xlane.f32.xlu0 %v6333
  %v6335 = vpop.xlane.xlu0 %6334
  %v6336 = vld [vmem:[#allocation2] sm:$0x1]
  %v6338 = vperm.slane %v6336, 0
  %v6340 = vadd.f32 %v6330, %v6338
  %v6341 = vadd.f32 %v6335, %v6338
  %vm6342 = vcmask 7168
  %6343 = vst.msk [vmem:[%s5] sm:$0xff] %vm6342, %v6340
  %6344 = vst.msk [vmem:[%s5 + $0x8] sm:$0xff] %vm6342, %v6341
  // Predicated region
  $region22: #{discriminator_forward.5} parent=0 // pred_check
    _
  $region23: #{discriminator_forward.5} parent=0 // pred_check_branch
    %6346 = sbr.rel (0) target = $region25
  $region24: #{discriminator_forward.5} parent=0 // pred_region
    _
  $region25: #{discriminator_forward.5} parent=0 // pred_fallthru
    _
  // Predicated region
  $region26: #{discriminator_forward.5} parent=0 // pred_check
    _
  $region27: #{discriminator_forward.5} parent=0 // pred_check_branch
    %6348 = sbr.rel (0) target = $region29
  $region28: #{discriminator_forward.5} parent=0 // pred_region
    _
  $region29: #{discriminator_forward.5} parent=0 // pred_fallthru
    _

</llo_original>
